<compile_context>
chip_gen: v7x
topology: tpu7x:2x2x1
jax: 0.10.0
libtpu: 0.0.40
codegen_flags: <defaults>
</compile_context>

<pallas_src>
import functools
import math

import jax
import jax.numpy as jnp
from jax.experimental import pallas as pl
from jax.experimental.pallas import tpu as pltpu

LN_EPS = 1e-5  # nn.LayerNorm default

# bf16 is the native MXU input rate on v5e/v6e/v7x; accumulation is f32.
COMPUTE_DTYPE = jnp.bfloat16
WEIGHT_DTYPE = jnp.bfloat16


# ----------------------------- in-kernel math ------------------------------

def _mm(a, b):
    return jnp.dot(a.astype(COMPUTE_DTYPE), b.astype(COMPUTE_DTYPE),
                   preferred_element_type=jnp.float32)


def _bmm(eq, a, b):
    return jnp.einsum(eq, a.astype(COMPUTE_DTYPE), b.astype(COMPUTE_DTYPE),
                      preferred_element_type=jnp.float32)


def _layer_norm(x, w, b):
    # x: (M, E), w/b: (1, E); biased variance like nn.LayerNorm
    mu = jnp.mean(x, axis=-1, keepdims=True)
    xc = x - mu
    var = jnp.mean(xc * xc, axis=-1, keepdims=True)
    inv = jax.lax.rsqrt(var + LN_EPS)
    return xc * inv * w + b


def _gelu_exact(x):
    # nn.GELU() default = exact erf-based GELU
    return 0.5 * x * (1.0 + jax.lax.erf(x * (1.0 / math.sqrt(2.0))))


def _mha(xq, xkv, qkv_w, qkv_b, wo, bo, num_heads, B, Sq, Skv):
    # nn.MultiheadAttention semantics (batch_first, eval, no mask).
    #   xq: (B*Sq, E) f32, xkv: (B*Skv, E) f32
    #   qkv_w: (3, E, E) bf16, already transposed (y = x @ W); qkv_b: (3, 1, E) f32
    #   wo: (E, E) bf16 transposed, bo: (1, E) f32
    E = xq.shape[-1]
    hd = E // num_heads
    scale = 1.0 / math.sqrt(hd)

    q = _mm(xq, qkv_w[0]) + qkv_b[0]     # (B*Sq,  E) f32
    k = _mm(xkv, qkv_w[1]) + qkv_b[1]    # (B*Skv, E) f32
    v = _mm(xkv, qkv_w[2]) + qkv_b[2]    # (B*Skv, E) f32

    # Split only the leading (row) dim -> layout-free reshape.
    q3 = q.reshape(B, Sq, E)
    k3 = k.reshape(B, Skv, E)
    v3 = v.reshape(B, Skv, E)

    # Per-head attention with hd-wide contractions (no masked full-E matmuls).
    # Static Python unroll is fine at small head counts; at realistic shapes
    # (hd a multiple of 128) the slices are tile-aligned and one could instead
    # batch heads into a single (B*nh, S, hd) einsum pair.
    outs = []
    for h in range(num_heads):
        sl = slice(h * hd, (h + 1) * hd)
        qh = q3[:, :, sl]                                     # (B, Sq,  hd)
        kh = k3[:, :, sl]                                     # (B, Skv, hd)
        vh = v3[:, :, sl]                                     # (B, Skv, hd)
        s = _bmm('bqd,bkd->bqk', qh, kh) * scale              # (B, Sq, Skv) f32
        s = s - jnp.max(s, axis=-1, keepdims=True)
        p = jnp.exp(s)
        p = p * pl.reciprocal(jnp.sum(p, axis=-1, keepdims=True), approx=True)
        outs.append(_bmm('bqk,bkd->bqd', p, vh))              # (B, Sq, hd)

    attn = jnp.concatenate(outs, axis=-1).reshape(B * Sq, E)  # (B*Sq, E)
    return _mm(attn, wo) + bo


# -------------------------------- kernel ------------------------------------

def fused_decoder_kernel(q_ref, kv_ref,
                         lnw_ref, lnb_ref,
                         sa_w_ref, sa_b_ref, sa_ow_ref, sa_ob_ref,
                         ca_w_ref, ca_b_ref, ca_ow_ref, ca_ob_ref,
                         fc1w_ref, fc1b_ref, fc2w_ref, fc2b_ref,
                         fnw_ref, fnb_ref, pw_ref, pb_ref,
                         o_ref, x_scr,
                         *, num_heads, B, Sq, Skv):
    layer = pl.program_id(0)
    last = pl.num_programs(0) - 1

    @pl.when(layer == 0)
    def _init():
        x_scr[...] = q_ref[...].astype(jnp.float32)

    x = x_scr[...]                                  # resident f32 activation
    kv = kv_ref[...].astype(jnp.float32)
    lnw = lnw_ref[...]                              # (3, 1, E) f32
    lnb = lnb_ref[...]

    # ---- self-attention (pre-LN with ln_1 on q, k, v) + residual ----
    xn = _layer_norm(x, lnw[0], lnb[0])
    x = x + _mha(xn, xn, sa_w_ref[...], sa_b_ref[...],
                 sa_ow_ref[...], sa_ob_ref[...], num_heads, B, Sq, Sq)

    # ---- cross-attention (ln_2 on both query and memory) + residual ----
    xn = _layer_norm(x, lnw[1], lnb[1])
    kvn = _layer_norm(kv, lnw[1], lnb[1])
    x = x + _mha(xn, kvn, ca_w_ref[...], ca_b_ref[...],
                 ca_ow_ref[...], ca_ob_ref[...], num_heads, B, Sq, Skv)

    # ---- MLP: Linear -> GELU -> (Dropout = identity) -> Linear, + residual ----
    xn = _layer_norm(x, lnw[2], lnb[2])
    h = _gelu_exact(_mm(xn, fc1w_ref[...]) + fc1b_ref[...])
    x = x + _mm(h, fc2w_ref[...]) + fc2b_ref[...]

    # Keep the activation resident; the writeback is unnecessary on the last
    # layer (x is consumed directly by the finalize block below).
    @pl.when(layer < last)
    def _carry():
        x_scr[...] = x

    # ---- final LayerNorm + projection, written once at the last layer ----
    @pl.when(layer == last)
    def _finalize():
        xn_f = _layer_norm(x, fnw_ref[...], fnb_ref[...])
        o_ref[...] = (_mm(xn_f, pw_ref[...]) + pb_ref[...]).astype(o_ref.dtype)


# -------------------------------- wrapper ------------------------------------

def _const_spec(a):
    n = a.ndim
    return pl.BlockSpec(a.shape, lambda l: (0,) * n)


def _layer_spec(a):
    # Leading layer axis is indexed by the grid; block is the full per-layer
    # tensor.  (On v6e with small B*Sq one can raise this to
    # pipeline_mode=pl.Buffered(3) to hide one more layer of weight DMA.)
    n = a.ndim
    return pl.BlockSpec((None,) + tuple(a.shape[1:]),
                        lambda l: (l,) + (0,) * (n - 1))


def decoder_forward(query, key_value, packed, num_heads):
    B, Sq, E = query.shape
    _, Skv, _ = key_value.shape
    L = packed["ln_w"].shape[0]
    Eo = packed["proj_w"].shape[1]

    q2 = query.reshape(B * Sq, E)
    kv2 = key_value.reshape(B * Skv, E)

    inputs = [
        q2, kv2,
        packed["ln_w"], packed["ln_b"],
        packed["sa_qkv_w"], packed["sa_qkv_b"], packed["sa_wo"], packed["sa_ob"],
        packed["ca_qkv_w"], packed["ca_qkv_b"], packed["ca_wo"], packed["ca_ob"],
        packed["fc1_w"], packed["fc1_b"], packed["fc2_w"], packed["fc2_b"],
        packed["fnorm_w"], packed["fnorm_b"], packed["proj_w"], packed["proj_b"],
    ]
    in_specs = (
        [_const_spec(q2), _const_spec(kv2)]
        + [_layer_spec(a) for a in inputs[2:16]]
        + [_const_spec(a) for a in inputs[16:]]
    )

    out = pl.pallas_call(
        functools.partial(fused_decoder_kernel, num_heads=num_heads,
                          B=B, Sq=Sq, Skv=Skv),
        grid=(L,),
        in_specs=in_specs,
        out_specs=pl.BlockSpec((B * Sq, Eo), lambda l: (0, 0)),
        out_shape=jax.ShapeDtypeStruct((B * Sq, Eo), query.dtype),
        scratch_shapes=[pltpu.VMEM((B * Sq, E), jnp.float32)],
        compiler_params=pltpu.CompilerParams(
            dimension_semantics=("arbitrary",),
            # Explicit scoped-VMEM budget (the v5e default is only 16 MiB).
            vmem_limit_bytes=64 * 1024 * 1024),
    )(*inputs)
    return out.reshape(B, Sq, Eo)


# ---------------------- params: PyTorch layout + packing --------------------

def init_params(key, num_layers, E, H, E_out):
    assert E == E_out, "residual connections require output size == input size"

    def dense(k, shape, scale=0.05):
        return scale * jax.random.normal(k, shape, jnp.float32)

    layers = []
    for _ in range(num_layers):
        key, *ks = jax.random.split(key, 9)
        layers.append(dict(
            ln1_w=jnp.ones((E,), jnp.float32), ln1_b=jnp.zeros((E,), jnp.float32),
            ln2_w=jnp.ones((E,), jnp.float32), ln2_b=jnp.zeros((E,), jnp.float32),
            ln3_w=jnp.ones((E,), jnp.float32), ln3_b=jnp.zeros((E,), jnp.float32),
            sa_in_w=dense(ks[0], (3 * E, E)), sa_in_b=dense(ks[1], (3 * E,)),
            sa_out_w=dense(ks[2], (E, E)), sa_out_b=jnp.zeros((E,), jnp.float32),
            ca_in_w=dense(ks[3], (3 * E, E)), ca_in_b=dense(ks[4], (3 * E,)),
            ca_out_w=dense(ks[5], (E, E)), ca_out_b=jnp.zeros((E,), jnp.float32),
            fc1_w=dense(ks[6], (H, E)), fc1_b=jnp.zeros((H,), jnp.float32),
            fc2_w=dense(ks[7], (E_out, H)), fc2_b=jnp.zeros((E_out,), jnp.float32),
        ))
    key, k1, k2 = jax.random.split(key, 3)
    final = dict(norm_w=jnp.ones((E,), jnp.float32),
                 norm_b=jnp.zeros((E,), jnp.float32),
                 proj_w=dense(k1, (E_out, E_out)),
                 proj_b=dense(k2, (E_out,)))
    return layers, final


def pack_params(layers, final, E):
    """Host-side: stack per-layer weights over a leading layer axis,
    pre-transpose all matrices, pre-split the packed in_proj q/k/v, and store
    the matmul weights in bf16 (biases / LayerNorm params stay f32)."""
    def stack(fn, dtype=jnp.float32):
        return jnp.stack([fn(p) for p in layers], axis=0).astype(dtype)

    def qkv_w(w):   # (3E, E) -> (3, E, E), each piece transposed
        return jnp.stack([w[0:E].T, w[E:2 * E].T, w[2 * E:3 * E].T], axis=0)

    packed = dict(
        ln_w=stack(lambda p: jnp.stack(
            [p["ln1_w"], p["ln2_w"], p["ln3_w"]])[:, None, :]),            # (L,3,1,E)
        ln_b=stack(lambda p: jnp.stack(
            [p["ln1_b"], p["ln2_b"], p["ln3_b"]])[:, None, :]),
        sa_qkv_w=stack(lambda p: qkv_w(p["sa_in_w"]), WEIGHT_DTYPE),       # (L,3,E,E)
        sa_qkv_b=stack(lambda p: p["sa_in_b"].reshape(3, 1, E)),           # (L,3,1,E)
        sa_wo=stack(lambda p: p["sa_out_w"].T, WEIGHT_DTYPE),              # (L,E,E)
        sa_ob=stack(lambda p: p["sa_out_b"][None, :]),                     # (L,1,E)
        ca_qkv_w=stack(lambda p: qkv_w(p["ca_in_w"]), WEIGHT_DTYPE),
        ca_qkv_b=stack(lambda p: p["ca_in_b"].reshape(3, 1, E)),
        ca_wo=stack(lambda p: p["ca_out_w"].T, WEIGHT_DTYPE),
        ca_ob=stack(lambda p: p["ca_out_b"][None, :]),
        fc1_w=stack(lambda p: p["fc1_w"].T, WEIGHT_DTYPE),                 # (L,E,H)
        fc1_b=stack(lambda p: p["fc1_b"][None, :]),                        # (L,1,H)
        fc2_w=stack(lambda p: p["fc2_w"].T, WEIGHT_DTYPE),                 # (L,H,Eo)
        fc2_b=stack(lambda p: p["fc2_b"][None, :]),                        # (L,1,Eo)
        fnorm_w=final["norm_w"][None, :],                                  # (1,E)
        fnorm_b=final["norm_b"][None, :],
        proj_w=final["proj_w"].T.astype(WEIGHT_DTYPE),                     # (Eo,Eo)
        proj_b=final["proj_b"][None, :],                                   # (1,Eo)
    )
    return packed


# --------------------------- pure-JAX reference ------------------------------

def _ref_ln(x, w, b):
    mu = jnp.mean(x, -1, keepdims=True)
    var = jnp.mean((x - mu) ** 2, -1, keepdims=True)
    return (x - mu) / jnp.sqrt(var + LN_EPS) * w + b


def _ref_mha(q_in, kv_in, in_w, in_b, out_w, out_b, nh):
    B, Sq, E = q_in.shape
    Skv = kv_in.shape[1]
    hd = E // nh
    wq, wk, wv = in_w[:E], in_w[E:2 * E], in_w[2 * E:]
    bq, bk, bv = in_b[:E], in_b[E:2 * E], in_b[2 * E:]
    q = (q_in @ wq.T + bq).reshape(B, Sq, nh, hd).transpose(0, 2, 1, 3)
    k = (kv_in @ wk.T + bk).reshape(B, Skv, nh, hd).transpose(0, 2, 1, 3)
    v = (kv_in @ wv.T + bv).reshape(B, Skv, nh, hd).transpose(0, 2, 1, 3)
    s = jnp.einsum('bhqd,bhkd->bhqk', q, k) / math.sqrt(hd)
    p = jax.nn.softmax(s, axis=-1)
    o = jnp.einsum('bhqk,bhkd->bhqd', p, v).transpose(0, 2, 1, 3).reshape(B, Sq, E)
    return o @ out_w.T + out_b


def reference_decoder(query, key_value, layers, final, nh):
    x = query
    for p in layers:
        qn = _ref_ln(x, p["ln1_w"], p["ln1_b"])
        x = x + _ref_mha(qn, qn, p["sa_in_w"], p["sa_in_b"],
                         p["sa_out_w"], p["sa_out_b"], nh)
        xn = _ref_ln(x, p["ln2_w"], p["ln2_b"])
        kvn = _ref_ln(key_value, p["ln2_w"], p["ln2_b"])
        x = x + _ref_mha(xn, kvn, p["ca_in_w"], p["ca_in_b"],
                         p["ca_out_w"], p["ca_out_b"], nh)
        xn = _ref_ln(x, p["ln3_w"], p["ln3_b"])
        h = _gelu_exact(xn @ p["fc1_w"].T + p["fc1_b"])
        x = x + (h @ p["fc2_w"].T + p["fc2_b"])
    xn = _ref_ln(x, final["norm_w"], final["norm_b"])
    return xn @ final["proj_w"].T + final["proj_b"]


# ----------------------------------- main ------------------------------------

if __name__ == "__main__":
    num_layers = 2
    E = 32            # input_embedding_size
    H = 64            # hidden_embedding_size
    E_out = 32        # output_embedding_size (== E so residual adds are valid)
    heads = 4
    B, S_q, S_kv = 2, 8, 8

    key = jax.random.PRNGKey(0)
    k_q, k_kv, k_p = jax.random.split(key, 3)
    query = jax.random.normal(k_q, (B, S_q, E), jnp.float32)
    key_value = jax.random.normal(k_kv, (B, S_kv, E), jnp.float32)

    layers, final = init_params(k_p, num_layers, E, H, E_out)
    packed = pack_params(layers, final, E)

    logits = decoder_forward(query, key_value, packed, heads)
    jax.block_until_ready(logits)
    assert logits.shape == (B, S_q, E_out)

    ref = reference_decoder(query, key_value, layers, final, heads)
    max_err = float(jnp.max(jnp.abs(logits - ref)))
    assert max_err < 5e-2, f"kernel deviates from reference: max abs err {max_err}"

    print("KERNEL_OK")
</pallas_src>

<mosaic_0001>
module attributes {stable_mosaic.version = 11 : i64} {
  func.func @fused_decoder_kernel(%arg0: i32, %arg1: memref<16x32xf32, #tpu.memory_space<vmem>>, %arg2: memref<16x32xf32, #tpu.memory_space<vmem>>, %arg3: memref<1x3x1x32xf32, #tpu.memory_space<vmem>>, %arg4: memref<1x3x1x32xf32, #tpu.memory_space<vmem>>, %arg5: memref<1x3x32x32xbf16, #tpu.memory_space<vmem>>, %arg6: memref<1x3x1x32xf32, #tpu.memory_space<vmem>>, %arg7: memref<1x32x32xbf16, #tpu.memory_space<vmem>>, %arg8: memref<1x1x32xf32, #tpu.memory_space<vmem>>, %arg9: memref<1x3x32x32xbf16, #tpu.memory_space<vmem>>, %arg10: memref<1x3x1x32xf32, #tpu.memory_space<vmem>>, %arg11: memref<1x32x32xbf16, #tpu.memory_space<vmem>>, %arg12: memref<1x1x32xf32, #tpu.memory_space<vmem>>, %arg13: memref<1x32x64xbf16, #tpu.memory_space<vmem>>, %arg14: memref<1x1x64xf32, #tpu.memory_space<vmem>>, %arg15: memref<1x64x32xbf16, #tpu.memory_space<vmem>>, %arg16: memref<1x1x32xf32, #tpu.memory_space<vmem>>, %arg17: memref<1x32xf32, #tpu.memory_space<vmem>>, %arg18: memref<1x32xf32, #tpu.memory_space<vmem>>, %arg19: memref<32x32xbf16, #tpu.memory_space<vmem>>, %arg20: memref<1x32xf32, #tpu.memory_space<vmem>>, %arg21: memref<16x32xf32, #tpu.memory_space<vmem>>, %arg22: memref<16x32xf32, #tpu.memory_space<vmem>>) attributes {dimension_semantics = [#tpu.dimension_semantics<arbitrary>], iteration_bounds = array<i64: 2>, scalar_prefetch = 0 : i64, scratch_operands = 1 : i64, tpu.core_type = #tpu.core_type<tc>, window_params = [{pipeline_mode = #tpu.pipeline_mode<synchronous>, transform_indices = @transform_0, window_bounds = array<i64: 16, 32>}, {pipeline_mode = #tpu.pipeline_mode<synchronous>, transform_indices = @transform_1, window_bounds = array<i64: 16, 32>}, {transform_indices = @transform_2, window_bounds = array<i64: 1, 3, 1, 32>}, {transform_indices = @transform_3, window_bounds = array<i64: 1, 3, 1, 32>}, {transform_indices = @transform_4, window_bounds = array<i64: 1, 3, 32, 32>}, {transform_indices = @transform_5, window_bounds = array<i64: 1, 3, 1, 32>}, {transform_indices = @transform_6, window_bounds = array<i64: 1, 32, 32>}, {transform_indices = @transform_7, window_bounds = array<i64: 1, 1, 32>}, {transform_indices = @transform_8, window_bounds = array<i64: 1, 3, 32, 32>}, {transform_indices = @transform_9, window_bounds = array<i64: 1, 3, 1, 32>}, {transform_indices = @transform_10, window_bounds = array<i64: 1, 32, 32>}, {transform_indices = @transform_11, window_bounds = array<i64: 1, 1, 32>}, {transform_indices = @transform_12, window_bounds = array<i64: 1, 32, 64>}, {transform_indices = @transform_13, window_bounds = array<i64: 1, 1, 64>}, {transform_indices = @transform_14, window_bounds = array<i64: 1, 64, 32>}, {transform_indices = @transform_15, window_bounds = array<i64: 1, 1, 32>}, {pipeline_mode = #tpu.pipeline_mode<synchronous>, transform_indices = @transform_16, window_bounds = array<i64: 1, 32>}, {pipeline_mode = #tpu.pipeline_mode<synchronous>, transform_indices = @transform_17, window_bounds = array<i64: 1, 32>}, {pipeline_mode = #tpu.pipeline_mode<synchronous>, transform_indices = @transform_18, window_bounds = array<i64: 32, 32>}, {pipeline_mode = #tpu.pipeline_mode<synchronous>, transform_indices = @transform_19, window_bounds = array<i64: 1, 32>}, {pipeline_mode = #tpu.pipeline_mode<synchronous>, transform_indices = @transform_20, window_bounds = array<i64: 16, 32>}]} {
    %c0_i32 = arith.constant 0 : i32
    %0 = arith.cmpi eq, %arg0, %c0_i32 : i32
    %1 = arith.extui %0 : i1 to i32
    %c0_i32_0 = arith.constant 0 : i32
    %2 = arith.cmpi ne, %1, %c0_i32_0 : i32
    scf.if %2 {
      %c0_127 = arith.constant 0 : index
      %c0_128 = arith.constant 0 : index
      %388 = vector.load %arg1[%c0_127, %c0_128] : memref<16x32xf32, #tpu.memory_space<vmem>>, vector<16x32xf32>
      %c0_129 = arith.constant 0 : index
      %c0_130 = arith.constant 0 : index
      %389 = vector.load %arg22[%c0_129, %c0_130] : memref<16x32xf32, #tpu.memory_space<vmem>>, vector<16x32xf32>
      tpu.vector_store %arg22[%c0_129, %c0_130], %388 {strides = array<i32>} : memref<16x32xf32, #tpu.memory_space<vmem>>, vector<16x32xf32>,
    } else {
    }
    %c0 = arith.constant 0 : index
    %c0_1 = arith.constant 0 : index
    %3 = vector.load %arg22[%c0, %c0_1] : memref<16x32xf32, #tpu.memory_space<vmem>>, vector<16x32xf32>
    %c0_2 = arith.constant 0 : index
    %c0_3 = arith.constant 0 : index
    %4 = vector.load %arg2[%c0_2, %c0_3] : memref<16x32xf32, #tpu.memory_space<vmem>>, vector<16x32xf32>
    %c0_4 = arith.constant 0 : index
    %c0_5 = arith.constant 0 : index
    %c0_6 = arith.constant 0 : index
    %c0_7 = arith.constant 0 : index
    %5 = vector.load %arg3[%c0_4, %c0_5, %c0_6, %c0_7] : memref<1x3x1x32xf32, #tpu.memory_space<vmem>>, vector<1x3x1x32xf32>
    %6 = vector.shape_cast %5 : vector<1x3x1x32xf32> to vector<3x1x32xf32>
    %c0_8 = arith.constant 0 : index
    %c0_9 = arith.constant 0 : index
    %c0_10 = arith.constant 0 : index
    %c0_11 = arith.constant 0 : index
    %7 = vector.load %arg4[%c0_8, %c0_9, %c0_10, %c0_11] : memref<1x3x1x32xf32, #tpu.memory_space<vmem>>, vector<1x3x1x32xf32>
    %8 = vector.shape_cast %7 : vector<1x3x1x32xf32> to vector<3x1x32xf32>
    %9 = vector.extract_strided_slice %6 {offsets = [0, 0, 0], sizes = [1, 1, 32], strides = [1, 1, 1]} : vector<3x1x32xf32> to vector<1x1x32xf32>
    %10 = vector.shape_cast %9 : vector<1x1x32xf32> to vector<1x32xf32>
    %11 = vector.extract_strided_slice %8 {offsets = [0, 0, 0], sizes = [1, 1, 32], strides = [1, 1, 1]} : vector<3x1x32xf32> to vector<1x1x32xf32>
    %12 = vector.shape_cast %11 : vector<1x1x32xf32> to vector<1x32xf32>
    %cst = arith.constant dense<0.000000e+00> : vector<16xf32>
    %13 = vector.multi_reduction <add>, %3, %cst [1] : vector<16x32xf32> to vector<16xf32>
    %14 = vector.shape_cast %13 : vector<16xf32> to vector<16x1xf32>
    %cst_12 = arith.constant 3.200000e+01 : f32
    %15 = vector.broadcast %cst_12 : f32 to vector<16x1xf32>
    %16 = arith.divf %14, %15 : vector<16x1xf32>
    %17 = vector.broadcast %16 : vector<16x1xf32> to vector<16x32xf32>
    %18 = arith.subf %3, %17 : vector<16x32xf32>
    %19 = arith.mulf %18, %18 : vector<16x32xf32>
    %cst_13 = arith.constant dense<0.000000e+00> : vector<16xf32>
    %20 = vector.multi_reduction <add>, %19, %cst_13 [1] : vector<16x32xf32> to vector<16xf32>
    %21 = vector.shape_cast %20 : vector<16xf32> to vector<16x1xf32>
    %cst_14 = arith.constant 3.200000e+01 : f32
    %22 = vector.broadcast %cst_14 : f32 to vector<16x1xf32>
    %23 = arith.divf %21, %22 : vector<16x1xf32>
    %cst_15 = arith.constant 9.99999974E-6 : f32
    %24 = vector.broadcast %cst_15 : f32 to vector<16x1xf32>
    %25 = arith.addf %23, %24 : vector<16x1xf32>
    %26 = math.rsqrt %25 : vector<16x1xf32>
    %27 = vector.broadcast %26 : vector<16x1xf32> to vector<16x32xf32>
    %28 = arith.mulf %18, %27 : vector<16x32xf32>
    %29 = vector.broadcast %10 : vector<1x32xf32> to vector<16x32xf32>
    %30 = arith.mulf %28, %29 : vector<16x32xf32>
    %31 = vector.broadcast %12 : vector<1x32xf32> to vector<16x32xf32>
    %32 = arith.addf %30, %31 : vector<16x32xf32>
    %c0_16 = arith.constant 0 : index
    %c0_17 = arith.constant 0 : index
    %c0_18 = arith.constant 0 : index
    %c0_19 = arith.constant 0 : index
    %33 = vector.load %arg5[%c0_16, %c0_17, %c0_18, %c0_19] : memref<1x3x32x32xbf16, #tpu.memory_space<vmem>>, vector<1x3x32x32xbf16>
    %34 = vector.shape_cast %33 : vector<1x3x32x32xbf16> to vector<3x32x32xbf16>
    %c0_20 = arith.constant 0 : index
    %c0_21 = arith.constant 0 : index
    %c0_22 = arith.constant 0 : index
    %c0_23 = arith.constant 0 : index
    %35 = vector.load %arg6[%c0_20, %c0_21, %c0_22, %c0_23] : memref<1x3x1x32xf32, #tpu.memory_space<vmem>>, vector<1x3x1x32xf32>
    %36 = vector.shape_cast %35 : vector<1x3x1x32xf32> to vector<3x1x32xf32>
    %c0_24 = arith.constant 0 : index
    %c0_25 = arith.constant 0 : index
    %c0_26 = arith.constant 0 : index
    %37 = vector.load %arg7[%c0_24, %c0_25, %c0_26] : memref<1x32x32xbf16, #tpu.memory_space<vmem>>, vector<1x32x32xbf16>
    %38 = vector.shape_cast %37 : vector<1x32x32xbf16> to vector<32x32xbf16>
    %c0_27 = arith.constant 0 : index
    %c0_28 = arith.constant 0 : index
    %c0_29 = arith.constant 0 : index
    %39 = vector.load %arg8[%c0_27, %c0_28, %c0_29] : memref<1x1x32xf32, #tpu.memory_space<vmem>>, vector<1x1x32xf32>
    %40 = vector.shape_cast %39 : vector<1x1x32xf32> to vector<1x32xf32>
    %41 = vector.extract_strided_slice %34 {offsets = [0, 0, 0], sizes = [1, 32, 32], strides = [1, 1, 1]} : vector<3x32x32xbf16> to vector<1x32x32xbf16>
    %42 = vector.shape_cast %41 : vector<1x32x32xbf16> to vector<32x32xbf16>
    %43 = arith.truncf %32 : vector<16x32xf32> to vector<16x32xbf16>
    %cst_30 = arith.constant dense<0.000000e+00> : vector<16x32xf32>
    %44 = tpu.matmul %43, %42, %cst_30 {dimension_numbers = #tpu.dot_dimension_numbers<[1], [0], [0], [1], [0, 0, 1, 1], [], []>} : vector<16x32xbf16>, vector<32x32xbf16>, vector<16x32xf32> -> vector<16x32xf32>
    %45 = vector.extract_strided_slice %36 {offsets = [0, 0, 0], sizes = [1, 1, 32], strides = [1, 1, 1]} : vector<3x1x32xf32> to vector<1x1x32xf32>
    %46 = vector.shape_cast %45 : vector<1x1x32xf32> to vector<1x32xf32>
    %47 = vector.broadcast %46 : vector<1x32xf32> to vector<16x32xf32>
    %48 = arith.addf %44, %47 : vector<16x32xf32>
    %49 = vector.extract_strided_slice %34 {offsets = [1, 0, 0], sizes = [1, 32, 32], strides = [1, 1, 1]} : vector<3x32x32xbf16> to vector<1x32x32xbf16>
    %50 = vector.shape_cast %49 : vector<1x32x32xbf16> to vector<32x32xbf16>
    %51 = arith.truncf %32 : vector<16x32xf32> to vector<16x32xbf16>
    %cst_31 = arith.constant dense<0.000000e+00> : vector<16x32xf32>
    %52 = tpu.matmul %51, %50, %cst_31 {dimension_numbers = #tpu.dot_dimension_numbers<[1], [0], [0], [1], [0, 0, 1, 1], [], []>} : vector<16x32xbf16>, vector<32x32xbf16>, vector<16x32xf32> -> vector<16x32xf32>
    %53 = vector.extract_strided_slice %36 {offsets = [1, 0, 0], sizes = [1, 1, 32], strides = [1, 1, 1]} : vector<3x1x32xf32> to vector<1x1x32xf32>
    %54 = vector.shape_cast %53 : vector<1x1x32xf32> to vector<1x32xf32>
    %55 = vector.broadcast %54 : vector<1x32xf32> to vector<16x32xf32>
    %56 = arith.addf %52, %55 : vector<16x32xf32>
    %57 = vector.extract_strided_slice %34 {offsets = [2, 0, 0], sizes = [1, 32, 32], strides = [1, 1, 1]} : vector<3x32x32xbf16> to vector<1x32x32xbf16>
    %58 = vector.shape_cast %57 : vector<1x32x32xbf16> to vector<32x32xbf16>
    %59 = arith.truncf %32 : vector<16x32xf32> to vector<16x32xbf16>
    %cst_32 = arith.constant dense<0.000000e+00> : vector<16x32xf32>
    %60 = tpu.matmul %59, %58, %cst_32 {dimension_numbers = #tpu.dot_dimension_numbers<[1], [0], [0], [1], [0, 0, 1, 1], [], []>} : vector<16x32xbf16>, vector<32x32xbf16>, vector<16x32xf32> -> vector<16x32xf32>
    %61 = vector.extract_strided_slice %36 {offsets = [2, 0, 0], sizes = [1, 1, 32], strides = [1, 1, 1]} : vector<3x1x32xf32> to vector<1x1x32xf32>
    %62 = vector.shape_cast %61 : vector<1x1x32xf32> to vector<1x32xf32>
    %63 = vector.broadcast %62 : vector<1x32xf32> to vector<16x32xf32>
    %64 = arith.addf %60, %63 : vector<16x32xf32>
    %65 = vector.shape_cast %48 : vector<16x32xf32> to vector<2x8x32xf32>
    %66 = vector.shape_cast %56 : vector<16x32xf32> to vector<2x8x32xf32>
    %67 = vector.shape_cast %64 : vector<16x32xf32> to vector<2x8x32xf32>
    %68 = vector.extract_strided_slice %65 {offsets = [0, 0, 0], sizes = [2, 8, 8], strides = [1, 1, 1]} : vector<2x8x32xf32> to vector<2x8x8xf32>
    %69 = vector.extract_strided_slice %66 {offsets = [0, 0, 0], sizes = [2, 8, 8], strides = [1, 1, 1]} : vector<2x8x32xf32> to vector<2x8x8xf32>
    %70 = vector.extract_strided_slice %67 {offsets = [0, 0, 0], sizes = [2, 8, 8], strides = [1, 1, 1]} : vector<2x8x32xf32> to vector<2x8x8xf32>
    %71 = arith.truncf %68 : vector<2x8x8xf32> to vector<2x8x8xbf16>
    %72 = arith.truncf %69 : vector<2x8x8xf32> to vector<2x8x8xbf16>
    "tpu.trace_start"() <{level = 10 : i32, message = "bqd,bkd->bqk"}> : () -> ()
    %cst_33 = arith.constant dense<0.000000e+00> : vector<2x8x8xf32>
    %73 = tpu.matmul %71, %72, %cst_33 {dimension_numbers = #tpu.dot_dimension_numbers<[2], [2], [1], [1], [0, 0, 0, 1, 1, 1], [0], [0]>} : vector<2x8x8xbf16>, vector<2x8x8xbf16>, vector<2x8x8xf32> -> vector<2x8x8xf32>
    "tpu.trace_stop"() : () -> ()
    %cst_34 = arith.constant 0.353553385 : f32
    %74 = vector.broadcast %cst_34 : f32 to vector<2x8x8xf32>
    %75 = arith.mulf %73, %74 : vector<2x8x8xf32>
    %cst_35 = arith.constant dense<0xFF800000> : vector<2x8xf32>
    %76 = vector.multi_reduction <maximumf>, %75, %cst_35 [2] : vector<2x8x8xf32> to vector<2x8xf32>
    %77 = vector.shape_cast %76 : vector<2x8xf32> to vector<2x8x1xf32>
    %78 = vector.broadcast %77 : vector<2x8x1xf32> to vector<2x8x8xf32>
    %79 = arith.subf %75, %78 : vector<2x8x8xf32>
    %80 = math.exp %79 : vector<2x8x8xf32>
    %cst_36 = arith.constant dense<0.000000e+00> : vector<2x8xf32>
    %81 = vector.multi_reduction <add>, %80, %cst_36 [2] : vector<2x8x8xf32> to vector<2x8xf32>
    %82 = vector.shape_cast %81 : vector<2x8xf32> to vector<2x8x1xf32>
    %83 = tpu.reciprocal %82 {approx = true} : vector<2x8x1xf32> -> vector<2x8x1xf32>
    %84 = vector.broadcast %83 : vector<2x8x1xf32> to vector<2x8x8xf32>
    %85 = arith.mulf %80, %84 : vector<2x8x8xf32>
    %86 = arith.truncf %85 : vector<2x8x8xf32> to vector<2x8x8xbf16>
    %87 = arith.truncf %70 : vector<2x8x8xf32> to vector<2x8x8xbf16>
    "tpu.trace_start"() <{level = 10 : i32, message = "bqk,bkd->bqd"}> : () -> ()
    %cst_37 = arith.constant dense<0.000000e+00> : vector<2x8x8xf32>
    %88 = tpu.matmul %86, %87, %cst_37 {dimension_numbers = #tpu.dot_dimension_numbers<[2], [1], [1], [2], [0, 0, 0, 1, 1, 2], [0], [0]>} : vector<2x8x8xbf16>, vector<2x8x8xbf16>, vector<2x8x8xf32> -> vector<2x8x8xf32>
    "tpu.trace_stop"() : () -> ()
    %89 = vector.extract_strided_slice %65 {offsets = [0, 0, 8], sizes = [2, 8, 8], strides = [1, 1, 1]} : vector<2x8x32xf32> to vector<2x8x8xf32>
    %90 = vector.extract_strided_slice %66 {offsets = [0, 0, 8], sizes = [2, 8, 8], strides = [1, 1, 1]} : vector<2x8x32xf32> to vector<2x8x8xf32>
    %91 = vector.extract_strided_slice %67 {offsets = [0, 0, 8], sizes = [2, 8, 8], strides = [1, 1, 1]} : vector<2x8x32xf32> to vector<2x8x8xf32>
    %92 = arith.truncf %89 : vector<2x8x8xf32> to vector<2x8x8xbf16>
    %93 = arith.truncf %90 : vector<2x8x8xf32> to vector<2x8x8xbf16>
    "tpu.trace_start"() <{level = 10 : i32, message = "bqd,bkd->bqk"}> : () -> ()
    %cst_38 = arith.constant dense<0.000000e+00> : vector<2x8x8xf32>
    %94 = tpu.matmul %92, %93, %cst_38 {dimension_numbers = #tpu.dot_dimension_numbers<[2], [2], [1], [1], [0, 0, 0, 1, 1, 1], [0], [0]>} : vector<2x8x8xbf16>, vector<2x8x8xbf16>, vector<2x8x8xf32> -> vector<2x8x8xf32>
    "tpu.trace_stop"() : () -> ()
    %cst_39 = arith.constant 0.353553385 : f32
    %95 = vector.broadcast %cst_39 : f32 to vector<2x8x8xf32>
    %96 = arith.mulf %94, %95 : vector<2x8x8xf32>
    %cst_40 = arith.constant dense<0xFF800000> : vector<2x8xf32>
    %97 = vector.multi_reduction <maximumf>, %96, %cst_40 [2] : vector<2x8x8xf32> to vector<2x8xf32>
    %98 = vector.shape_cast %97 : vector<2x8xf32> to vector<2x8x1xf32>
    %99 = vector.broadcast %98 : vector<2x8x1xf32> to vector<2x8x8xf32>
    %100 = arith.subf %96, %99 : vector<2x8x8xf32>
    %101 = math.exp %100 : vector<2x8x8xf32>
    %cst_41 = arith.constant dense<0.000000e+00> : vector<2x8xf32>
    %102 = vector.multi_reduction <add>, %101, %cst_41 [2] : vector<2x8x8xf32> to vector<2x8xf32>
    %103 = vector.shape_cast %102 : vector<2x8xf32> to vector<2x8x1xf32>
    %104 = tpu.reciprocal %103 {approx = true} : vector<2x8x1xf32> -> vector<2x8x1xf32>
    %105 = vector.broadcast %104 : vector<2x8x1xf32> to vector<2x8x8xf32>
    %106 = arith.mulf %101, %105 : vector<2x8x8xf32>
    %107 = arith.truncf %106 : vector<2x8x8xf32> to vector<2x8x8xbf16>
    %108 = arith.truncf %91 : vector<2x8x8xf32> to vector<2x8x8xbf16>
    "tpu.trace_start"() <{level = 10 : i32, message = "bqk,bkd->bqd"}> : () -> ()
    %cst_42 = arith.constant dense<0.000000e+00> : vector<2x8x8xf32>
    %109 = tpu.matmul %107, %108, %cst_42 {dimension_numbers = #tpu.dot_dimension_numbers<[2], [1], [1], [2], [0, 0, 0, 1, 1, 2], [0], [0]>} : vector<2x8x8xbf16>, vector<2x8x8xbf16>, vector<2x8x8xf32> -> vector<2x8x8xf32>
    "tpu.trace_stop"() : () -> ()
    %110 = vector.extract_strided_slice %65 {offsets = [0, 0, 16], sizes = [2, 8, 8], strides = [1, 1, 1]} : vector<2x8x32xf32> to vector<2x8x8xf32>
    %111 = vector.extract_strided_slice %66 {offsets = [0, 0, 16], sizes = [2, 8, 8], strides = [1, 1, 1]} : vector<2x8x32xf32> to vector<2x8x8xf32>
    %112 = vector.extract_strided_slice %67 {offsets = [0, 0, 16], sizes = [2, 8, 8], strides = [1, 1, 1]} : vector<2x8x32xf32> to vector<2x8x8xf32>
    %113 = arith.truncf %110 : vector<2x8x8xf32> to vector<2x8x8xbf16>
    %114 = arith.truncf %111 : vector<2x8x8xf32> to vector<2x8x8xbf16>
    "tpu.trace_start"() <{level = 10 : i32, message = "bqd,bkd->bqk"}> : () -> ()
    %cst_43 = arith.constant dense<0.000000e+00> : vector<2x8x8xf32>
    %115 = tpu.matmul %113, %114, %cst_43 {dimension_numbers = #tpu.dot_dimension_numbers<[2], [2], [1], [1], [0, 0, 0, 1, 1, 1], [0], [0]>} : vector<2x8x8xbf16>, vector<2x8x8xbf16>, vector<2x8x8xf32> -> vector<2x8x8xf32>
    "tpu.trace_stop"() : () -> ()
    %cst_44 = arith.constant 0.353553385 : f32
    %116 = vector.broadcast %cst_44 : f32 to vector<2x8x8xf32>
    %117 = arith.mulf %115, %116 : vector<2x8x8xf32>
    %cst_45 = arith.constant dense<0xFF800000> : vector<2x8xf32>
    %118 = vector.multi_reduction <maximumf>, %117, %cst_45 [2] : vector<2x8x8xf32> to vector<2x8xf32>
    %119 = vector.shape_cast %118 : vector<2x8xf32> to vector<2x8x1xf32>
    %120 = vector.broadcast %119 : vector<2x8x1xf32> to vector<2x8x8xf32>
    %121 = arith.subf %117, %120 : vector<2x8x8xf32>
    %122 = math.exp %121 : vector<2x8x8xf32>
    %cst_46 = arith.constant dense<0.000000e+00> : vector<2x8xf32>
    %123 = vector.multi_reduction <add>, %122, %cst_46 [2] : vector<2x8x8xf32> to vector<2x8xf32>
    %124 = vector.shape_cast %123 : vector<2x8xf32> to vector<2x8x1xf32>
    %125 = tpu.reciprocal %124 {approx = true} : vector<2x8x1xf32> -> vector<2x8x1xf32>
    %126 = vector.broadcast %125 : vector<2x8x1xf32> to vector<2x8x8xf32>
    %127 = arith.mulf %122, %126 : vector<2x8x8xf32>
    %128 = arith.truncf %127 : vector<2x8x8xf32> to vector<2x8x8xbf16>
    %129 = arith.truncf %112 : vector<2x8x8xf32> to vector<2x8x8xbf16>
    "tpu.trace_start"() <{level = 10 : i32, message = "bqk,bkd->bqd"}> : () -> ()
    %cst_47 = arith.constant dense<0.000000e+00> : vector<2x8x8xf32>
    %130 = tpu.matmul %128, %129, %cst_47 {dimension_numbers = #tpu.dot_dimension_numbers<[2], [1], [1], [2], [0, 0, 0, 1, 1, 2], [0], [0]>} : vector<2x8x8xbf16>, vector<2x8x8xbf16>, vector<2x8x8xf32> -> vector<2x8x8xf32>
    "tpu.trace_stop"() : () -> ()
    %131 = vector.extract_strided_slice %65 {offsets = [0, 0, 24], sizes = [2, 8, 8], strides = [1, 1, 1]} : vector<2x8x32xf32> to vector<2x8x8xf32>
    %132 = vector.extract_strided_slice %66 {offsets = [0, 0, 24], sizes = [2, 8, 8], strides = [1, 1, 1]} : vector<2x8x32xf32> to vector<2x8x8xf32>
    %133 = vector.extract_strided_slice %67 {offsets = [0, 0, 24], sizes = [2, 8, 8], strides = [1, 1, 1]} : vector<2x8x32xf32> to vector<2x8x8xf32>
    %134 = arith.truncf %131 : vector<2x8x8xf32> to vector<2x8x8xbf16>
    %135 = arith.truncf %132 : vector<2x8x8xf32> to vector<2x8x8xbf16>
    "tpu.trace_start"() <{level = 10 : i32, message = "bqd,bkd->bqk"}> : () -> ()
    %cst_48 = arith.constant dense<0.000000e+00> : vector<2x8x8xf32>
    %136 = tpu.matmul %134, %135, %cst_48 {dimension_numbers = #tpu.dot_dimension_numbers<[2], [2], [1], [1], [0, 0, 0, 1, 1, 1], [0], [0]>} : vector<2x8x8xbf16>, vector<2x8x8xbf16>, vector<2x8x8xf32> -> vector<2x8x8xf32>
    "tpu.trace_stop"() : () -> ()
    %cst_49 = arith.constant 0.353553385 : f32
    %137 = vector.broadcast %cst_49 : f32 to vector<2x8x8xf32>
    %138 = arith.mulf %136, %137 : vector<2x8x8xf32>
    %cst_50 = arith.constant dense<0xFF800000> : vector<2x8xf32>
    %139 = vector.multi_reduction <maximumf>, %138, %cst_50 [2] : vector<2x8x8xf32> to vector<2x8xf32>
    %140 = vector.shape_cast %139 : vector<2x8xf32> to vector<2x8x1xf32>
    %141 = vector.broadcast %140 : vector<2x8x1xf32> to vector<2x8x8xf32>
    %142 = arith.subf %138, %141 : vector<2x8x8xf32>
    %143 = math.exp %142 : vector<2x8x8xf32>
    %cst_51 = arith.constant dense<0.000000e+00> : vector<2x8xf32>
    %144 = vector.multi_reduction <add>, %143, %cst_51 [2] : vector<2x8x8xf32> to vector<2x8xf32>
    %145 = vector.shape_cast %144 : vector<2x8xf32> to vector<2x8x1xf32>
    %146 = tpu.reciprocal %145 {approx = true} : vector<2x8x1xf32> -> vector<2x8x1xf32>
    %147 = vector.broadcast %146 : vector<2x8x1xf32> to vector<2x8x8xf32>
    %148 = arith.mulf %143, %147 : vector<2x8x8xf32>
    %149 = arith.truncf %148 : vector<2x8x8xf32> to vector<2x8x8xbf16>
    %150 = arith.truncf %133 : vector<2x8x8xf32> to vector<2x8x8xbf16>
    "tpu.trace_start"() <{level = 10 : i32, message = "bqk,bkd->bqd"}> : () -> ()
    %cst_52 = arith.constant dense<0.000000e+00> : vector<2x8x8xf32>
    %151 = tpu.matmul %149, %150, %cst_52 {dimension_numbers = #tpu.dot_dimension_numbers<[2], [1], [1], [2], [0, 0, 0, 1, 1, 2], [0], [0]>} : vector<2x8x8xbf16>, vector<2x8x8xbf16>, vector<2x8x8xf32> -> vector<2x8x8xf32>
    "tpu.trace_stop"() : () -> ()
    %152 = tpu.concatenate %88, %109, %130, %151 in 2 : vector<2x8x8xf32>, vector<2x8x8xf32>, vector<2x8x8xf32>, vector<2x8x8xf32> -> vector<2x8x32xf32>
    %153 = vector.shape_cast %152 : vector<2x8x32xf32> to vector<16x32xf32>
    %154 = arith.truncf %153 : vector<16x32xf32> to vector<16x32xbf16>
    %cst_53 = arith.constant dense<0.000000e+00> : vector<16x32xf32>
    %155 = tpu.matmul %154, %38, %cst_53 {dimension_numbers = #tpu.dot_dimension_numbers<[1], [0], [0], [1], [0, 0, 1, 1], [], []>} : vector<16x32xbf16>, vector<32x32xbf16>, vector<16x32xf32> -> vector<16x32xf32>
    %156 = vector.broadcast %40 : vector<1x32xf32> to vector<16x32xf32>
    %157 = arith.addf %155, %156 : vector<16x32xf32>
    %158 = arith.addf %3, %157 : vector<16x32xf32>
    %159 = vector.extract_strided_slice %6 {offsets = [1, 0, 0], sizes = [1, 1, 32], strides = [1, 1, 1]} : vector<3x1x32xf32> to vector<1x1x32xf32>
    %160 = vector.shape_cast %159 : vector<1x1x32xf32> to vector<1x32xf32>
    %161 = vector.extract_strided_slice %8 {offsets = [1, 0, 0], sizes = [1, 1, 32], strides = [1, 1, 1]} : vector<3x1x32xf32> to vector<1x1x32xf32>
    %162 = vector.shape_cast %161 : vector<1x1x32xf32> to vector<1x32xf32>
    %cst_54 = arith.constant dense<0.000000e+00> : vector<16xf32>
    %163 = vector.multi_reduction <add>, %158, %cst_54 [1] : vector<16x32xf32> to vector<16xf32>
    %164 = vector.shape_cast %163 : vector<16xf32> to vector<16x1xf32>
    %cst_55 = arith.constant 3.200000e+01 : f32
    %165 = vector.broadcast %cst_55 : f32 to vector<16x1xf32>
    %166 = arith.divf %164, %165 : vector<16x1xf32>
    %167 = vector.broadcast %166 : vector<16x1xf32> to vector<16x32xf32>
    %168 = arith.subf %158, %167 : vector<16x32xf32>
    %169 = arith.mulf %168, %168 : vector<16x32xf32>
    %cst_56 = arith.constant dense<0.000000e+00> : vector<16xf32>
    %170 = vector.multi_reduction <add>, %169, %cst_56 [1] : vector<16x32xf32> to vector<16xf32>
    %171 = vector.shape_cast %170 : vector<16xf32> to vector<16x1xf32>
    %cst_57 = arith.constant 3.200000e+01 : f32
    %172 = vector.broadcast %cst_57 : f32 to vector<16x1xf32>
    %173 = arith.divf %171, %172 : vector<16x1xf32>
    %cst_58 = arith.constant 9.99999974E-6 : f32
    %174 = vector.broadcast %cst_58 : f32 to vector<16x1xf32>
    %175 = arith.addf %173, %174 : vector<16x1xf32>
    %176 = math.rsqrt %175 : vector<16x1xf32>
    %177 = vector.broadcast %176 : vector<16x1xf32> to vector<16x32xf32>
    %178 = arith.mulf %168, %177 : vector<16x32xf32>
    %179 = vector.broadcast %160 : vector<1x32xf32> to vector<16x32xf32>
    %180 = arith.mulf %178, %179 : vector<16x32xf32>
    %181 = vector.broadcast %162 : vector<1x32xf32> to vector<16x32xf32>
    %182 = arith.addf %180, %181 : vector<16x32xf32>
    %183 = vector.extract_strided_slice %6 {offsets = [1, 0, 0], sizes = [1, 1, 32], strides = [1, 1, 1]} : vector<3x1x32xf32> to vector<1x1x32xf32>
    %184 = vector.shape_cast %183 : vector<1x1x32xf32> to vector<1x32xf32>
    %185 = vector.extract_strided_slice %8 {offsets = [1, 0, 0], sizes = [1, 1, 32], strides = [1, 1, 1]} : vector<3x1x32xf32> to vector<1x1x32xf32>
    %186 = vector.shape_cast %185 : vector<1x1x32xf32> to vector<1x32xf32>
    %cst_59 = arith.constant dense<0.000000e+00> : vector<16xf32>
    %187 = vector.multi_reduction <add>, %4, %cst_59 [1] : vector<16x32xf32> to vector<16xf32>
    %188 = vector.shape_cast %187 : vector<16xf32> to vector<16x1xf32>
    %cst_60 = arith.constant 3.200000e+01 : f32
    %189 = vector.broadcast %cst_60 : f32 to vector<16x1xf32>
    %190 = arith.divf %188, %189 : vector<16x1xf32>
    %191 = vector.broadcast %190 : vector<16x1xf32> to vector<16x32xf32>
    %192 = arith.subf %4, %191 : vector<16x32xf32>
    %193 = arith.mulf %192, %192 : vector<16x32xf32>
    %cst_61 = arith.constant dense<0.000000e+00> : vector<16xf32>
    %194 = vector.multi_reduction <add>, %193, %cst_61 [1] : vector<16x32xf32> to vector<16xf32>
    %195 = vector.shape_cast %194 : vector<16xf32> to vector<16x1xf32>
    %cst_62 = arith.constant 3.200000e+01 : f32
    %196 = vector.broadcast %cst_62 : f32 to vector<16x1xf32>
    %197 = arith.divf %195, %196 : vector<16x1xf32>
    %cst_63 = arith.constant 9.99999974E-6 : f32
    %198 = vector.broadcast %cst_63 : f32 to vector<16x1xf32>
    %199 = arith.addf %197, %198 : vector<16x1xf32>
    %200 = math.rsqrt %199 : vector<16x1xf32>
    %201 = vector.broadcast %200 : vector<16x1xf32> to vector<16x32xf32>
    %202 = arith.mulf %192, %201 : vector<16x32xf32>
    %203 = vector.broadcast %184 : vector<1x32xf32> to vector<16x32xf32>
    %204 = arith.mulf %202, %203 : vector<16x32xf32>
    %205 = vector.broadcast %186 : vector<1x32xf32> to vector<16x32xf32>
    %206 = arith.addf %204, %205 : vector<16x32xf32>
    %c0_64 = arith.constant 0 : index
    %c0_65 = arith.constant 0 : index
    %c0_66 = arith.constant 0 : index
    %c0_67 = arith.constant 0 : index
    %207 = vector.load %arg9[%c0_64, %c0_65, %c0_66, %c0_67] : memref<1x3x32x32xbf16, #tpu.memory_space<vmem>>, vector<1x3x32x32xbf16>
    %208 = vector.shape_cast %207 : vector<1x3x32x32xbf16> to vector<3x32x32xbf16>
    %c0_68 = arith.constant 0 : index
    %c0_69 = arith.constant 0 : index
    %c0_70 = arith.constant 0 : index
    %c0_71 = arith.constant 0 : index
    %209 = vector.load %arg10[%c0_68, %c0_69, %c0_70, %c0_71] : memref<1x3x1x32xf32, #tpu.memory_space<vmem>>, vector<1x3x1x32xf32>
    %210 = vector.shape_cast %209 : vector<1x3x1x32xf32> to vector<3x1x32xf32>
    %c0_72 = arith.constant 0 : index
    %c0_73 = arith.constant 0 : index
    %c0_74 = arith.constant 0 : index
    %211 = vector.load %arg11[%c0_72, %c0_73, %c0_74] : memref<1x32x32xbf16, #tpu.memory_space<vmem>>, vector<1x32x32xbf16>
    %212 = vector.shape_cast %211 : vector<1x32x32xbf16> to vector<32x32xbf16>
    %c0_75 = arith.constant 0 : index
    %c0_76 = arith.constant 0 : index
    %c0_77 = arith.constant 0 : index
    %213 = vector.load %arg12[%c0_75, %c0_76, %c0_77] : memref<1x1x32xf32, #tpu.memory_space<vmem>>, vector<1x1x32xf32>
    %214 = vector.shape_cast %213 : vector<1x1x32xf32> to vector<1x32xf32>
    %215 = vector.extract_strided_slice %208 {offsets = [0, 0, 0], sizes = [1, 32, 32], strides = [1, 1, 1]} : vector<3x32x32xbf16> to vector<1x32x32xbf16>
    %216 = vector.shape_cast %215 : vector<1x32x32xbf16> to vector<32x32xbf16>
    %217 = arith.truncf %182 : vector<16x32xf32> to vector<16x32xbf16>
    %cst_78 = arith.constant dense<0.000000e+00> : vector<16x32xf32>
    %218 = tpu.matmul %217, %216, %cst_78 {dimension_numbers = #tpu.dot_dimension_numbers<[1], [0], [0], [1], [0, 0, 1, 1], [], []>} : vector<16x32xbf16>, vector<32x32xbf16>, vector<16x32xf32> -> vector<16x32xf32>
    %219 = vector.extract_strided_slice %210 {offsets = [0, 0, 0], sizes = [1, 1, 32], strides = [1, 1, 1]} : vector<3x1x32xf32> to vector<1x1x32xf32>
    %220 = vector.shape_cast %219 : vector<1x1x32xf32> to vector<1x32xf32>
    %221 = vector.broadcast %220 : vector<1x32xf32> to vector<16x32xf32>
    %222 = arith.addf %218, %221 : vector<16x32xf32>
    %223 = vector.extract_strided_slice %208 {offsets = [1, 0, 0], sizes = [1, 32, 32], strides = [1, 1, 1]} : vector<3x32x32xbf16> to vector<1x32x32xbf16>
    %224 = vector.shape_cast %223 : vector<1x32x32xbf16> to vector<32x32xbf16>
    %225 = arith.truncf %206 : vector<16x32xf32> to vector<16x32xbf16>
    %cst_79 = arith.constant dense<0.000000e+00> : vector<16x32xf32>
    %226 = tpu.matmul %225, %224, %cst_79 {dimension_numbers = #tpu.dot_dimension_numbers<[1], [0], [0], [1], [0, 0, 1, 1], [], []>} : vector<16x32xbf16>, vector<32x32xbf16>, vector<16x32xf32> -> vector<16x32xf32>
    %227 = vector.extract_strided_slice %210 {offsets = [1, 0, 0], sizes = [1, 1, 32], strides = [1, 1, 1]} : vector<3x1x32xf32> to vector<1x1x32xf32>
    %228 = vector.shape_cast %227 : vector<1x1x32xf32> to vector<1x32xf32>
    %229 = vector.broadcast %228 : vector<1x32xf32> to vector<16x32xf32>
    %230 = arith.addf %226, %229 : vector<16x32xf32>
    %231 = vector.extract_strided_slice %208 {offsets = [2, 0, 0], sizes = [1, 32, 32], strides = [1, 1, 1]} : vector<3x32x32xbf16> to vector<1x32x32xbf16>
    %232 = vector.shape_cast %231 : vector<1x32x32xbf16> to vector<32x32xbf16>
    %233 = arith.truncf %206 : vector<16x32xf32> to vector<16x32xbf16>
    %cst_80 = arith.constant dense<0.000000e+00> : vector<16x32xf32>
    %234 = tpu.matmul %233, %232, %cst_80 {dimension_numbers = #tpu.dot_dimension_numbers<[1], [0], [0], [1], [0, 0, 1, 1], [], []>} : vector<16x32xbf16>, vector<32x32xbf16>, vector<16x32xf32> -> vector<16x32xf32>
    %235 = vector.extract_strided_slice %210 {offsets = [2, 0, 0], sizes = [1, 1, 32], strides = [1, 1, 1]} : vector<3x1x32xf32> to vector<1x1x32xf32>
    %236 = vector.shape_cast %235 : vector<1x1x32xf32> to vector<1x32xf32>
    %237 = vector.broadcast %236 : vector<1x32xf32> to vector<16x32xf32>
    %238 = arith.addf %234, %237 : vector<16x32xf32>
    %239 = vector.shape_cast %222 : vector<16x32xf32> to vector<2x8x32xf32>
    %240 = vector.shape_cast %230 : vector<16x32xf32> to vector<2x8x32xf32>
    %241 = vector.shape_cast %238 : vector<16x32xf32> to vector<2x8x32xf32>
    %242 = vector.extract_strided_slice %239 {offsets = [0, 0, 0], sizes = [2, 8, 8], strides = [1, 1, 1]} : vector<2x8x32xf32> to vector<2x8x8xf32>
    %243 = vector.extract_strided_slice %240 {offsets = [0, 0, 0], sizes = [2, 8, 8], strides = [1, 1, 1]} : vector<2x8x32xf32> to vector<2x8x8xf32>
    %244 = vector.extract_strided_slice %241 {offsets = [0, 0, 0], sizes = [2, 8, 8], strides = [1, 1, 1]} : vector<2x8x32xf32> to vector<2x8x8xf32>
    %245 = arith.truncf %242 : vector<2x8x8xf32> to vector<2x8x8xbf16>
    %246 = arith.truncf %243 : vector<2x8x8xf32> to vector<2x8x8xbf16>
    "tpu.trace_start"() <{level = 10 : i32, message = "bqd,bkd->bqk"}> : () -> ()
    %cst_81 = arith.constant dense<0.000000e+00> : vector<2x8x8xf32>
    %247 = tpu.matmul %245, %246, %cst_81 {dimension_numbers = #tpu.dot_dimension_numbers<[2], [2], [1], [1], [0, 0, 0, 1, 1, 1], [0], [0]>} : vector<2x8x8xbf16>, vector<2x8x8xbf16>, vector<2x8x8xf32> -> vector<2x8x8xf32>
    "tpu.trace_stop"() : () -> ()
    %cst_82 = arith.constant 0.353553385 : f32
    %248 = vector.broadcast %cst_82 : f32 to vector<2x8x8xf32>
    %249 = arith.mulf %247, %248 : vector<2x8x8xf32>
    %cst_83 = arith.constant dense<0xFF800000> : vector<2x8xf32>
    %250 = vector.multi_reduction <maximumf>, %249, %cst_83 [2] : vector<2x8x8xf32> to vector<2x8xf32>
    %251 = vector.shape_cast %250 : vector<2x8xf32> to vector<2x8x1xf32>
    %252 = vector.broadcast %251 : vector<2x8x1xf32> to vector<2x8x8xf32>
    %253 = arith.subf %249, %252 : vector<2x8x8xf32>
    %254 = math.exp %253 : vector<2x8x8xf32>
    %cst_84 = arith.constant dense<0.000000e+00> : vector<2x8xf32>
    %255 = vector.multi_reduction <add>, %254, %cst_84 [2] : vector<2x8x8xf32> to vector<2x8xf32>
    %256 = vector.shape_cast %255 : vector<2x8xf32> to vector<2x8x1xf32>
    %257 = tpu.reciprocal %256 {approx = true} : vector<2x8x1xf32> -> vector<2x8x1xf32>
    %258 = vector.broadcast %257 : vector<2x8x1xf32> to vector<2x8x8xf32>
    %259 = arith.mulf %254, %258 : vector<2x8x8xf32>
    %260 = arith.truncf %259 : vector<2x8x8xf32> to vector<2x8x8xbf16>
    %261 = arith.truncf %244 : vector<2x8x8xf32> to vector<2x8x8xbf16>
    "tpu.trace_start"() <{level = 10 : i32, message = "bqk,bkd->bqd"}> : () -> ()
    %cst_85 = arith.constant dense<0.000000e+00> : vector<2x8x8xf32>
    %262 = tpu.matmul %260, %261, %cst_85 {dimension_numbers = #tpu.dot_dimension_numbers<[2], [1], [1], [2], [0, 0, 0, 1, 1, 2], [0], [0]>} : vector<2x8x8xbf16>, vector<2x8x8xbf16>, vector<2x8x8xf32> -> vector<2x8x8xf32>
    "tpu.trace_stop"() : () -> ()
    %263 = vector.extract_strided_slice %239 {offsets = [0, 0, 8], sizes = [2, 8, 8], strides = [1, 1, 1]} : vector<2x8x32xf32> to vector<2x8x8xf32>
    %264 = vector.extract_strided_slice %240 {offsets = [0, 0, 8], sizes = [2, 8, 8], strides = [1, 1, 1]} : vector<2x8x32xf32> to vector<2x8x8xf32>
    %265 = vector.extract_strided_slice %241 {offsets = [0, 0, 8], sizes = [2, 8, 8], strides = [1, 1, 1]} : vector<2x8x32xf32> to vector<2x8x8xf32>
    %266 = arith.truncf %263 : vector<2x8x8xf32> to vector<2x8x8xbf16>
    %267 = arith.truncf %264 : vector<2x8x8xf32> to vector<2x8x8xbf16>
    "tpu.trace_start"() <{level = 10 : i32, message = "bqd,bkd->bqk"}> : () -> ()
    %cst_86 = arith.constant dense<0.000000e+00> : vector<2x8x8xf32>
    %268 = tpu.matmul %266, %267, %cst_86 {dimension_numbers = #tpu.dot_dimension_numbers<[2], [2], [1], [1], [0, 0, 0, 1, 1, 1], [0], [0]>} : vector<2x8x8xbf16>, vector<2x8x8xbf16>, vector<2x8x8xf32> -> vector<2x8x8xf32>
    "tpu.trace_stop"() : () -> ()
    %cst_87 = arith.constant 0.353553385 : f32
    %269 = vector.broadcast %cst_87 : f32 to vector<2x8x8xf32>
    %270 = arith.mulf %268, %269 : vector<2x8x8xf32>
    %cst_88 = arith.constant dense<0xFF800000> : vector<2x8xf32>
    %271 = vector.multi_reduction <maximumf>, %270, %cst_88 [2] : vector<2x8x8xf32> to vector<2x8xf32>
    %272 = vector.shape_cast %271 : vector<2x8xf32> to vector<2x8x1xf32>
    %273 = vector.broadcast %272 : vector<2x8x1xf32> to vector<2x8x8xf32>
    %274 = arith.subf %270, %273 : vector<2x8x8xf32>
    %275 = math.exp %274 : vector<2x8x8xf32>
    %cst_89 = arith.constant dense<0.000000e+00> : vector<2x8xf32>
    %276 = vector.multi_reduction <add>, %275, %cst_89 [2] : vector<2x8x8xf32> to vector<2x8xf32>
    %277 = vector.shape_cast %276 : vector<2x8xf32> to vector<2x8x1xf32>
    %278 = tpu.reciprocal %277 {approx = true} : vector<2x8x1xf32> -> vector<2x8x1xf32>
    %279 = vector.broadcast %278 : vector<2x8x1xf32> to vector<2x8x8xf32>
    %280 = arith.mulf %275, %279 : vector<2x8x8xf32>
    %281 = arith.truncf %280 : vector<2x8x8xf32> to vector<2x8x8xbf16>
    %282 = arith.truncf %265 : vector<2x8x8xf32> to vector<2x8x8xbf16>
    "tpu.trace_start"() <{level = 10 : i32, message = "bqk,bkd->bqd"}> : () -> ()
    %cst_90 = arith.constant dense<0.000000e+00> : vector<2x8x8xf32>
    %283 = tpu.matmul %281, %282, %cst_90 {dimension_numbers = #tpu.dot_dimension_numbers<[2], [1], [1], [2], [0, 0, 0, 1, 1, 2], [0], [0]>} : vector<2x8x8xbf16>, vector<2x8x8xbf16>, vector<2x8x8xf32> -> vector<2x8x8xf32>
    "tpu.trace_stop"() : () -> ()
    %284 = vector.extract_strided_slice %239 {offsets = [0, 0, 16], sizes = [2, 8, 8], strides = [1, 1, 1]} : vector<2x8x32xf32> to vector<2x8x8xf32>
    %285 = vector.extract_strided_slice %240 {offsets = [0, 0, 16], sizes = [2, 8, 8], strides = [1, 1, 1]} : vector<2x8x32xf32> to vector<2x8x8xf32>
    %286 = vector.extract_strided_slice %241 {offsets = [0, 0, 16], sizes = [2, 8, 8], strides = [1, 1, 1]} : vector<2x8x32xf32> to vector<2x8x8xf32>
    %287 = arith.truncf %284 : vector<2x8x8xf32> to vector<2x8x8xbf16>
    %288 = arith.truncf %285 : vector<2x8x8xf32> to vector<2x8x8xbf16>
    "tpu.trace_start"() <{level = 10 : i32, message = "bqd,bkd->bqk"}> : () -> ()
    %cst_91 = arith.constant dense<0.000000e+00> : vector<2x8x8xf32>
    %289 = tpu.matmul %287, %288, %cst_91 {dimension_numbers = #tpu.dot_dimension_numbers<[2], [2], [1], [1], [0, 0, 0, 1, 1, 1], [0], [0]>} : vector<2x8x8xbf16>, vector<2x8x8xbf16>, vector<2x8x8xf32> -> vector<2x8x8xf32>
    "tpu.trace_stop"() : () -> ()
    %cst_92 = arith.constant 0.353553385 : f32
    %290 = vector.broadcast %cst_92 : f32 to vector<2x8x8xf32>
    %291 = arith.mulf %289, %290 : vector<2x8x8xf32>
    %cst_93 = arith.constant dense<0xFF800000> : vector<2x8xf32>
    %292 = vector.multi_reduction <maximumf>, %291, %cst_93 [2] : vector<2x8x8xf32> to vector<2x8xf32>
    %293 = vector.shape_cast %292 : vector<2x8xf32> to vector<2x8x1xf32>
    %294 = vector.broadcast %293 : vector<2x8x1xf32> to vector<2x8x8xf32>
    %295 = arith.subf %291, %294 : vector<2x8x8xf32>
    %296 = math.exp %295 : vector<2x8x8xf32>
    %cst_94 = arith.constant dense<0.000000e+00> : vector<2x8xf32>
    %297 = vector.multi_reduction <add>, %296, %cst_94 [2] : vector<2x8x8xf32> to vector<2x8xf32>
    %298 = vector.shape_cast %297 : vector<2x8xf32> to vector<2x8x1xf32>
    %299 = tpu.reciprocal %298 {approx = true} : vector<2x8x1xf32> -> vector<2x8x1xf32>
    %300 = vector.broadcast %299 : vector<2x8x1xf32> to vector<2x8x8xf32>
    %301 = arith.mulf %296, %300 : vector<2x8x8xf32>
    %302 = arith.truncf %301 : vector<2x8x8xf32> to vector<2x8x8xbf16>
    %303 = arith.truncf %286 : vector<2x8x8xf32> to vector<2x8x8xbf16>
    "tpu.trace_start"() <{level = 10 : i32, message = "bqk,bkd->bqd"}> : () -> ()
    %cst_95 = arith.constant dense<0.000000e+00> : vector<2x8x8xf32>
    %304 = tpu.matmul %302, %303, %cst_95 {dimension_numbers = #tpu.dot_dimension_numbers<[2], [1], [1], [2], [0, 0, 0, 1, 1, 2], [0], [0]>} : vector<2x8x8xbf16>, vector<2x8x8xbf16>, vector<2x8x8xf32> -> vector<2x8x8xf32>
    "tpu.trace_stop"() : () -> ()
    %305 = vector.extract_strided_slice %239 {offsets = [0, 0, 24], sizes = [2, 8, 8], strides = [1, 1, 1]} : vector<2x8x32xf32> to vector<2x8x8xf32>
    %306 = vector.extract_strided_slice %240 {offsets = [0, 0, 24], sizes = [2, 8, 8], strides = [1, 1, 1]} : vector<2x8x32xf32> to vector<2x8x8xf32>
    %307 = vector.extract_strided_slice %241 {offsets = [0, 0, 24], sizes = [2, 8, 8], strides = [1, 1, 1]} : vector<2x8x32xf32> to vector<2x8x8xf32>
    %308 = arith.truncf %305 : vector<2x8x8xf32> to vector<2x8x8xbf16>
    %309 = arith.truncf %306 : vector<2x8x8xf32> to vector<2x8x8xbf16>
    "tpu.trace_start"() <{level = 10 : i32, message = "bqd,bkd->bqk"}> : () -> ()
    %cst_96 = arith.constant dense<0.000000e+00> : vector<2x8x8xf32>
    %310 = tpu.matmul %308, %309, %cst_96 {dimension_numbers = #tpu.dot_dimension_numbers<[2], [2], [1], [1], [0, 0, 0, 1, 1, 1], [0], [0]>} : vector<2x8x8xbf16>, vector<2x8x8xbf16>, vector<2x8x8xf32> -> vector<2x8x8xf32>
    "tpu.trace_stop"() : () -> ()
    %cst_97 = arith.constant 0.353553385 : f32
    %311 = vector.broadcast %cst_97 : f32 to vector<2x8x8xf32>
    %312 = arith.mulf %310, %311 : vector<2x8x8xf32>
    %cst_98 = arith.constant dense<0xFF800000> : vector<2x8xf32>
    %313 = vector.multi_reduction <maximumf>, %312, %cst_98 [2] : vector<2x8x8xf32> to vector<2x8xf32>
    %314 = vector.shape_cast %313 : vector<2x8xf32> to vector<2x8x1xf32>
    %315 = vector.broadcast %314 : vector<2x8x1xf32> to vector<2x8x8xf32>
    %316 = arith.subf %312, %315 : vector<2x8x8xf32>
    %317 = math.exp %316 : vector<2x8x8xf32>
    %cst_99 = arith.constant dense<0.000000e+00> : vector<2x8xf32>
    %318 = vector.multi_reduction <add>, %317, %cst_99 [2] : vector<2x8x8xf32> to vector<2x8xf32>
    %319 = vector.shape_cast %318 : vector<2x8xf32> to vector<2x8x1xf32>
    %320 = tpu.reciprocal %319 {approx = true} : vector<2x8x1xf32> -> vector<2x8x1xf32>
    %321 = vector.broadcast %320 : vector<2x8x1xf32> to vector<2x8x8xf32>
    %322 = arith.mulf %317, %321 : vector<2x8x8xf32>
    %323 = arith.truncf %322 : vector<2x8x8xf32> to vector<2x8x8xbf16>
    %324 = arith.truncf %307 : vector<2x8x8xf32> to vector<2x8x8xbf16>
    "tpu.trace_start"() <{level = 10 : i32, message = "bqk,bkd->bqd"}> : () -> ()
    %cst_100 = arith.constant dense<0.000000e+00> : vector<2x8x8xf32>
    %325 = tpu.matmul %323, %324, %cst_100 {dimension_numbers = #tpu.dot_dimension_numbers<[2], [1], [1], [2], [0, 0, 0, 1, 1, 2], [0], [0]>} : vector<2x8x8xbf16>, vector<2x8x8xbf16>, vector<2x8x8xf32> -> vector<2x8x8xf32>
    "tpu.trace_stop"() : () -> ()
    %326 = tpu.concatenate %262, %283, %304, %325 in 2 : vector<2x8x8xf32>, vector<2x8x8xf32>, vector<2x8x8xf32>, vector<2x8x8xf32> -> vector<2x8x32xf32>
    %327 = vector.shape_cast %326 : vector<2x8x32xf32> to vector<16x32xf32>
    %328 = arith.truncf %327 : vector<16x32xf32> to vector<16x32xbf16>
    %cst_101 = arith.constant dense<0.000000e+00> : vector<16x32xf32>
    %329 = tpu.matmul %328, %212, %cst_101 {dimension_numbers = #tpu.dot_dimension_numbers<[1], [0], [0], [1], [0, 0, 1, 1], [], []>} : vector<16x32xbf16>, vector<32x32xbf16>, vector<16x32xf32> -> vector<16x32xf32>
    %330 = vector.broadcast %214 : vector<1x32xf32> to vector<16x32xf32>
    %331 = arith.addf %329, %330 : vector<16x32xf32>
    %332 = arith.addf %158, %331 : vector<16x32xf32>
    %333 = vector.extract_strided_slice %6 {offsets = [2, 0, 0], sizes = [1, 1, 32], strides = [1, 1, 1]} : vector<3x1x32xf32> to vector<1x1x32xf32>
    %334 = vector.shape_cast %333 : vector<1x1x32xf32> to vector<1x32xf32>
    %335 = vector.extract_strided_slice %8 {offsets = [2, 0, 0], sizes = [1, 1, 32], strides = [1, 1, 1]} : vector<3x1x32xf32> to vector<1x1x32xf32>
    %336 = vector.shape_cast %335 : vector<1x1x32xf32> to vector<1x32xf32>
    %cst_102 = arith.constant dense<0.000000e+00> : vector<16xf32>
    %337 = vector.multi_reduction <add>, %332, %cst_102 [1] : vector<16x32xf32> to vector<16xf32>
    %338 = vector.shape_cast %337 : vector<16xf32> to vector<16x1xf32>
    %cst_103 = arith.constant 3.200000e+01 : f32
    %339 = vector.broadcast %cst_103 : f32 to vector<16x1xf32>
    %340 = arith.divf %338, %339 : vector<16x1xf32>
    %341 = vector.broadcast %340 : vector<16x1xf32> to vector<16x32xf32>
    %342 = arith.subf %332, %341 : vector<16x32xf32>
    %343 = arith.mulf %342, %342 : vector<16x32xf32>
    %cst_104 = arith.constant dense<0.000000e+00> : vector<16xf32>
    %344 = vector.multi_reduction <add>, %343, %cst_104 [1] : vector<16x32xf32> to vector<16xf32>
    %345 = vector.shape_cast %344 : vector<16xf32> to vector<16x1xf32>
    %cst_105 = arith.constant 3.200000e+01 : f32
    %346 = vector.broadcast %cst_105 : f32 to vector<16x1xf32>
    %347 = arith.divf %345, %346 : vector<16x1xf32>
    %cst_106 = arith.constant 9.99999974E-6 : f32
    %348 = vector.broadcast %cst_106 : f32 to vector<16x1xf32>
    %349 = arith.addf %347, %348 : vector<16x1xf32>
    %350 = math.rsqrt %349 : vector<16x1xf32>
    %351 = vector.broadcast %350 : vector<16x1xf32> to vector<16x32xf32>
    %352 = arith.mulf %342, %351 : vector<16x32xf32>
    %353 = vector.broadcast %334 : vector<1x32xf32> to vector<16x32xf32>
    %354 = arith.mulf %352, %353 : vector<16x32xf32>
    %355 = vector.broadcast %336 : vector<1x32xf32> to vector<16x32xf32>
    %356 = arith.addf %354, %355 : vector<16x32xf32>
    %c0_107 = arith.constant 0 : index
    %c0_108 = arith.constant 0 : index
    %c0_109 = arith.constant 0 : index
    %357 = vector.load %arg13[%c0_107, %c0_108, %c0_109] : memref<1x32x64xbf16, #tpu.memory_space<vmem>>, vector<1x32x64xbf16>
    %358 = vector.shape_cast %357 : vector<1x32x64xbf16> to vector<32x64xbf16>
    %359 = arith.truncf %356 : vector<16x32xf32> to vector<16x32xbf16>
    %cst_110 = arith.constant dense<0.000000e+00> : vector<16x64xf32>
    %360 = tpu.matmul %359, %358, %cst_110 {dimension_numbers = #tpu.dot_dimension_numbers<[1], [0], [0], [1], [0, 0, 1, 1], [], []>} : vector<16x32xbf16>, vector<32x64xbf16>, vector<16x64xf32> -> vector<16x64xf32>
    %c0_111 = arith.constant 0 : index
    %c0_112 = arith.constant 0 : index
    %c0_113 = arith.constant 0 : index
    %361 = vector.load %arg14[%c0_111, %c0_112, %c0_113] : memref<1x1x64xf32, #tpu.memory_space<vmem>>, vector<1x1x64xf32>
    %362 = vector.shape_cast %361 : vector<1x1x64xf32> to vector<1x64xf32>
    %363 = vector.broadcast %362 : vector<1x64xf32> to vector<16x64xf32>
    %364 = arith.addf %360, %363 : vector<16x64xf32>
    %cst_114 = arith.constant 5.000000e-01 : f32
    %365 = vector.broadcast %cst_114 : f32 to vector<16x64xf32>
    %366 = arith.mulf %365, %364 : vector<16x64xf32>
    %cst_115 = arith.constant 0.707106769 : f32
    %367 = vector.broadcast %cst_115 : f32 to vector<16x64xf32>
    %368 = arith.mulf %364, %367 : vector<16x64xf32>
    %369 = math.erf %368 : vector<16x64xf32>
    %cst_116 = arith.constant 1.000000e+00 : f32
    %370 = vector.broadcast %cst_116 : f32 to vector<16x64xf32>
    %371 = arith.addf %370, %369 : vector<16x64xf32>
    %372 = arith.mulf %366, %371 : vector<16x64xf32>
    %c0_117 = arith.constant 0 : index
    %c0_118 = arith.constant 0 : index
    %c0_119 = arith.constant 0 : index
    %373 = vector.load %arg15[%c0_117, %c0_118, %c0_119] : memref<1x64x32xbf16, #tpu.memory_space<vmem>>, vector<1x64x32xbf16>
    %374 = vector.shape_cast %373 : vector<1x64x32xbf16> to vector<64x32xbf16>
    %375 = arith.truncf %372 : vector<16x64xf32> to vector<16x64xbf16>
    %cst_120 = arith.constant dense<0.000000e+00> : vector<16x32xf32>
    %376 = tpu.matmul %375, %374, %cst_120 {dimension_numbers = #tpu.dot_dimension_numbers<[1], [0], [0], [1], [0, 0, 1, 1], [], []>} : vector<16x64xbf16>, vector<64x32xbf16>, vector<16x32xf32> -> vector<16x32xf32>
    %377 = arith.addf %332, %376 : vector<16x32xf32>
    %c0_121 = arith.constant 0 : index
    %c0_122 = arith.constant 0 : index
    %c0_123 = arith.constant 0 : index
    %378 = vector.load %arg16[%c0_121, %c0_122, %c0_123] : memref<1x1x32xf32, #tpu.memory_space<vmem>>, vector<1x1x32xf32>
    %379 = vector.shape_cast %378 : vector<1x1x32xf32> to vector<1x32xf32>
    %380 = vector.broadcast %379 : vector<1x32xf32> to vector<16x32xf32>
    %381 = arith.addf %377, %380 : vector<16x32xf32>
    %c1_i32 = arith.constant 1 : i32
    %382 = arith.cmpi slt, %arg0, %c1_i32 : i32
    %383 = arith.extui %382 : i1 to i32
    %c0_i32_124 = arith.constant 0 : i32
    %384 = arith.cmpi ne, %383, %c0_i32_124 : i32
    scf.if %384 {
      %c0_127 = arith.constant 0 : index
      %c0_128 = arith.constant 0 : index
      %388 = vector.load %arg22[%c0_127, %c0_128] : memref<16x32xf32, #tpu.memory_space<vmem>>, vector<16x32xf32>
      tpu.vector_store %arg22[%c0_127, %c0_128], %381 {strides = array<i32>} : memref<16x32xf32, #tpu.memory_space<vmem>>, vector<16x32xf32>,
    } else {
    }
    %c1_i32_125 = arith.constant 1 : i32
    %385 = arith.cmpi eq, %arg0, %c1_i32_125 : i32
    %386 = arith.extui %385 : i1 to i32
    %c0_i32_126 = arith.constant 0 : i32
    %387 = arith.cmpi ne, %386, %c0_i32_126 : i32
    scf.if %387 {
      %c0_127 = arith.constant 0 : index
      %c0_128 = arith.constant 0 : index
      %388 = vector.load %arg17[%c0_127, %c0_128] : memref<1x32xf32, #tpu.memory_space<vmem>>, vector<1x32xf32>
      %c0_129 = arith.constant 0 : index
      %c0_130 = arith.constant 0 : index
      %389 = vector.load %arg18[%c0_129, %c0_130] : memref<1x32xf32, #tpu.memory_space<vmem>>, vector<1x32xf32>
      %cst_131 = arith.constant dense<0.000000e+00> : vector<16xf32>
      %390 = vector.multi_reduction <add>, %381, %cst_131 [1] : vector<16x32xf32> to vector<16xf32>
      %391 = vector.shape_cast %390 : vector<16xf32> to vector<16x1xf32>
      %cst_132 = arith.constant 3.200000e+01 : f32
      %392 = vector.broadcast %cst_132 : f32 to vector<16x1xf32>
      %393 = arith.divf %391, %392 : vector<16x1xf32>
      %394 = vector.broadcast %393 : vector<16x1xf32> to vector<16x32xf32>
      %395 = arith.subf %381, %394 : vector<16x32xf32>
      %396 = arith.mulf %395, %395 : vector<16x32xf32>
      %cst_133 = arith.constant dense<0.000000e+00> : vector<16xf32>
      %397 = vector.multi_reduction <add>, %396, %cst_133 [1] : vector<16x32xf32> to vector<16xf32>
      %398 = vector.shape_cast %397 : vector<16xf32> to vector<16x1xf32>
      %cst_134 = arith.constant 3.200000e+01 : f32
      %399 = vector.broadcast %cst_134 : f32 to vector<16x1xf32>
      %400 = arith.divf %398, %399 : vector<16x1xf32>
      %cst_135 = arith.constant 9.99999974E-6 : f32
      %401 = vector.broadcast %cst_135 : f32 to vector<16x1xf32>
      %402 = arith.addf %400, %401 : vector<16x1xf32>
      %403 = math.rsqrt %402 : vector<16x1xf32>
      %404 = vector.broadcast %403 : vector<16x1xf32> to vector<16x32xf32>
      %405 = arith.mulf %395, %404 : vector<16x32xf32>
      %406 = vector.broadcast %388 : vector<1x32xf32> to vector<16x32xf32>
      %407 = arith.mulf %405, %406 : vector<16x32xf32>
      %408 = vector.broadcast %389 : vector<1x32xf32> to vector<16x32xf32>
      %409 = arith.addf %407, %408 : vector<16x32xf32>
      %c0_136 = arith.constant 0 : index
      %c0_137 = arith.constant 0 : index
      %410 = vector.load %arg19[%c0_136, %c0_137] : memref<32x32xbf16, #tpu.memory_space<vmem>>, vector<32x32xbf16>
      %411 = arith.truncf %409 : vector<16x32xf32> to vector<16x32xbf16>
      %cst_138 = arith.constant dense<0.000000e+00> : vector<16x32xf32>
      %412 = tpu.matmul %411, %410, %cst_138 {dimension_numbers = #tpu.dot_dimension_numbers<[1], [0], [0], [1], [0, 0, 1, 1], [], []>} : vector<16x32xbf16>, vector<32x32xbf16>, vector<16x32xf32> -> vector<16x32xf32>
      %c0_139 = arith.constant 0 : index
      %c0_140 = arith.constant 0 : index
      %413 = vector.load %arg20[%c0_139, %c0_140] : memref<1x32xf32, #tpu.memory_space<vmem>>, vector<1x32xf32>
      %414 = vector.broadcast %413 : vector<1x32xf32> to vector<16x32xf32>
      %415 = arith.addf %412, %414 : vector<16x32xf32>
      %c0_141 = arith.constant 0 : index
      %c0_142 = arith.constant 0 : index
      %416 = vector.load %arg21[%c0_141, %c0_142] : memref<16x32xf32, #tpu.memory_space<vmem>>, vector<16x32xf32>
      tpu.vector_store %arg21[%c0_141, %c0_142], %415 {strides = array<i32>} : memref<16x32xf32, #tpu.memory_space<vmem>>, vector<16x32xf32>,
    } else {
    }
    return
  }
  func.func @transform_0(%arg0: i32) -> (i32, i32) {
    %c0_i32 = arith.constant 0 : i32
    %c0_i32_0 = arith.constant 0 : i32
    %c0_i32_1 = arith.constant 0 : i32
    return %c0_i32, %c0_i32_0 : i32, i32
  }
  func.func @transform_1(%arg0: i32) -> (i32, i32) {
    %c0_i32 = arith.constant 0 : i32
    %c0_i32_0 = arith.constant 0 : i32
    %c0_i32_1 = arith.constant 0 : i32
    return %c0_i32, %c0_i32_0 : i32, i32
  }
  func.func @transform_2(%arg0: i32) -> (i32, i32, i32, i32) {
    %c0_i32 = arith.constant 0 : i32
    %c0_i32_0 = arith.constant 0 : i32
    %c0_i32_1 = arith.constant 0 : i32
    %c0_i32_2 = arith.constant 0 : i32
    return %arg0, %c0_i32, %c0_i32_0, %c0_i32_1 : i32, i32, i32, i32
  }
  func.func @transform_3(%arg0: i32) -> (i32, i32, i32, i32) {
    %c0_i32 = arith.constant 0 : i32
    %c0_i32_0 = arith.constant 0 : i32
    %c0_i32_1 = arith.constant 0 : i32
    %c0_i32_2 = arith.constant 0 : i32
    return %arg0, %c0_i32, %c0_i32_0, %c0_i32_1 : i32, i32, i32, i32
  }
  func.func @transform_4(%arg0: i32) -> (i32, i32, i32, i32) {
    %c0_i32 = arith.constant 0 : i32
    %c0_i32_0 = arith.constant 0 : i32
    %c0_i32_1 = arith.constant 0 : i32
    %c0_i32_2 = arith.constant 0 : i32
    return %arg0, %c0_i32, %c0_i32_0, %c0_i32_1 : i32, i32, i32, i32
  }
  func.func @transform_5(%arg0: i32) -> (i32, i32, i32, i32) {
    %c0_i32 = arith.constant 0 : i32
    %c0_i32_0 = arith.constant 0 : i32
    %c0_i32_1 = arith.constant 0 : i32
    %c0_i32_2 = arith.constant 0 : i32
    return %arg0, %c0_i32, %c0_i32_0, %c0_i32_1 : i32, i32, i32, i32
  }
  func.func @transform_6(%arg0: i32) -> (i32, i32, i32) {
    %c0_i32 = arith.constant 0 : i32
    %c0_i32_0 = arith.constant 0 : i32
    %c0_i32_1 = arith.constant 0 : i32
    return %arg0, %c0_i32, %c0_i32_0 : i32, i32, i32
  }
  func.func @transform_7(%arg0: i32) -> (i32, i32, i32) {
    %c0_i32 = arith.constant 0 : i32
    %c0_i32_0 = arith.constant 0 : i32
    %c0_i32_1 = arith.constant 0 : i32
    return %arg0, %c0_i32, %c0_i32_0 : i32, i32, i32
  }
  func.func @transform_8(%arg0: i32) -> (i32, i32, i32, i32) {
    %c0_i32 = arith.constant 0 : i32
    %c0_i32_0 = arith.constant 0 : i32
    %c0_i32_1 = arith.constant 0 : i32
    %c0_i32_2 = arith.constant 0 : i32
    return %arg0, %c0_i32, %c0_i32_0, %c0_i32_1 : i32, i32, i32, i32
  }
  func.func @transform_9(%arg0: i32) -> (i32, i32, i32, i32) {
    %c0_i32 = arith.constant 0 : i32
    %c0_i32_0 = arith.constant 0 : i32
    %c0_i32_1 = arith.constant 0 : i32
    %c0_i32_2 = arith.constant 0 : i32
    return %arg0, %c0_i32, %c0_i32_0, %c0_i32_1 : i32, i32, i32, i32
  }
  func.func @transform_10(%arg0: i32) -> (i32, i32, i32) {
    %c0_i32 = arith.constant 0 : i32
    %c0_i32_0 = arith.constant 0 : i32
    %c0_i32_1 = arith.constant 0 : i32
    return %arg0, %c0_i32, %c0_i32_0 : i32, i32, i32
  }
  func.func @transform_11(%arg0: i32) -> (i32, i32, i32) {
    %c0_i32 = arith.constant 0 : i32
    %c0_i32_0 = arith.constant 0 : i32
    %c0_i32_1 = arith.constant 0 : i32
    return %arg0, %c0_i32, %c0_i32_0 : i32, i32, i32
  }
  func.func @transform_12(%arg0: i32) -> (i32, i32, i32) {
    %c0_i32 = arith.constant 0 : i32
    %c0_i32_0 = arith.constant 0 : i32
    %c0_i32_1 = arith.constant 0 : i32
    return %arg0, %c0_i32, %c0_i32_0 : i32, i32, i32
  }
  func.func @transform_13(%arg0: i32) -> (i32, i32, i32) {
    %c0_i32 = arith.constant 0 : i32
    %c0_i32_0 = arith.constant 0 : i32
    %c0_i32_1 = arith.constant 0 : i32
    return %arg0, %c0_i32, %c0_i32_0 : i32, i32, i32
  }
  func.func @transform_14(%arg0: i32) -> (i32, i32, i32) {
    %c0_i32 = arith.constant 0 : i32
    %c0_i32_0 = arith.constant 0 : i32
    %c0_i32_1 = arith.constant 0 : i32
    return %arg0, %c0_i32, %c0_i32_0 : i32, i32, i32
  }
  func.func @transform_15(%arg0: i32) -> (i32, i32, i32) {
    %c0_i32 = arith.constant 0 : i32
    %c0_i32_0 = arith.constant 0 : i32
    %c0_i32_1 = arith.constant 0 : i32
    return %arg0, %c0_i32, %c0_i32_0 : i32, i32, i32
  }
  func.func @transform_16(%arg0: i32) -> (i32, i32) {
    %c0_i32 = arith.constant 0 : i32
    %c0_i32_0 = arith.constant 0 : i32
    %c0_i32_1 = arith.constant 0 : i32
    return %c0_i32, %c0_i32_0 : i32, i32
  }
  func.func @transform_17(%arg0: i32) -> (i32, i32) {
    %c0_i32 = arith.constant 0 : i32
    %c0_i32_0 = arith.constant 0 : i32
    %c0_i32_1 = arith.constant 0 : i32
    return %c0_i32, %c0_i32_0 : i32, i32
  }
  func.func @transform_18(%arg0: i32) -> (i32, i32) {
    %c0_i32 = arith.constant 0 : i32
    %c0_i32_0 = arith.constant 0 : i32
    %c0_i32_1 = arith.constant 0 : i32
    return %c0_i32, %c0_i32_0 : i32, i32
  }
  func.func @transform_19(%arg0: i32) -> (i32, i32) {
    %c0_i32 = arith.constant 0 : i32
    %c0_i32_0 = arith.constant 0 : i32
    %c0_i32_1 = arith.constant 0 : i32
    return %c0_i32, %c0_i32_0 : i32, i32
  }
  func.func @transform_20(%arg0: i32) -> (i32, i32) {
    %c0_i32 = arith.constant 0 : i32
    %c0_i32_0 = arith.constant 0 : i32
    %c0_i32_1 = arith.constant 0 : i32
    return %c0_i32, %c0_i32_0 : i32, i32
  }
}

</mosaic_0001>

<llo_original>
// kernel: tpu_custom_call.1
$region0: #{tpu_custom_call.1}
  #allocation0 [shape = 'u32[]', space=smem, size = 0x4, offset = 0x4, fixed_abs, tag = 'smem constant byte address 0x4 - core index']
  #allocation1 [shape = 'u32[144,128]{1,0:T(1,128)}', space=vmem, size = 0x12000, scoped, tag = 'internal scratch']
  #allocation2 [shape = 'f32[16,32]{1,0:T(8,128)}', space=vmem, size = 0x2000, scoped, tag = 'scratch operand']
  %s0 = inlined_call_operand.hbm [shape: f32[16,32], index: 0, kind: input, shape index: {}]
  %s1 = inlined_call_operand.hbm [shape: f32[16,32], index: 1, kind: input, shape index: {}]
  %s2 = inlined_call_operand.hbm [shape: f32[2,3,1,32], index: 2, kind: input, shape index: {}]
  %s3 = inlined_call_operand.hbm [shape: f32[2,3,1,32], index: 3, kind: input, shape index: {}]
  %s4 = inlined_call_operand.hbm [shape: bf16[2,3,32,32], index: 4, kind: input, shape index: {}]
  %s5 = inlined_call_operand.hbm [shape: f32[2,3,1,32], index: 5, kind: input, shape index: {}]
  %s6 = inlined_call_operand.hbm [shape: bf16[2,32,32], index: 6, kind: input, shape index: {}]
  %s7 = inlined_call_operand.hbm [shape: f32[2,1,32], index: 7, kind: input, shape index: {}]
  %s8 = inlined_call_operand.hbm [shape: bf16[2,3,32,32], index: 8, kind: input, shape index: {}]
  %s9 = inlined_call_operand.hbm [shape: f32[2,3,1,32], index: 9, kind: input, shape index: {}]
  %s10 = inlined_call_operand.hbm [shape: bf16[2,32,32], index: 10, kind: input, shape index: {}]
  %s11 = inlined_call_operand.hbm [shape: f32[2,1,32], index: 11, kind: input, shape index: {}]
  %s12 = inlined_call_operand.hbm [shape: bf16[2,32,64], index: 12, kind: input, shape index: {}]
  %s13 = inlined_call_operand.hbm [shape: f32[2,1,64], index: 13, kind: input, shape index: {}]
  %s14 = inlined_call_operand.hbm [shape: bf16[2,64,32], index: 14, kind: input, shape index: {}]
  %s15 = inlined_call_operand.hbm [shape: f32[2,1,32], index: 15, kind: input, shape index: {}]
  %s16 = inlined_call_operand.hbm [shape: f32[1,32], index: 16, kind: input, shape index: {}]
  %s17 = inlined_call_operand.hbm [shape: f32[1,32], index: 17, kind: input, shape index: {}]
  %s18 = inlined_call_operand.hbm [shape: bf16[32,32], index: 18, kind: input, shape index: {}]
  %s19 = inlined_call_operand.hbm [shape: f32[1,32], index: 19, kind: input, shape index: {}]
  %s20 = inlined_call_operand.hbm [shape: f32[16,32], index: 20, kind: output, shape index: {}]
  %s21 = sld [smem:[#allocation0]]
  $region205: #{tpu_custom_call.1} parent=0
    _
  %s23 = ssub.s32 1, %s21
  %s24 = scalar_select 0, %s23, %s21
  $region1: #{tpu_custom_call.1} parent=0
    #allocation3 [shape = 'u8[8192]{0}', space=vmem, size = 0x2000, scoped, tag = 'input window, operand 0, single buffered']
    #allocation4 [shape = 's32[2]{0}', space=sflag, size = 0x8, scoped, tag = 'scoped memory for tpu_custom_call.1']
    #allocation5 [shape = 's32[2]{0}', space=sflag, size = 0x8, scoped, tag = 'scoped memory for tpu_custom_call.1']
    #allocation6 [shape = 'u8[8192]{0}', space=vmem, size = 0x2000, scoped, tag = 'input window, operand 1, single buffered']
    #allocation7 [shape = 's32[1]{0}', space=sflag, size = 0x4, scoped, tag = 'scoped memory for tpu_custom_call.1']
    #allocation8 [shape = 'u8[3072]{0}', space=vmem, size = 0xc00, scoped, tag = 'input window, operand 2']
    #allocation9 [shape = 'u8[3072]{0}', space=vmem, size = 0xc00, scoped, tag = 'input window, operand 3']
    #allocation10 [shape = 'u8[49152]{0}', space=vmem, size = 0xc000, scoped, tag = 'input window, operand 4']
    #allocation11 [shape = 'u8[3072]{0}', space=vmem, size = 0xc00, scoped, tag = 'input window, operand 5']
    #allocation12 [shape = 'u8[16384]{0}', space=vmem, size = 0x4000, scoped, tag = 'input window, operand 6']
    #allocation13 [shape = 'u8[1024]{0}', space=vmem, size = 0x400, scoped, tag = 'input window, operand 7']
    #allocation14 [shape = 'u8[49152]{0}', space=vmem, size = 0xc000, scoped, tag = 'input window, operand 8']
    #allocation15 [shape = 'u8[3072]{0}', space=vmem, size = 0xc00, scoped, tag = 'input window, operand 9']
    #allocation16 [shape = 'u8[16384]{0}', space=vmem, size = 0x4000, scoped, tag = 'input window, operand 10']
    #allocation17 [shape = 'u8[1024]{0}', space=vmem, size = 0x400, scoped, tag = 'input window, operand 11']
    #allocation18 [shape = 'u8[16384]{0}', space=vmem, size = 0x4000, scoped, tag = 'input window, operand 12']
    #allocation19 [shape = 'u8[1024]{0}', space=vmem, size = 0x400, scoped, tag = 'input window, operand 13']
    #allocation20 [shape = 'u8[32768]{0}', space=vmem, size = 0x8000, scoped, tag = 'input window, operand 14']
    #allocation21 [shape = 'u8[1024]{0}', space=vmem, size = 0x400, scoped, tag = 'input window, operand 15']
    #allocation22 [shape = 'u8[512]{0}', space=vmem, size = 0x400, scoped, tag = 'input window, operand 16, single buffered']
    #allocation23 [shape = 'u8[512]{0}', space=vmem, size = 0x400, scoped, tag = 'input window, operand 17, single buffered']
    #allocation24 [shape = 's32[1]{0}', space=sflag, size = 0x4, scoped, tag = 'scoped memory for tpu_custom_call.1']
    #allocation25 [shape = 'u8[8192]{0}', space=vmem, size = 0x2000, scoped, tag = 'input window, operand 18, single buffered']
    #allocation26 [shape = 'u8[512]{0}', space=vmem, size = 0x400, scoped, tag = 'input window, operand 19, single buffered']
    #allocation27 [shape = 's32[1]{0}', space=sflag, size = 0x4, scoped, tag = 'scoped memory for tpu_custom_call.1']
    #allocation28 [shape = 'u8[8192]{0}', space=vmem, size = 0x2000, scoped, tag = 'output window, operand 0, single buffered']
    %25 = vsyncpa [#allocation4], 0
    %26 = vsyncpa [#allocation7], 0
    %27 = vsyncpa [#allocation24], 0
    %28 = vsyncpa [#allocation27], 0
    %29 = vsyncpa [#allocation5], 0
    loop: start=0, step=1, limit=4
    $region2: #{tpu_custom_call.1} parent=1 // loop_pre_header
      _
    $region3: #{tpu_custom_call.1} parent=1 // loop_header
      %s31 = sphi 0, %s35
      %p32 = scmp.ge.s32.totalorder %s31, 4
      %s39 = sphi 0, %s39
      %s41 = sphi 0, %s39
      %s42 = sphi 0, %s41
      %s56 = sphi 0, %s42
      %s60 = sphi 0, %s60
      %s62 = sphi 0, %s60
      %s63 = sphi 0, %s62
      %s77 = sphi 0, %s63
      %s83 = sphi 0, %s85
      %s86 = sphi 0, %s83
      %s87 = sphi 0, %s86
      %s103 = sphi 0, %s87
      %s109 = sphi 0, %s111
      %s112 = sphi 0, %s109
      %s113 = sphi 0, %s112
      %s129 = sphi 0, %s113
      %s135 = sphi 0, %s137
      %s138 = sphi 0, %s135
      %s139 = sphi 0, %s138
      %s155 = sphi 0, %s139
      %s161 = sphi 0, %s163
      %s164 = sphi 0, %s161
      %s165 = sphi 0, %s164
      %s181 = sphi 0, %s165
      %s187 = sphi 0, %s189
      %s190 = sphi 0, %s187
      %s191 = sphi 0, %s190
      %s207 = sphi 0, %s191
      %s213 = sphi 0, %s215
      %s216 = sphi 0, %s213
      %s217 = sphi 0, %s216
      %s233 = sphi 0, %s217
      %s239 = sphi 0, %s241
      %s242 = sphi 0, %s239
      %s243 = sphi 0, %s242
      %s259 = sphi 0, %s243
      %s265 = sphi 0, %s267
      %s268 = sphi 0, %s265
      %s269 = sphi 0, %s268
      %s285 = sphi 0, %s269
      %s291 = sphi 0, %s293
      %s294 = sphi 0, %s291
      %s295 = sphi 0, %s294
      %s311 = sphi 0, %s295
      %s317 = sphi 0, %s319
      %s320 = sphi 0, %s317
      %s321 = sphi 0, %s320
      %s337 = sphi 0, %s321
      %s343 = sphi 0, %s345
      %s346 = sphi 0, %s343
      %s347 = sphi 0, %s346
      %s363 = sphi 0, %s347
      %s369 = sphi 0, %s371
      %s372 = sphi 0, %s369
      %s373 = sphi 0, %s372
      %s389 = sphi 0, %s373
      %s395 = sphi 0, %s397
      %s398 = sphi 0, %s395
      %s399 = sphi 0, %s398
      %s415 = sphi 0, %s399
      %s421 = sphi 0, %s423
      %s424 = sphi 0, %s421
      %s425 = sphi 0, %s424
      %s441 = sphi 0, %s425
      %s445 = sphi 0, %s445
      %s447 = sphi 0, %s445
      %s448 = sphi 0, %s447
      %s462 = sphi 0, %s448
      %s466 = sphi 0, %s466
      %s468 = sphi 0, %s466
      %s469 = sphi 0, %s468
      %s483 = sphi 0, %s469
      %s487 = sphi 0, %s487
      %s489 = sphi 0, %s487
      %s490 = sphi 0, %s489
      %s504 = sphi 0, %s490
      %s508 = sphi 0, %s508
      %s510 = sphi 0, %s508
      %s511 = sphi 0, %s510
      %s525 = sphi 0, %s511
      %s529 = sphi 0, %s529
      %s531 = sphi 0, %s529
      %s532 = sphi 0, %s531
      %s546 = sphi 0, %s532
    $region4: #{tpu_custom_call.1} parent=1 // loop_header_branch
      %34 = sbr.rel (%p32) target = $region8
    $region5: #{tpu_custom_call.1} parent=1 // loop_body
      %s36 = ssub.s32 %s31, 1
      %s37 = ssub.s32 %s31, 2
      %s38 = sadd.s32 %s31, 1
      %s40 = sadd.s32 %s39, 1
      %p43 = scmp.eq.s32.totalorder %s31, 1
      %p44 = scmp.ne.s32.totalorder %s39, %s41
      %p45 = scmp.eq.s32.totalorder %s31, 0
      %p46 = por %p44, %p45
      %p47 = scmp.ne.s32.totalorder %s39, %s41
      %p48 = scmp.eq.s32.totalorder %s36, 1
      %p49 = por %p47, %p48
      %p50 = scmp.ne.s32.totalorder %s41, %s42
      %p51 = scmp.eq.s32.totalorder %s36, 0
      %p52 = por %p50, %p51
      %p53 = scmp.ne.s32.totalorder %s41, %s42
      %p54 = scmp.eq.s32.totalorder %s37, 1
      %p55 = por %p53, %p54
      %p57 = scmp.ne.s32.totalorder %s42, %s56
      %p58 = scmp.eq.s32.totalorder %s37, 0
      %p59 = por %p57, %p58
      %s61 = sadd.s32 %s60, 1
      %p64 = scmp.eq.s32.totalorder %s31, 1
      %p65 = scmp.ne.s32.totalorder %s60, %s62
      %p66 = scmp.eq.s32.totalorder %s31, 0
      %p67 = por %p65, %p66
      %p68 = scmp.ne.s32.totalorder %s60, %s62
      %p69 = scmp.eq.s32.totalorder %s36, 1
      %p70 = por %p68, %p69
      %p71 = scmp.ne.s32.totalorder %s62, %s63
      %p72 = scmp.eq.s32.totalorder %s36, 0
      %p73 = por %p71, %p72
      %p74 = scmp.ne.s32.totalorder %s62, %s63
      %p75 = scmp.eq.s32.totalorder %s37, 1
      %p76 = por %p74, %p75
      %p78 = scmp.ne.s32.totalorder %s63, %s77
      %p79 = scmp.eq.s32.totalorder %s37, 0
      %p80 = por %p78, %p79
      %s81 = ssub.s32 %s31, %s38
      %p82 = scmp.eq.s32.totalorder %s81, 0
      %s84 = sadd.s32 %s83, 1
      %s85 = scalar_select %p82, %s83, %s84
      %p88 = pneg %p82
      %p89 = scmp.eq.s32.totalorder %s31, 1
      %p90 = por %p88, %p89
      %p91 = scmp.ne.s32.totalorder %s83, %s86
      %p92 = scmp.eq.s32.totalorder %s31, 0
      %p93 = por %p91, %p92
      %p94 = scmp.ne.s32.totalorder %s83, %s86
      %p95 = scmp.eq.s32.totalorder %s36, 1
      %p96 = por %p94, %p95
      %p97 = scmp.ne.s32.totalorder %s86, %s87
      %p98 = scmp.eq.s32.totalorder %s36, 0
      %p99 = por %p97, %p98
      %p100 = scmp.ne.s32.totalorder %s86, %s87
      %p101 = scmp.eq.s32.totalorder %s37, 1
      %p102 = por %p100, %p101
      %p104 = scmp.ne.s32.totalorder %s87, %s103
      %p105 = scmp.eq.s32.totalorder %s37, 0
      %p106 = por %p104, %p105
      %s107 = ssub.s32 %s31, %s38
      %p108 = scmp.eq.s32.totalorder %s107, 0
      %s110 = sadd.s32 %s109, 1
      %s111 = scalar_select %p108, %s109, %s110
      %p114 = pneg %p108
      %p115 = scmp.eq.s32.totalorder %s31, 1
      %p116 = por %p114, %p115
      %p117 = scmp.ne.s32.totalorder %s109, %s112
      %p118 = scmp.eq.s32.totalorder %s31, 0
      %p119 = por %p117, %p118
      %p120 = scmp.ne.s32.totalorder %s109, %s112
      %p121 = scmp.eq.s32.totalorder %s36, 1
      %p122 = por %p120, %p121
      %p123 = scmp.ne.s32.totalorder %s112, %s113
      %p124 = scmp.eq.s32.totalorder %s36, 0
      %p125 = por %p123, %p124
      %p126 = scmp.ne.s32.totalorder %s112, %s113
      %p127 = scmp.eq.s32.totalorder %s37, 1
      %p128 = por %p126, %p127
      %p130 = scmp.ne.s32.totalorder %s113, %s129
      %p131 = scmp.eq.s32.totalorder %s37, 0
      %p132 = por %p130, %p131
      %s133 = ssub.s32 %s31, %s38
      %p134 = scmp.eq.s32.totalorder %s133, 0
      %s136 = sadd.s32 %s135, 1
      %s137 = scalar_select %p134, %s135, %s136
      %p140 = pneg %p134
      %p141 = scmp.eq.s32.totalorder %s31, 1
      %p142 = por %p140, %p141
      %p143 = scmp.ne.s32.totalorder %s135, %s138
      %p144 = scmp.eq.s32.totalorder %s31, 0
      %p145 = por %p143, %p144
      %p146 = scmp.ne.s32.totalorder %s135, %s138
      %p147 = scmp.eq.s32.totalorder %s36, 1
      %p148 = por %p146, %p147
      %p149 = scmp.ne.s32.totalorder %s138, %s139
      %p150 = scmp.eq.s32.totalorder %s36, 0
      %p151 = por %p149, %p150
      %p152 = scmp.ne.s32.totalorder %s138, %s139
      %p153 = scmp.eq.s32.totalorder %s37, 1
      %p154 = por %p152, %p153
      %p156 = scmp.ne.s32.totalorder %s139, %s155
      %p157 = scmp.eq.s32.totalorder %s37, 0
      %p158 = por %p156, %p157
      %s159 = ssub.s32 %s31, %s38
      %p160 = scmp.eq.s32.totalorder %s159, 0
      %s162 = sadd.s32 %s161, 1
      %s163 = scalar_select %p160, %s161, %s162
      %p166 = pneg %p160
      %p167 = scmp.eq.s32.totalorder %s31, 1
      %p168 = por %p166, %p167
      %p169 = scmp.ne.s32.totalorder %s161, %s164
      %p170 = scmp.eq.s32.totalorder %s31, 0
      %p171 = por %p169, %p170
      %p172 = scmp.ne.s32.totalorder %s161, %s164
      %p173 = scmp.eq.s32.totalorder %s36, 1
      %p174 = por %p172, %p173
      %p175 = scmp.ne.s32.totalorder %s164, %s165
      %p176 = scmp.eq.s32.totalorder %s36, 0
      %p177 = por %p175, %p176
      %p178 = scmp.ne.s32.totalorder %s164, %s165
      %p179 = scmp.eq.s32.totalorder %s37, 1
      %p180 = por %p178, %p179
      %p182 = scmp.ne.s32.totalorder %s165, %s181
      %p183 = scmp.eq.s32.totalorder %s37, 0
      %p184 = por %p182, %p183
      %s185 = ssub.s32 %s31, %s38
      %p186 = scmp.eq.s32.totalorder %s185, 0
      %s188 = sadd.s32 %s187, 1
      %s189 = scalar_select %p186, %s187, %s188
      %p192 = pneg %p186
      %p193 = scmp.eq.s32.totalorder %s31, 1
      %p194 = por %p192, %p193
      %p195 = scmp.ne.s32.totalorder %s187, %s190
      %p196 = scmp.eq.s32.totalorder %s31, 0
      %p197 = por %p195, %p196
      %p198 = scmp.ne.s32.totalorder %s187, %s190
      %p199 = scmp.eq.s32.totalorder %s36, 1
      %p200 = por %p198, %p199
      %p201 = scmp.ne.s32.totalorder %s190, %s191
      %p202 = scmp.eq.s32.totalorder %s36, 0
      %p203 = por %p201, %p202
      %p204 = scmp.ne.s32.totalorder %s190, %s191
      %p205 = scmp.eq.s32.totalorder %s37, 1
      %p206 = por %p204, %p205
      %p208 = scmp.ne.s32.totalorder %s191, %s207
      %p209 = scmp.eq.s32.totalorder %s37, 0
      %p210 = por %p208, %p209
      %s211 = ssub.s32 %s31, %s38
      %p212 = scmp.eq.s32.totalorder %s211, 0
      %s214 = sadd.s32 %s213, 1
      %s215 = scalar_select %p212, %s213, %s214
      %p218 = pneg %p212
      %p219 = scmp.eq.s32.totalorder %s31, 1
      %p220 = por %p218, %p219
      %p221 = scmp.ne.s32.totalorder %s213, %s216
      %p222 = scmp.eq.s32.totalorder %s31, 0
      %p223 = por %p221, %p222
      %p224 = scmp.ne.s32.totalorder %s213, %s216
      %p225 = scmp.eq.s32.totalorder %s36, 1
      %p226 = por %p224, %p225
      %p227 = scmp.ne.s32.totalorder %s216, %s217
      %p228 = scmp.eq.s32.totalorder %s36, 0
      %p229 = por %p227, %p228
      %p230 = scmp.ne.s32.totalorder %s216, %s217
      %p231 = scmp.eq.s32.totalorder %s37, 1
      %p232 = por %p230, %p231
      %p234 = scmp.ne.s32.totalorder %s217, %s233
      %p235 = scmp.eq.s32.totalorder %s37, 0
      %p236 = por %p234, %p235
      %s237 = ssub.s32 %s31, %s38
      %p238 = scmp.eq.s32.totalorder %s237, 0
      %s240 = sadd.s32 %s239, 1
      %s241 = scalar_select %p238, %s239, %s240
      %p244 = pneg %p238
      %p245 = scmp.eq.s32.totalorder %s31, 1
      %p246 = por %p244, %p245
      %p247 = scmp.ne.s32.totalorder %s239, %s242
      %p248 = scmp.eq.s32.totalorder %s31, 0
      %p249 = por %p247, %p248
      %p250 = scmp.ne.s32.totalorder %s239, %s242
      %p251 = scmp.eq.s32.totalorder %s36, 1
      %p252 = por %p250, %p251
      %p253 = scmp.ne.s32.totalorder %s242, %s243
      %p254 = scmp.eq.s32.totalorder %s36, 0
      %p255 = por %p253, %p254
      %p256 = scmp.ne.s32.totalorder %s242, %s243
      %p257 = scmp.eq.s32.totalorder %s37, 1
      %p258 = por %p256, %p257
      %p260 = scmp.ne.s32.totalorder %s243, %s259
      %p261 = scmp.eq.s32.totalorder %s37, 0
      %p262 = por %p260, %p261
      %s263 = ssub.s32 %s31, %s38
      %p264 = scmp.eq.s32.totalorder %s263, 0
      %s266 = sadd.s32 %s265, 1
      %s267 = scalar_select %p264, %s265, %s266
      %p270 = pneg %p264
      %p271 = scmp.eq.s32.totalorder %s31, 1
      %p272 = por %p270, %p271
      %p273 = scmp.ne.s32.totalorder %s265, %s268
      %p274 = scmp.eq.s32.totalorder %s31, 0
      %p275 = por %p273, %p274
      %p276 = scmp.ne.s32.totalorder %s265, %s268
      %p277 = scmp.eq.s32.totalorder %s36, 1
      %p278 = por %p276, %p277
      %p279 = scmp.ne.s32.totalorder %s268, %s269
      %p280 = scmp.eq.s32.totalorder %s36, 0
      %p281 = por %p279, %p280
      %p282 = scmp.ne.s32.totalorder %s268, %s269
      %p283 = scmp.eq.s32.totalorder %s37, 1
      %p284 = por %p282, %p283
      %p286 = scmp.ne.s32.totalorder %s269, %s285
      %p287 = scmp.eq.s32.totalorder %s37, 0
      %p288 = por %p286, %p287
      %s289 = ssub.s32 %s31, %s38
      %p290 = scmp.eq.s32.totalorder %s289, 0
      %s292 = sadd.s32 %s291, 1
      %s293 = scalar_select %p290, %s291, %s292
      %p296 = pneg %p290
      %p297 = scmp.eq.s32.totalorder %s31, 1
      %p298 = por %p296, %p297
      %p299 = scmp.ne.s32.totalorder %s291, %s294
      %p300 = scmp.eq.s32.totalorder %s31, 0
      %p301 = por %p299, %p300
      %p302 = scmp.ne.s32.totalorder %s291, %s294
      %p303 = scmp.eq.s32.totalorder %s36, 1
      %p304 = por %p302, %p303
      %p305 = scmp.ne.s32.totalorder %s294, %s295
      %p306 = scmp.eq.s32.totalorder %s36, 0
      %p307 = por %p305, %p306
      %p308 = scmp.ne.s32.totalorder %s294, %s295
      %p309 = scmp.eq.s32.totalorder %s37, 1
      %p310 = por %p308, %p309
      %p312 = scmp.ne.s32.totalorder %s295, %s311
      %p313 = scmp.eq.s32.totalorder %s37, 0
      %p314 = por %p312, %p313
      %s315 = ssub.s32 %s31, %s38
      %p316 = scmp.eq.s32.totalorder %s315, 0
      %s318 = sadd.s32 %s317, 1
      %s319 = scalar_select %p316, %s317, %s318
      %p322 = pneg %p316
      %p323 = scmp.eq.s32.totalorder %s31, 1
      %p324 = por %p322, %p323
      %p325 = scmp.ne.s32.totalorder %s317, %s320
      %p326 = scmp.eq.s32.totalorder %s31, 0
      %p327 = por %p325, %p326
      %p328 = scmp.ne.s32.totalorder %s317, %s320
      %p329 = scmp.eq.s32.totalorder %s36, 1
      %p330 = por %p328, %p329
      %p331 = scmp.ne.s32.totalorder %s320, %s321
      %p332 = scmp.eq.s32.totalorder %s36, 0
      %p333 = por %p331, %p332
      %p334 = scmp.ne.s32.totalorder %s320, %s321
      %p335 = scmp.eq.s32.totalorder %s37, 1
      %p336 = por %p334, %p335
      %p338 = scmp.ne.s32.totalorder %s321, %s337
      %p339 = scmp.eq.s32.totalorder %s37, 0
      %p340 = por %p338, %p339
      %s341 = ssub.s32 %s31, %s38
      %p342 = scmp.eq.s32.totalorder %s341, 0
      %s344 = sadd.s32 %s343, 1
      %s345 = scalar_select %p342, %s343, %s344
      %p348 = pneg %p342
      %p349 = scmp.eq.s32.totalorder %s31, 1
      %p350 = por %p348, %p349
      %p351 = scmp.ne.s32.totalorder %s343, %s346
      %p352 = scmp.eq.s32.totalorder %s31, 0
      %p353 = por %p351, %p352
      %p354 = scmp.ne.s32.totalorder %s343, %s346
      %p355 = scmp.eq.s32.totalorder %s36, 1
      %p356 = por %p354, %p355
      %p357 = scmp.ne.s32.totalorder %s346, %s347
      %p358 = scmp.eq.s32.totalorder %s36, 0
      %p359 = por %p357, %p358
      %p360 = scmp.ne.s32.totalorder %s346, %s347
      %p361 = scmp.eq.s32.totalorder %s37, 1
      %p362 = por %p360, %p361
      %p364 = scmp.ne.s32.totalorder %s347, %s363
      %p365 = scmp.eq.s32.totalorder %s37, 0
      %p366 = por %p364, %p365
      %s367 = ssub.s32 %s31, %s38
      %p368 = scmp.eq.s32.totalorder %s367, 0
      %s370 = sadd.s32 %s369, 1
      %s371 = scalar_select %p368, %s369, %s370
      %p374 = pneg %p368
      %p375 = scmp.eq.s32.totalorder %s31, 1
      %p376 = por %p374, %p375
      %p377 = scmp.ne.s32.totalorder %s369, %s372
      %p378 = scmp.eq.s32.totalorder %s31, 0
      %p379 = por %p377, %p378
      %p380 = scmp.ne.s32.totalorder %s369, %s372
      %p381 = scmp.eq.s32.totalorder %s36, 1
      %p382 = por %p380, %p381
      %p383 = scmp.ne.s32.totalorder %s372, %s373
      %p384 = scmp.eq.s32.totalorder %s36, 0
      %p385 = por %p383, %p384
      %p386 = scmp.ne.s32.totalorder %s372, %s373
      %p387 = scmp.eq.s32.totalorder %s37, 1
      %p388 = por %p386, %p387
      %p390 = scmp.ne.s32.totalorder %s373, %s389
      %p391 = scmp.eq.s32.totalorder %s37, 0
      %p392 = por %p390, %p391
      %s393 = ssub.s32 %s31, %s38
      %p394 = scmp.eq.s32.totalorder %s393, 0
      %s396 = sadd.s32 %s395, 1
      %s397 = scalar_select %p394, %s395, %s396
      %p400 = pneg %p394
      %p401 = scmp.eq.s32.totalorder %s31, 1
      %p402 = por %p400, %p401
      %p403 = scmp.ne.s32.totalorder %s395, %s398
      %p404 = scmp.eq.s32.totalorder %s31, 0
      %p405 = por %p403, %p404
      %p406 = scmp.ne.s32.totalorder %s395, %s398
      %p407 = scmp.eq.s32.totalorder %s36, 1
      %p408 = por %p406, %p407
      %p409 = scmp.ne.s32.totalorder %s398, %s399
      %p410 = scmp.eq.s32.totalorder %s36, 0
      %p411 = por %p409, %p410
      %p412 = scmp.ne.s32.totalorder %s398, %s399
      %p413 = scmp.eq.s32.totalorder %s37, 1
      %p414 = por %p412, %p413
      %p416 = scmp.ne.s32.totalorder %s399, %s415
      %p417 = scmp.eq.s32.totalorder %s37, 0
      %p418 = por %p416, %p417
      %s419 = ssub.s32 %s31, %s38
      %p420 = scmp.eq.s32.totalorder %s419, 0
      %s422 = sadd.s32 %s421, 1
      %s423 = scalar_select %p420, %s421, %s422
      %p426 = pneg %p420
      %p427 = scmp.eq.s32.totalorder %s31, 1
      %p428 = por %p426, %p427
      %p429 = scmp.ne.s32.totalorder %s421, %s424
      %p430 = scmp.eq.s32.totalorder %s31, 0
      %p431 = por %p429, %p430
      %p432 = scmp.ne.s32.totalorder %s421, %s424
      %p433 = scmp.eq.s32.totalorder %s36, 1
      %p434 = por %p432, %p433
      %p435 = scmp.ne.s32.totalorder %s424, %s425
      %p436 = scmp.eq.s32.totalorder %s36, 0
      %p437 = por %p435, %p436
      %p438 = scmp.ne.s32.totalorder %s424, %s425
      %p439 = scmp.eq.s32.totalorder %s37, 1
      %p440 = por %p438, %p439
      %p442 = scmp.ne.s32.totalorder %s425, %s441
      %p443 = scmp.eq.s32.totalorder %s37, 0
      %p444 = por %p442, %p443
      %s446 = sadd.s32 %s445, 1
      %p449 = scmp.eq.s32.totalorder %s31, 1
      %p450 = scmp.ne.s32.totalorder %s445, %s447
      %p451 = scmp.eq.s32.totalorder %s31, 0
      %p452 = por %p450, %p451
      %p453 = scmp.ne.s32.totalorder %s445, %s447
      %p454 = scmp.eq.s32.totalorder %s36, 1
      %p455 = por %p453, %p454
      %p456 = scmp.ne.s32.totalorder %s447, %s448
      %p457 = scmp.eq.s32.totalorder %s36, 0
      %p458 = por %p456, %p457
      %p459 = scmp.ne.s32.totalorder %s447, %s448
      %p460 = scmp.eq.s32.totalorder %s37, 1
      %p461 = por %p459, %p460
      %p463 = scmp.ne.s32.totalorder %s448, %s462
      %p464 = scmp.eq.s32.totalorder %s37, 0
      %p465 = por %p463, %p464
      %s467 = sadd.s32 %s466, 1
      %p470 = scmp.eq.s32.totalorder %s31, 1
      %p471 = scmp.ne.s32.totalorder %s466, %s468
      %p472 = scmp.eq.s32.totalorder %s31, 0
      %p473 = por %p471, %p472
      %p474 = scmp.ne.s32.totalorder %s466, %s468
      %p475 = scmp.eq.s32.totalorder %s36, 1
      %p476 = por %p474, %p475
      %p477 = scmp.ne.s32.totalorder %s468, %s469
      %p478 = scmp.eq.s32.totalorder %s36, 0
      %p479 = por %p477, %p478
      %p480 = scmp.ne.s32.totalorder %s468, %s469
      %p481 = scmp.eq.s32.totalorder %s37, 1
      %p482 = por %p480, %p481
      %p484 = scmp.ne.s32.totalorder %s469, %s483
      %p485 = scmp.eq.s32.totalorder %s37, 0
      %p486 = por %p484, %p485
      %s488 = sadd.s32 %s487, 1
      %p491 = scmp.eq.s32.totalorder %s31, 1
      %p492 = scmp.ne.s32.totalorder %s487, %s489
      %p493 = scmp.eq.s32.totalorder %s31, 0
      %p494 = por %p492, %p493
      %p495 = scmp.ne.s32.totalorder %s487, %s489
      %p496 = scmp.eq.s32.totalorder %s36, 1
      %p497 = por %p495, %p496
      %p498 = scmp.ne.s32.totalorder %s489, %s490
      %p499 = scmp.eq.s32.totalorder %s36, 0
      %p500 = por %p498, %p499
      %p501 = scmp.ne.s32.totalorder %s489, %s490
      %p502 = scmp.eq.s32.totalorder %s37, 1
      %p503 = por %p501, %p502
      %p505 = scmp.ne.s32.totalorder %s490, %s504
      %p506 = scmp.eq.s32.totalorder %s37, 0
      %p507 = por %p505, %p506
      %s509 = sadd.s32 %s508, 1
      %p512 = scmp.eq.s32.totalorder %s31, 1
      %p513 = scmp.ne.s32.totalorder %s508, %s510
      %p514 = scmp.eq.s32.totalorder %s31, 0
      %p515 = por %p513, %p514
      %p516 = scmp.ne.s32.totalorder %s508, %s510
      %p517 = scmp.eq.s32.totalorder %s36, 1
      %p518 = por %p516, %p517
      %p519 = scmp.ne.s32.totalorder %s510, %s511
      %p520 = scmp.eq.s32.totalorder %s36, 0
      %p521 = por %p519, %p520
      %p522 = scmp.ne.s32.totalorder %s510, %s511
      %p523 = scmp.eq.s32.totalorder %s37, 1
      %p524 = por %p522, %p523
      %p526 = scmp.ne.s32.totalorder %s511, %s525
      %p527 = scmp.eq.s32.totalorder %s37, 0
      %p528 = por %p526, %p527
      %s530 = sadd.s32 %s529, 1
      %p533 = scmp.eq.s32.totalorder %s31, 1
      %p534 = scmp.ne.s32.totalorder %s529, %s531
      %p535 = scmp.eq.s32.totalorder %s31, 0
      %p536 = por %p534, %p535
      %p537 = scmp.ne.s32.totalorder %s529, %s531
      %p538 = scmp.eq.s32.totalorder %s36, 1
      %p539 = por %p537, %p538
      %p540 = scmp.ne.s32.totalorder %s531, %s532
      %p541 = scmp.eq.s32.totalorder %s36, 0
      %p542 = por %p540, %p541
      %p543 = scmp.ne.s32.totalorder %s531, %s532
      %p544 = scmp.eq.s32.totalorder %s37, 1
      %p545 = por %p543, %p544
      %p547 = scmp.ne.s32.totalorder %s532, %s546
      %p548 = scmp.eq.s32.totalorder %s37, 0
      %p549 = por %p547, %p548
      %p550 = scmp.le.s32.totalorder 1, %s31
      %p551 = scmp.lt.s32.totalorder %s31, 3
      %p552 = pnand %p550, %p551
      %p553 = pneg %p552
      // Predicated region
      $region9: #{tpu_custom_call.1} parent=5 // pred_check
        _
      $region10: #{tpu_custom_call.1} parent=5 // pred_check_branch
        %555 = sbr.rel (%p552) target = $region12
      $region11: #{tpu_custom_call.1} parent=5 // pred_region
        %s556 = ssub.s32 %s31, 1
        // Predicated region
        $region13: #{tpu_custom_call.1} parent=11 // pred_check
          %p557 = pneg %p52
        $region14: #{tpu_custom_call.1} parent=11 // pred_check_branch
          %559 = sbr.rel (%p557) target = $region16
        $region15: #{tpu_custom_call.1} parent=11 // pred_region
          %s561 = ssub.s32 256, 256
          %562 = vsyncadd [#allocation4], %s561
          %s563 = sshll.u32 [#allocation3], 4
          %s564 = int_to_ptr.vmem [resolvable:$true] %s563
          %569 = dma.hbm_to_vmem [thread:$0]  %s0, 256, %s564, [#allocation4], 128, 128, 8
        $region16: #{tpu_custom_call.1} parent=11 // pred_fallthru
          _
        // Predicated region
        $region17: #{tpu_custom_call.1} parent=11 // pred_check
          %p570 = pneg %p73
        $region18: #{tpu_custom_call.1} parent=11 // pred_check_branch
          %572 = sbr.rel (%p570) target = $region20
        $region19: #{tpu_custom_call.1} parent=11 // pred_region
          %s574 = ssub.s32 256, 256
          %575 = vsyncadd [#allocation7], %s574
          %s576 = sshll.u32 [#allocation6], 4
          %s577 = int_to_ptr.vmem [resolvable:$true] %s576
          %582 = dma.hbm_to_vmem [thread:$0]  %s1, 256, %s577, [#allocation7], 128, 128, 8
        $region20: #{tpu_custom_call.1} parent=11 // pred_fallthru
          _
        // Predicated region
        $region21: #{tpu_custom_call.1} parent=11 // pred_check
          %p583 = pneg %p458
        $region22: #{tpu_custom_call.1} parent=11 // pred_check_branch
          %585 = sbr.rel (%p583) target = $region24
        $region23: #{tpu_custom_call.1} parent=11 // pred_region
          %s587 = ssub.s32 16, 16
          %588 = vsyncadd [#allocation7], %s587
          %s590 = sshll.u32 [#allocation22], 4
          %s591 = int_to_ptr.vmem [resolvable:$true] %s590
          %593 = dma.hbm_to_vmem [thread:$0]  %s16, 16, %s591, [#allocation7]
        $region24: #{tpu_custom_call.1} parent=11 // pred_fallthru
          _
        // Predicated region
        $region25: #{tpu_custom_call.1} parent=11 // pred_check
          %p594 = pneg %p479
        $region26: #{tpu_custom_call.1} parent=11 // pred_check_branch
          %596 = sbr.rel (%p594) target = $region28
        $region27: #{tpu_custom_call.1} parent=11 // pred_region
          %s598 = ssub.s32 16, 16
          %599 = vsyncadd [#allocation24], %s598
          %s601 = sshll.u32 [#allocation23], 4
          %s602 = int_to_ptr.vmem [resolvable:$true] %s601
          %604 = dma.hbm_to_vmem [thread:$0]  %s17, 16, %s602, [#allocation24]
        $region28: #{tpu_custom_call.1} parent=11 // pred_fallthru
          _
        // Predicated region
        $region29: #{tpu_custom_call.1} parent=11 // pred_check
          %p605 = pneg %p500
        $region30: #{tpu_custom_call.1} parent=11 // pred_check_branch
          %607 = sbr.rel (%p605) target = $region32
        $region31: #{tpu_custom_call.1} parent=11 // pred_region
          %s609 = ssub.s32 256, 256
          %610 = vsyncadd [#allocation24], %s609
          %s611 = sshll.u32 [#allocation25], 4
          %s612 = int_to_ptr.vmem [resolvable:$true] %s611
          %617 = dma.hbm_to_vmem [thread:$0]  %s18, 256, %s612, [#allocation24], 64, 64, 4
        $region32: #{tpu_custom_call.1} parent=11 // pred_fallthru
          _
        // Predicated region
        $region33: #{tpu_custom_call.1} parent=11 // pred_check
          %p618 = pneg %p521
        $region34: #{tpu_custom_call.1} parent=11 // pred_check_branch
          %620 = sbr.rel (%p618) target = $region36
        $region35: #{tpu_custom_call.1} parent=11 // pred_region
          %s622 = ssub.s32 16, 16
          %623 = vsyncadd [#allocation27], %s622
          %s625 = sshll.u32 [#allocation26], 4
          %s626 = int_to_ptr.vmem [resolvable:$true] %s625
          %628 = dma.hbm_to_vmem [thread:$0]  %s19, 16, %s626, [#allocation27]
        $region36: #{tpu_custom_call.1} parent=11 // pred_fallthru
          _
      $region12: #{tpu_custom_call.1} parent=5 // pred_fallthru
        _
      %p629 = scmp.lt.s32.totalorder %s31, 2
      // Predicated region
      $region37: #{tpu_custom_call.1} parent=5 // pred_check
        %p630 = pneg %p629
      $region38: #{tpu_custom_call.1} parent=5 // pred_check_branch
        %632 = sbr.rel (%p630) target = $region40
      $region39: #{tpu_custom_call.1} parent=5 // pred_region
        // Predicated region
        $region41: #{tpu_custom_call.1} parent=39 // pred_check
          %p633 = pneg %p93
        $region42: #{tpu_custom_call.1} parent=39 // pred_check_branch
          %635 = sbr.rel (%p633) target = $region44
        $region43: #{tpu_custom_call.1} parent=39 // pred_region
          %s636 = sand.u32 %s31, 1
          %s637 = scalar_lea.sflag [#allocation4], %s636
          %s638 = sand.u32 %s83, 1
          %s639 = smul.addr %s638, 3
          %s640 = scalar_lea.vmem [#allocation8], %s639
          %s642 = ssub.s32 48, 48
          %643 = vsyncadd %s637, %s642
          %s644 = smul.addr %s31, 3
          %s645 = smul.addr %s644, 16
          %s646 = scalar_lea.hbm %s2, %s645
          %s647 = sshll.u32 %s640, 4
          %s648 = int_to_ptr.vmem [resolvable:$true] %s647
          %653 = dma.hbm_to_vmem [thread:$0]  %s646, 48, %s648, %s637, 16, 16, 1
        $region44: #{tpu_custom_call.1} parent=39 // pred_fallthru
          _
        // Predicated region
        $region45: #{tpu_custom_call.1} parent=39 // pred_check
          %p654 = pneg %p119
        $region46: #{tpu_custom_call.1} parent=39 // pred_check_branch
          %656 = sbr.rel (%p654) target = $region48
        $region47: #{tpu_custom_call.1} parent=39 // pred_region
          %s657 = sand.u32 %s31, 1
          %s658 = scalar_lea.sflag [#allocation4], %s657
          %s659 = sand.u32 %s109, 1
          %s660 = smul.addr %s659, 3
          %s661 = scalar_lea.vmem [#allocation9], %s660
          %s663 = ssub.s32 48, 48
          %664 = vsyncadd %s658, %s663
          %s665 = smul.addr %s31, 3
          %s666 = smul.addr %s665, 16
          %s667 = scalar_lea.hbm %s3, %s666
          %s668 = sshll.u32 %s661, 4
          %s669 = int_to_ptr.vmem [resolvable:$true] %s668
          %674 = dma.hbm_to_vmem [thread:$0]  %s667, 48, %s669, %s658, 16, 16, 1
        $region48: #{tpu_custom_call.1} parent=39 // pred_fallthru
          _
        // Predicated region
        $region49: #{tpu_custom_call.1} parent=39 // pred_check
          %p675 = pneg %p145
        $region50: #{tpu_custom_call.1} parent=39 // pred_check_branch
          %677 = sbr.rel (%p675) target = $region52
        $region51: #{tpu_custom_call.1} parent=39 // pred_region
          %s678 = sand.u32 %s31, 1
          %s679 = scalar_lea.sflag [#allocation4], %s678
          %s680 = sand.u32 %s135, 1
          %s681 = smul.addr %s680, 48
          %s682 = scalar_lea.vmem [#allocation10], %s681
          %s684 = ssub.s32 768, 768
          %685 = vsyncadd %s679, %s684
          %s686 = smul.addr %s31, 12
          %s687 = smul.addr %s686, 64
          %s688 = scalar_lea.hbm %s4, %s687
          %s689 = sshll.u32 %s682, 4
          %s690 = int_to_ptr.vmem [resolvable:$true] %s689
          %695 = dma.hbm_to_vmem [thread:$0]  %s688, 768, %s690, %s679, 64, 64, 4
        $region52: #{tpu_custom_call.1} parent=39 // pred_fallthru
          _
        // Predicated region
        $region53: #{tpu_custom_call.1} parent=39 // pred_check
          %p696 = pneg %p171
        $region54: #{tpu_custom_call.1} parent=39 // pred_check_branch
          %698 = sbr.rel (%p696) target = $region56
        $region55: #{tpu_custom_call.1} parent=39 // pred_region
          %s699 = sand.u32 %s31, 1
          %s700 = scalar_lea.sflag [#allocation4], %s699
          %s701 = sand.u32 %s161, 1
          %s702 = smul.addr %s701, 3
          %s703 = scalar_lea.vmem [#allocation11], %s702
          %s705 = ssub.s32 48, 48
          %706 = vsyncadd %s700, %s705
          %s707 = smul.addr %s31, 3
          %s708 = smul.addr %s707, 16
          %s709 = scalar_lea.hbm %s5, %s708
          %s710 = sshll.u32 %s703, 4
          %s711 = int_to_ptr.vmem [resolvable:$true] %s710
          %716 = dma.hbm_to_vmem [thread:$0]  %s709, 48, %s711, %s700, 16, 16, 1
        $region56: #{tpu_custom_call.1} parent=39 // pred_fallthru
          _
        // Predicated region
        $region57: #{tpu_custom_call.1} parent=39 // pred_check
          %p717 = pneg %p197
        $region58: #{tpu_custom_call.1} parent=39 // pred_check_branch
          %719 = sbr.rel (%p717) target = $region60
        $region59: #{tpu_custom_call.1} parent=39 // pred_region
          %s720 = sand.u32 %s31, 1
          %s721 = scalar_lea.sflag [#allocation4], %s720
          %s722 = sand.u32 %s187, 1
          %s723 = smul.addr %s722, 16
          %s724 = scalar_lea.vmem [#allocation12], %s723
          %s726 = ssub.s32 256, 256
          %727 = vsyncadd %s721, %s726
          %s728 = smul.addr %s31, 4
          %s729 = smul.addr %s728, 64
          %s730 = scalar_lea.hbm %s6, %s729
          %s731 = sshll.u32 %s724, 4
          %s732 = int_to_ptr.vmem [resolvable:$true] %s731
          %737 = dma.hbm_to_vmem [thread:$0]  %s730, 256, %s732, %s721, 64, 64, 4
        $region60: #{tpu_custom_call.1} parent=39 // pred_fallthru
          _
        // Predicated region
        $region61: #{tpu_custom_call.1} parent=39 // pred_check
          %p738 = pneg %p223
        $region62: #{tpu_custom_call.1} parent=39 // pred_check_branch
          %740 = sbr.rel (%p738) target = $region64
        $region63: #{tpu_custom_call.1} parent=39 // pred_region
          %s741 = sand.u32 %s31, 1
          %s742 = scalar_lea.sflag [#allocation4], %s741
          %s743 = sand.u32 %s213, 1
          %s744 = scalar_lea.vmem [#allocation13], %s743
          %s746 = ssub.s32 16, 16
          %747 = vsyncadd %s742, %s746
          %s748 = smul.addr %s31, 16
          %s749 = scalar_lea.hbm %s7, %s748
          %s751 = sshll.u32 %s744, 4
          %s752 = int_to_ptr.vmem [resolvable:$true] %s751
          %754 = dma.hbm_to_vmem [thread:$0]  %s749, 16, %s752, %s742
        $region64: #{tpu_custom_call.1} parent=39 // pred_fallthru
          _
        // Predicated region
        $region65: #{tpu_custom_call.1} parent=39 // pred_check
          %p755 = pneg %p249
        $region66: #{tpu_custom_call.1} parent=39 // pred_check_branch
          %757 = sbr.rel (%p755) target = $region68
        $region67: #{tpu_custom_call.1} parent=39 // pred_region
          %s758 = sand.u32 %s31, 1
          %s759 = scalar_lea.sflag [#allocation4], %s758
          %s760 = sand.u32 %s239, 1
          %s761 = smul.addr %s760, 48
          %s762 = scalar_lea.vmem [#allocation14], %s761
          %s764 = ssub.s32 768, 768
          %765 = vsyncadd %s759, %s764
          %s766 = smul.addr %s31, 12
          %s767 = smul.addr %s766, 64
          %s768 = scalar_lea.hbm %s8, %s767
          %s769 = sshll.u32 %s762, 4
          %s770 = int_to_ptr.vmem [resolvable:$true] %s769
          %775 = dma.hbm_to_vmem [thread:$0]  %s768, 768, %s770, %s759, 64, 64, 4
        $region68: #{tpu_custom_call.1} parent=39 // pred_fallthru
          _
        // Predicated region
        $region69: #{tpu_custom_call.1} parent=39 // pred_check
          %p776 = pneg %p275
        $region70: #{tpu_custom_call.1} parent=39 // pred_check_branch
          %778 = sbr.rel (%p776) target = $region72
        $region71: #{tpu_custom_call.1} parent=39 // pred_region
          %s779 = sand.u32 %s31, 1
          %s780 = scalar_lea.sflag [#allocation4], %s779
          %s781 = sand.u32 %s265, 1
          %s782 = smul.addr %s781, 3
          %s783 = scalar_lea.vmem [#allocation15], %s782
          %s785 = ssub.s32 48, 48
          %786 = vsyncadd %s780, %s785
          %s787 = smul.addr %s31, 3
          %s788 = smul.addr %s787, 16
          %s789 = scalar_lea.hbm %s9, %s788
          %s790 = sshll.u32 %s783, 4
          %s791 = int_to_ptr.vmem [resolvable:$true] %s790
          %796 = dma.hbm_to_vmem [thread:$0]  %s789, 48, %s791, %s780, 16, 16, 1
        $region72: #{tpu_custom_call.1} parent=39 // pred_fallthru
          _
        // Predicated region
        $region73: #{tpu_custom_call.1} parent=39 // pred_check
          %p797 = pneg %p301
        $region74: #{tpu_custom_call.1} parent=39 // pred_check_branch
          %799 = sbr.rel (%p797) target = $region76
        $region75: #{tpu_custom_call.1} parent=39 // pred_region
          %s800 = sand.u32 %s31, 1
          %s801 = scalar_lea.sflag [#allocation4], %s800
          %s802 = sand.u32 %s291, 1
          %s803 = smul.addr %s802, 16
          %s804 = scalar_lea.vmem [#allocation16], %s803
          %s806 = ssub.s32 256, 256
          %807 = vsyncadd %s801, %s806
          %s808 = smul.addr %s31, 4
          %s809 = smul.addr %s808, 64
          %s810 = scalar_lea.hbm %s10, %s809
          %s811 = sshll.u32 %s804, 4
          %s812 = int_to_ptr.vmem [resolvable:$true] %s811
          %817 = dma.hbm_to_vmem [thread:$0]  %s810, 256, %s812, %s801, 64, 64, 4
        $region76: #{tpu_custom_call.1} parent=39 // pred_fallthru
          _
        // Predicated region
        $region77: #{tpu_custom_call.1} parent=39 // pred_check
          %p818 = pneg %p327
        $region78: #{tpu_custom_call.1} parent=39 // pred_check_branch
          %820 = sbr.rel (%p818) target = $region80
        $region79: #{tpu_custom_call.1} parent=39 // pred_region
          %s821 = sand.u32 %s31, 1
          %s822 = scalar_lea.sflag [#allocation4], %s821
          %s823 = sand.u32 %s317, 1
          %s824 = scalar_lea.vmem [#allocation17], %s823
          %s826 = ssub.s32 16, 16
          %827 = vsyncadd %s822, %s826
          %s828 = smul.addr %s31, 16
          %s829 = scalar_lea.hbm %s11, %s828
          %s831 = sshll.u32 %s824, 4
          %s832 = int_to_ptr.vmem [resolvable:$true] %s831
          %834 = dma.hbm_to_vmem [thread:$0]  %s829, 16, %s832, %s822
        $region80: #{tpu_custom_call.1} parent=39 // pred_fallthru
          _
        // Predicated region
        $region81: #{tpu_custom_call.1} parent=39 // pred_check
          %p835 = pneg %p353
        $region82: #{tpu_custom_call.1} parent=39 // pred_check_branch
          %837 = sbr.rel (%p835) target = $region84
        $region83: #{tpu_custom_call.1} parent=39 // pred_region
          %s838 = sand.u32 %s31, 1
          %s839 = scalar_lea.sflag [#allocation4], %s838
          %s840 = sand.u32 %s343, 1
          %s841 = smul.addr %s840, 16
          %s842 = scalar_lea.vmem [#allocation18], %s841
          %s844 = ssub.s32 256, 256
          %845 = vsyncadd %s839, %s844
          %s846 = smul.addr %s31, 4
          %s847 = smul.addr %s846, 64
          %s848 = scalar_lea.hbm %s12, %s847
          %s849 = sshll.u32 %s842, 4
          %s850 = int_to_ptr.vmem [resolvable:$true] %s849
          %855 = dma.hbm_to_vmem [thread:$0]  %s848, 256, %s850, %s839, 64, 64, 4
        $region84: #{tpu_custom_call.1} parent=39 // pred_fallthru
          _
        // Predicated region
        $region85: #{tpu_custom_call.1} parent=39 // pred_check
          %p856 = pneg %p379
        $region86: #{tpu_custom_call.1} parent=39 // pred_check_branch
          %858 = sbr.rel (%p856) target = $region88
        $region87: #{tpu_custom_call.1} parent=39 // pred_region
          %s859 = sand.u32 %s31, 1
          %s860 = scalar_lea.sflag [#allocation4], %s859
          %s861 = sand.u32 %s369, 1
          %s862 = scalar_lea.vmem [#allocation19], %s861
          %s864 = ssub.s32 16, 16
          %865 = vsyncadd %s860, %s864
          %s866 = smul.addr %s31, 16
          %s867 = scalar_lea.hbm %s13, %s866
          %s869 = sshll.u32 %s862, 4
          %s870 = int_to_ptr.vmem [resolvable:$true] %s869
          %872 = dma.hbm_to_vmem [thread:$0]  %s867, 16, %s870, %s860
        $region88: #{tpu_custom_call.1} parent=39 // pred_fallthru
          _
        // Predicated region
        $region89: #{tpu_custom_call.1} parent=39 // pred_check
          %p873 = pneg %p405
        $region90: #{tpu_custom_call.1} parent=39 // pred_check_branch
          %875 = sbr.rel (%p873) target = $region92
        $region91: #{tpu_custom_call.1} parent=39 // pred_region
          %s876 = sand.u32 %s31, 1
          %s877 = scalar_lea.sflag [#allocation4], %s876
          %s878 = sand.u32 %s395, 1
          %s879 = smul.addr %s878, 32
          %s880 = scalar_lea.vmem [#allocation20], %s879
          %s882 = ssub.s32 512, 512
          %883 = vsyncadd %s877, %s882
          %s884 = smul.addr %s31, 8
          %s885 = smul.addr %s884, 64
          %s886 = scalar_lea.hbm %s14, %s885
          %s887 = sshll.u32 %s880, 4
          %s888 = int_to_ptr.vmem [resolvable:$true] %s887
          %893 = dma.hbm_to_vmem [thread:$0]  %s886, 512, %s888, %s877, 64, 64, 4
        $region92: #{tpu_custom_call.1} parent=39 // pred_fallthru
          _
        // Predicated region
        $region93: #{tpu_custom_call.1} parent=39 // pred_check
          %p894 = pneg %p431
        $region94: #{tpu_custom_call.1} parent=39 // pred_check_branch
          %896 = sbr.rel (%p894) target = $region96
        $region95: #{tpu_custom_call.1} parent=39 // pred_region
          %s897 = sand.u32 %s31, 1
          %s898 = scalar_lea.sflag [#allocation4], %s897
          %s899 = sand.u32 %s421, 1
          %s900 = scalar_lea.vmem [#allocation21], %s899
          %s902 = ssub.s32 16, 16
          %903 = vsyncadd %s898, %s902
          %s904 = smul.addr %s31, 16
          %s905 = scalar_lea.hbm %s15, %s904
          %s907 = sshll.u32 %s900, 4
          %s908 = int_to_ptr.vmem [resolvable:$true] %s907
          %910 = dma.hbm_to_vmem [thread:$0]  %s905, 16, %s908, %s898
        $region96: #{tpu_custom_call.1} parent=39 // pred_fallthru
          _
      $region40: #{tpu_custom_call.1} parent=5 // pred_fallthru
        _
      %p911 = scmp.le.s32.totalorder 1, %s31
      %p912 = scmp.lt.s32.totalorder %s31, 3
      %p913 = pnand %p911, %p912
      %p914 = pneg %p913
      // Predicated region
      $region97: #{tpu_custom_call.1} parent=5 // pred_check
        _
      $region98: #{tpu_custom_call.1} parent=5 // pred_check_branch
        %916 = sbr.rel (%p913) target = $region100
      $region99: #{tpu_custom_call.1} parent=5 // pred_region
        %s917 = ssub.s32 %s31, 1
        // Predicated region
        $region101: #{tpu_custom_call.1} parent=99 // pred_check
          %p918 = pneg %p52
        $region102: #{tpu_custom_call.1} parent=99 // pred_check_branch
          %920 = sbr.rel (%p918) target = $region104
        $region103: #{tpu_custom_call.1} parent=99 // pred_region
          %921 = dma.done [#allocation4], 256
        $region104: #{tpu_custom_call.1} parent=99 // pred_fallthru
          _
        // Predicated region
        $region105: #{tpu_custom_call.1} parent=99 // pred_check
          %p922 = pneg %p73
        $region106: #{tpu_custom_call.1} parent=99 // pred_check_branch
          %924 = sbr.rel (%p922) target = $region108
        $region107: #{tpu_custom_call.1} parent=99 // pred_region
          %925 = dma.done [#allocation7], 256
        $region108: #{tpu_custom_call.1} parent=99 // pred_fallthru
          _
        %s926 = sand.u32 %s36, 1
        %s927 = scalar_lea.sflag [#allocation4], %s926
        %s928 = sand.u32 %s86, 1
        %s929 = smul.addr %s928, 3
        %s930 = scalar_lea.vmem [#allocation8], %s929
        // Predicated region
        $region109: #{tpu_custom_call.1} parent=99 // pred_check
          %p931 = pneg %p99
        $region110: #{tpu_custom_call.1} parent=99 // pred_check_branch
          %933 = sbr.rel (%p931) target = $region112
        $region111: #{tpu_custom_call.1} parent=99 // pred_region
          %934 = dma.done %s927, 48
        $region112: #{tpu_custom_call.1} parent=99 // pred_fallthru
          _
        %s935 = sand.u32 %s36, 1
        %s936 = scalar_lea.sflag [#allocation4], %s935
        %s937 = sand.u32 %s112, 1
        %s938 = smul.addr %s937, 3
        %s939 = scalar_lea.vmem [#allocation9], %s938
        // Predicated region
        $region113: #{tpu_custom_call.1} parent=99 // pred_check
          %p940 = pneg %p125
        $region114: #{tpu_custom_call.1} parent=99 // pred_check_branch
          %942 = sbr.rel (%p940) target = $region116
        $region115: #{tpu_custom_call.1} parent=99 // pred_region
          %943 = dma.done %s936, 48
        $region116: #{tpu_custom_call.1} parent=99 // pred_fallthru
          _
        %s944 = sand.u32 %s36, 1
        %s945 = scalar_lea.sflag [#allocation4], %s944
        %s946 = sand.u32 %s138, 1
        %s947 = smul.addr %s946, 48
        %s948 = scalar_lea.vmem [#allocation10], %s947
        // Predicated region
        $region117: #{tpu_custom_call.1} parent=99 // pred_check
          %p949 = pneg %p151
        $region118: #{tpu_custom_call.1} parent=99 // pred_check_branch
          %951 = sbr.rel (%p949) target = $region120
        $region119: #{tpu_custom_call.1} parent=99 // pred_region
          %952 = dma.done %s945, 768
        $region120: #{tpu_custom_call.1} parent=99 // pred_fallthru
          _
        %s953 = sand.u32 %s36, 1
        %s954 = scalar_lea.sflag [#allocation4], %s953
        %s955 = sand.u32 %s164, 1
        %s956 = smul.addr %s955, 3
        %s957 = scalar_lea.vmem [#allocation11], %s956
        // Predicated region
        $region121: #{tpu_custom_call.1} parent=99 // pred_check
          %p958 = pneg %p177
        $region122: #{tpu_custom_call.1} parent=99 // pred_check_branch
          %960 = sbr.rel (%p958) target = $region124
        $region123: #{tpu_custom_call.1} parent=99 // pred_region
          %961 = dma.done %s954, 48
        $region124: #{tpu_custom_call.1} parent=99 // pred_fallthru
          _
        %s962 = sand.u32 %s36, 1
        %s963 = scalar_lea.sflag [#allocation4], %s962
        %s964 = sand.u32 %s190, 1
        %s965 = smul.addr %s964, 16
        %s966 = scalar_lea.vmem [#allocation12], %s965
        // Predicated region
        $region125: #{tpu_custom_call.1} parent=99 // pred_check
          %p967 = pneg %p203
        $region126: #{tpu_custom_call.1} parent=99 // pred_check_branch
          %969 = sbr.rel (%p967) target = $region128
        $region127: #{tpu_custom_call.1} parent=99 // pred_region
          %970 = dma.done %s963, 256
        $region128: #{tpu_custom_call.1} parent=99 // pred_fallthru
          _
        %s971 = sand.u32 %s36, 1
        %s972 = scalar_lea.sflag [#allocation4], %s971
        %s973 = sand.u32 %s216, 1
        %s974 = scalar_lea.vmem [#allocation13], %s973
        // Predicated region
        $region129: #{tpu_custom_call.1} parent=99 // pred_check
          %p975 = pneg %p229
        $region130: #{tpu_custom_call.1} parent=99 // pred_check_branch
          %977 = sbr.rel (%p975) target = $region132
        $region131: #{tpu_custom_call.1} parent=99 // pred_region
          %978 = dma.done %s972, 16
        $region132: #{tpu_custom_call.1} parent=99 // pred_fallthru
          _
        %s979 = sand.u32 %s36, 1
        %s980 = scalar_lea.sflag [#allocation4], %s979
        %s981 = sand.u32 %s242, 1
        %s982 = smul.addr %s981, 48
        %s983 = scalar_lea.vmem [#allocation14], %s982
        // Predicated region
        $region133: #{tpu_custom_call.1} parent=99 // pred_check
          %p984 = pneg %p255
        $region134: #{tpu_custom_call.1} parent=99 // pred_check_branch
          %986 = sbr.rel (%p984) target = $region136
        $region135: #{tpu_custom_call.1} parent=99 // pred_region
          %987 = dma.done %s980, 768
        $region136: #{tpu_custom_call.1} parent=99 // pred_fallthru
          _
        %s988 = sand.u32 %s36, 1
        %s989 = scalar_lea.sflag [#allocation4], %s988
        %s990 = sand.u32 %s268, 1
        %s991 = smul.addr %s990, 3
        %s992 = scalar_lea.vmem [#allocation15], %s991
        // Predicated region
        $region137: #{tpu_custom_call.1} parent=99 // pred_check
          %p993 = pneg %p281
        $region138: #{tpu_custom_call.1} parent=99 // pred_check_branch
          %995 = sbr.rel (%p993) target = $region140
        $region139: #{tpu_custom_call.1} parent=99 // pred_region
          %996 = dma.done %s989, 48
        $region140: #{tpu_custom_call.1} parent=99 // pred_fallthru
          _
        %s997 = sand.u32 %s36, 1
        %s998 = scalar_lea.sflag [#allocation4], %s997
        %s999 = sand.u32 %s294, 1
        %s1000 = smul.addr %s999, 16
        %s1001 = scalar_lea.vmem [#allocation16], %s1000
        // Predicated region
        $region141: #{tpu_custom_call.1} parent=99 // pred_check
          %p1002 = pneg %p307
        $region142: #{tpu_custom_call.1} parent=99 // pred_check_branch
          %1004 = sbr.rel (%p1002) target = $region144
        $region143: #{tpu_custom_call.1} parent=99 // pred_region
          %1005 = dma.done %s998, 256
        $region144: #{tpu_custom_call.1} parent=99 // pred_fallthru
          _
        %s1006 = sand.u32 %s36, 1
        %s1007 = scalar_lea.sflag [#allocation4], %s1006
        %s1008 = sand.u32 %s320, 1
        %s1009 = scalar_lea.vmem [#allocation17], %s1008
        // Predicated region
        $region145: #{tpu_custom_call.1} parent=99 // pred_check
          %p1010 = pneg %p333
        $region146: #{tpu_custom_call.1} parent=99 // pred_check_branch
          %1012 = sbr.rel (%p1010) target = $region148
        $region147: #{tpu_custom_call.1} parent=99 // pred_region
          %1013 = dma.done %s1007, 16
        $region148: #{tpu_custom_call.1} parent=99 // pred_fallthru
          _
        %s1014 = sand.u32 %s36, 1
        %s1015 = scalar_lea.sflag [#allocation4], %s1014
        %s1016 = sand.u32 %s346, 1
        %s1017 = smul.addr %s1016, 16
        %s1018 = scalar_lea.vmem [#allocation18], %s1017
        // Predicated region
        $region149: #{tpu_custom_call.1} parent=99 // pred_check
          %p1019 = pneg %p359
        $region150: #{tpu_custom_call.1} parent=99 // pred_check_branch
          %1021 = sbr.rel (%p1019) target = $region152
        $region151: #{tpu_custom_call.1} parent=99 // pred_region
          %1022 = dma.done %s1015, 256
        $region152: #{tpu_custom_call.1} parent=99 // pred_fallthru
          _
        %s1023 = sand.u32 %s36, 1
        %s1024 = scalar_lea.sflag [#allocation4], %s1023
        %s1025 = sand.u32 %s372, 1
        %s1026 = scalar_lea.vmem [#allocation19], %s1025
        // Predicated region
        $region153: #{tpu_custom_call.1} parent=99 // pred_check
          %p1027 = pneg %p385
        $region154: #{tpu_custom_call.1} parent=99 // pred_check_branch
          %1029 = sbr.rel (%p1027) target = $region156
        $region155: #{tpu_custom_call.1} parent=99 // pred_region
          %1030 = dma.done %s1024, 16
        $region156: #{tpu_custom_call.1} parent=99 // pred_fallthru
          _
        %s1031 = sand.u32 %s36, 1
        %s1032 = scalar_lea.sflag [#allocation4], %s1031
        %s1033 = sand.u32 %s398, 1
        %s1034 = smul.addr %s1033, 32
        %s1035 = scalar_lea.vmem [#allocation20], %s1034
        // Predicated region
        $region157: #{tpu_custom_call.1} parent=99 // pred_check
          %p1036 = pneg %p411
        $region158: #{tpu_custom_call.1} parent=99 // pred_check_branch
          %1038 = sbr.rel (%p1036) target = $region160
        $region159: #{tpu_custom_call.1} parent=99 // pred_region
          %1039 = dma.done %s1032, 512
        $region160: #{tpu_custom_call.1} parent=99 // pred_fallthru
          _
        %s1040 = sand.u32 %s36, 1
        %s1041 = scalar_lea.sflag [#allocation4], %s1040
        %s1042 = sand.u32 %s424, 1
        %s1043 = scalar_lea.vmem [#allocation21], %s1042
        // Predicated region
        $region161: #{tpu_custom_call.1} parent=99 // pred_check
          %p1044 = pneg %p437
        $region162: #{tpu_custom_call.1} parent=99 // pred_check_branch
          %1046 = sbr.rel (%p1044) target = $region164
        $region163: #{tpu_custom_call.1} parent=99 // pred_region
          %1047 = dma.done %s1041, 16
        $region164: #{tpu_custom_call.1} parent=99 // pred_fallthru
          _
        // Predicated region
        $region165: #{tpu_custom_call.1} parent=99 // pred_check
          %p1048 = pneg %p458
        $region166: #{tpu_custom_call.1} parent=99 // pred_check_branch
          %1050 = sbr.rel (%p1048) target = $region168
        $region167: #{tpu_custom_call.1} parent=99 // pred_region
          %1051 = dma.done [#allocation7], 16
        $region168: #{tpu_custom_call.1} parent=99 // pred_fallthru
          _
        // Predicated region
        $region169: #{tpu_custom_call.1} parent=99 // pred_check
          %p1052 = pneg %p479
        $region170: #{tpu_custom_call.1} parent=99 // pred_check_branch
          %1054 = sbr.rel (%p1052) target = $region172
        $region171: #{tpu_custom_call.1} parent=99 // pred_region
          %1055 = dma.done [#allocation24], 16
        $region172: #{tpu_custom_call.1} parent=99 // pred_fallthru
          _
        // Predicated region
        $region173: #{tpu_custom_call.1} parent=99 // pred_check
          %p1056 = pneg %p500
        $region174: #{tpu_custom_call.1} parent=99 // pred_check_branch
          %1058 = sbr.rel (%p1056) target = $region176
        $region175: #{tpu_custom_call.1} parent=99 // pred_region
          %1059 = dma.done [#allocation24], 256
        $region176: #{tpu_custom_call.1} parent=99 // pred_fallthru
          _
        // Predicated region
        $region177: #{tpu_custom_call.1} parent=99 // pred_check
          %p1060 = pneg %p521
        $region178: #{tpu_custom_call.1} parent=99 // pred_check_branch
          %1062 = sbr.rel (%p1060) target = $region180
        $region179: #{tpu_custom_call.1} parent=99 // pred_region
          %1063 = dma.done [#allocation27], 16
        $region180: #{tpu_custom_call.1} parent=99 // pred_fallthru
          _
        %p1064 = pneg %p52
        %p1065 = pneg %p49
        %p1066 = pneg %p73
        %p1067 = pneg %p70
        %s1068 = sand.u32 %s36, 1
        %s1069 = scalar_lea.sflag [#allocation4], %s1068
        %s1070 = sand.u32 %s86, 1
        %s1071 = smul.addr %s1070, 3
        %s1072 = scalar_lea.vmem [#allocation8], %s1071
        %p1073 = pneg %p99
        %p1074 = pneg %p96
        %s1075 = sand.u32 %s36, 1
        %s1076 = scalar_lea.sflag [#allocation4], %s1075
        %s1077 = sand.u32 %s112, 1
        %s1078 = smul.addr %s1077, 3
        %s1079 = scalar_lea.vmem [#allocation9], %s1078
        %p1080 = pneg %p125
        %p1081 = pneg %p122
        %s1082 = sand.u32 %s36, 1
        %s1083 = scalar_lea.sflag [#allocation4], %s1082
        %s1084 = sand.u32 %s138, 1
        %s1085 = smul.addr %s1084, 48
        %s1086 = scalar_lea.vmem [#allocation10], %s1085
        %p1087 = pneg %p151
        %p1088 = pneg %p148
        %s1089 = sand.u32 %s36, 1
        %s1090 = scalar_lea.sflag [#allocation4], %s1089
        %s1091 = sand.u32 %s164, 1
        %s1092 = smul.addr %s1091, 3
        %s1093 = scalar_lea.vmem [#allocation11], %s1092
        %p1094 = pneg %p177
        %p1095 = pneg %p174
        %s1096 = sand.u32 %s36, 1
        %s1097 = scalar_lea.sflag [#allocation4], %s1096
        %s1098 = sand.u32 %s190, 1
        %s1099 = smul.addr %s1098, 16
        %s1100 = scalar_lea.vmem [#allocation12], %s1099
        %p1101 = pneg %p203
        %p1102 = pneg %p200
        %s1103 = sand.u32 %s36, 1
        %s1104 = scalar_lea.sflag [#allocation4], %s1103
        %s1105 = sand.u32 %s216, 1
        %s1106 = scalar_lea.vmem [#allocation13], %s1105
        %p1107 = pneg %p229
        %p1108 = pneg %p226
        %s1109 = sand.u32 %s36, 1
        %s1110 = scalar_lea.sflag [#allocation4], %s1109
        %s1111 = sand.u32 %s242, 1
        %s1112 = smul.addr %s1111, 48
        %s1113 = scalar_lea.vmem [#allocation14], %s1112
        %p1114 = pneg %p255
        %p1115 = pneg %p252
        %s1116 = sand.u32 %s36, 1
        %s1117 = scalar_lea.sflag [#allocation4], %s1116
        %s1118 = sand.u32 %s268, 1
        %s1119 = smul.addr %s1118, 3
        %s1120 = scalar_lea.vmem [#allocation15], %s1119
        %p1121 = pneg %p281
        %p1122 = pneg %p278
        %s1123 = sand.u32 %s36, 1
        %s1124 = scalar_lea.sflag [#allocation4], %s1123
        %s1125 = sand.u32 %s294, 1
        %s1126 = smul.addr %s1125, 16
        %s1127 = scalar_lea.vmem [#allocation16], %s1126
        %p1128 = pneg %p307
        %p1129 = pneg %p304
        %s1130 = sand.u32 %s36, 1
        %s1131 = scalar_lea.sflag [#allocation4], %s1130
        %s1132 = sand.u32 %s320, 1
        %s1133 = scalar_lea.vmem [#allocation17], %s1132
        %p1134 = pneg %p333
        %p1135 = pneg %p330
        %s1136 = sand.u32 %s36, 1
        %s1137 = scalar_lea.sflag [#allocation4], %s1136
        %s1138 = sand.u32 %s346, 1
        %s1139 = smul.addr %s1138, 16
        %s1140 = scalar_lea.vmem [#allocation18], %s1139
        %p1141 = pneg %p359
        %p1142 = pneg %p356
        %s1143 = sand.u32 %s36, 1
        %s1144 = scalar_lea.sflag [#allocation4], %s1143
        %s1145 = sand.u32 %s372, 1
        %s1146 = scalar_lea.vmem [#allocation19], %s1145
        %p1147 = pneg %p385
        %p1148 = pneg %p382
        %s1149 = sand.u32 %s36, 1
        %s1150 = scalar_lea.sflag [#allocation4], %s1149
        %s1151 = sand.u32 %s398, 1
        %s1152 = smul.addr %s1151, 32
        %s1153 = scalar_lea.vmem [#allocation20], %s1152
        %p1154 = pneg %p411
        %p1155 = pneg %p408
        %s1156 = sand.u32 %s36, 1
        %s1157 = scalar_lea.sflag [#allocation4], %s1156
        %s1158 = sand.u32 %s424, 1
        %s1159 = scalar_lea.vmem [#allocation21], %s1158
        %p1160 = pneg %p437
        %p1161 = pneg %p434
        %p1162 = pneg %p458
        %p1163 = pneg %p455
        %p1164 = pneg %p479
        %p1165 = pneg %p476
        %p1166 = pneg %p500
        %p1167 = pneg %p497
        %p1168 = pneg %p521
        %p1169 = pneg %p518
        %p1170 = pneg %p542
        %p1171 = pneg %p539
        %p1173 = scmp.eq.s32.totalorder %s36, 0
        // Predicated region
        $region181: #{tpu_custom_call.1} parent=99 // pred_check
          %p1174 = pneg %p1173
        $region182: #{tpu_custom_call.1} parent=99 // pred_check_branch
          %1176 = sbr.rel (%p1174) target = $region184
        $region183: #{tpu_custom_call.1} parent=99 // pred_region
          %v1177 = vld [vmem:[#allocation3] sm:$0xff]
          %v1178 = vld [vmem:[#allocation3 + $0x8] sm:$0xff]
          %vm1179 = vcmask 261120
          %1180 = vst.msk [vmem:[#allocation2] sm:$0xff] %vm1179, %v1177
          %1181 = vst.msk [vmem:[#allocation2 + $0x8] sm:$0xff] %vm1179, %v1178
        $region184: #{tpu_custom_call.1} parent=99 // pred_fallthru
          _
        %v1182 = vld [vmem:[#allocation2] sm:$0xff]
        %v1183 = vld [vmem:[#allocation2 + $0x8] sm:$0xff]
        %v1184 = vld [vmem:[#allocation6] sm:$0xff]
        %v1185 = vld [vmem:[#allocation6 + $0x8] sm:$0xff]
        %v1186 = vld [vmem:[%s930] sm:$0x1]
        %v1187 = vld [vmem:[%s930 + $0x1] sm:$0x1]
        %v1188 = vld [vmem:[%s930 + $0x2] sm:$0x1]
        %v1189 = vld [vmem:[%s939] sm:$0x1]
        %v1190 = vld [vmem:[%s939 + $0x1] sm:$0x1]
        %v1191 = vld [vmem:[%s939 + $0x2] sm:$0x1]
        %vm1192 = vcmask 261120
        %v1193 = vsel %vm1192, %v1182, 0.0
        %1194 = vadd.xlane.f32.xlu0 %v1193
        %v1195 = vpop.xlane.xlu0 %1194
        %v1196 = vsel %vm1192, %v1183, 0.0
        %1197 = vadd.xlane.f32.xlu0 %v1196
        %v1198 = vpop.xlane.xlu0 %1197
        %v1199 = vrcp.pop 32.0
        %v1200 = vmul.f32 %v1195, %v1199
        %v1201 = vmul.f32 %v1198, %v1199
        %v1202 = vsub.f32 %v1182, %v1200
        %v1203 = vsub.f32 %v1183, %v1201
        %v1204 = vmul.f32 %v1202, %v1202
        %v1205 = vmul.f32 %v1203, %v1203
        %v1206 = vsel %vm1192, %v1204, 0.0
        %1207 = vadd.xlane.f32.xlu0 %v1206
        %v1208 = vpop.xlane.xlu0 %1207
        %v1209 = vsel %vm1192, %v1205, 0.0
        %1210 = vadd.xlane.f32.xlu0 %v1209
        %v1211 = vpop.xlane.xlu0 %1210
        %v1212 = vmul.f32 %v1208, %v1199
        %v1213 = vmul.f32 %v1211, %v1199
        %v1214 = vadd.f32 %v1212, 1e-05
        %v1215 = vadd.f32 %v1213, 1e-05
        %v1216 = vrsqrt.pop %v1214
        %v1217 = vrsqrt.pop %v1215
        %v1218 = vmul.f32 %v1202, %v1216
        %v1219 = vmul.f32 %v1203, %v1217
        %v1221 = vlaneseq
        %v1222 = vshrl.u32 %v1221, 7
        %v1223 = vsub.s32 0, %v1222
        %v1224 = vrot.slane %v1186, %v1223
        %v1226 = vmul.f32 %v1218, %v1224
        %v1227 = vmul.f32 %v1219, %v1224
        %v1229 = vlaneseq
        %v1230 = vshrl.u32 %v1229, 7
        %v1231 = vsub.s32 0, %v1230
        %v1232 = vrot.slane %v1189, %v1231
        %v1234 = vadd.f32 %v1226, %v1232
        %v1235 = vadd.f32 %v1227, %v1232
        %v1236 = vld [vmem:[%s948] sm:$0xf]
        %v1237 = vld [vmem:[%s948 + $0x4] sm:$0xf]
        %v1238 = vld [vmem:[%s948 + $0x8] sm:$0xf]
        %v1239 = vld [vmem:[%s948 + $0xc] sm:$0xf]
        %v1240 = vld [vmem:[%s948 + $0x10] sm:$0xf]
        %v1241 = vld [vmem:[%s948 + $0x14] sm:$0xf]
        %v1242 = vld [vmem:[%s948 + $0x18] sm:$0xf]
        %v1243 = vld [vmem:[%s948 + $0x1c] sm:$0xf]
        %v1244 = vld [vmem:[%s948 + $0x20] sm:$0xf]
        %v1245 = vld [vmem:[%s948 + $0x24] sm:$0xf]
        %v1246 = vld [vmem:[%s948 + $0x28] sm:$0xf]
        %v1247 = vld [vmem:[%s948 + $0x2c] sm:$0xf]
        %v1248 = vld [vmem:[%s957] sm:$0x1]
        %v1249 = vld [vmem:[%s957 + $0x1] sm:$0x1]
        %v1250 = vld [vmem:[%s957 + $0x2] sm:$0x1]
        %v1251 = vld [vmem:[%s966] sm:$0xf]
        %v1252 = vld [vmem:[%s966 + $0x4] sm:$0xf]
        %v1253 = vld [vmem:[%s966 + $0x8] sm:$0xf]
        %v1254 = vld [vmem:[%s966 + $0xc] sm:$0xf]
        %v1255 = vld [vmem:[%s974] sm:$0x1]
        %v1256 = vpack.c.bf16 %v1235, %v1234
        %v1258 = vlaneseq
        %v1259 = vshrl.u32 %v1258, 7
        %v1260 = vsub.s32 0, %v1259
        %v1261 = vrot.slane %v1248, %v1260
        %v1267 = vunpack.c.l.b16 %v1236
        %v1268 = vunpack.c.l.b16 %v1237
        %v1269 = vunpack.c.l.b16 %v1238
        %v1270 = vunpack.c.l.b16 %v1239
        %v1271 = vpack.c.b16 %v1268, %v1267
        %v1272 = vpack.c.b16 %v1270, %v1269
        %v1276 = vsel %vm1192, %v1256, 0
        %1278 = vmatprep.subr.bf16.mxu0 0
        %1279 = vmatpush1.bf16.msra.mxu0 %v1271
        %1280 = vmatprep.subr.bf16.mxu0 0
        %1281 = vmatpush1.bf16.msra.mxu0 %v1272
        %1282 = vmatprep.subr.bf16.mxu0 0
        %1283 = vmatpush1.bf16.msra.mxu0 0
        %1284 = vmatprep.subr.bf16.mxu0 0
        %1285 = vmatpush1.bf16.msra.mxu0 0
        %1286 = vmatprep.subr.bf16.mxu0 0
        %1287 = vmatpush1.bf16.msra.mxu0 0
        %1288 = vmatprep.subr.bf16.mxu0 0
        %1289 = vmatpush1.bf16.msra.mxu0 0
        %1290 = vmatprep.subr.bf16.mxu0 0
        %1291 = vmatpush1.bf16.msra.mxu0 0
        %1292 = vmatprep.subr.bf16.mxu0 0
        %1293 = vmatpush1.bf16.msra.mxu0 0
        %1294 = vmatprep.subr.bf16.mxu0 0
        %1295 = vmatpush1.bf16.msra.mxu0 0
        %1296 = vmatprep.subr.bf16.mxu0 0
        %1297 = vmatpush1.bf16.msra.mxu0 0
        %1298 = vmatprep.subr.bf16.mxu0 0
        %1299 = vmatpush1.bf16.msra.mxu0 0
        %1300 = vmatprep.subr.bf16.mxu0 0
        %1301 = vmatpush1.bf16.msra.mxu0 0
        %1302 = vmatprep.subr.bf16.mxu0 0
        %1303 = vmatpush1.bf16.msra.mxu0 0
        %1304 = vmatprep.subr.bf16.mxu0 0
        %1305 = vmatpush1.bf16.msra.mxu0 0
        %1306 = vmatprep.subr.bf16.mxu0 0
        %1307 = vmatpush1.bf16.msra.mxu0 0
        %1308 = vmatprep.subr.bf16.mxu0 0
        %1309 = vmatpush1.bf16.msra.mxu0 0
        %1310 = vmatprep.mubr.bf16.mxu0 0
        %1311 = vmatmul.mubr.bf16.gmra.mrb[0].mxu0 %v1276
        %v1312 = vpop.f32.mrb[0].mxu0
        %v1313 = vadd.f32 %v1261, %v1312
        %v1314 = vpop.f32.mrb[0].mxu0
        %v1315 = vpop.f32.mrb[0].mxu0
        %v1316 = vadd.f32 %v1261, %v1315
        %v1317 = vpop.f32.mrb[0].mxu0
        %1318 = vdwg.mxu0
        %v1320 = vlaneseq
        %v1321 = vshrl.u32 %v1320, 7
        %v1322 = vsub.s32 0, %v1321
        %v1323 = vrot.slane %v1249, %v1322
        %v1329 = vunpack.c.l.b16 %v1240
        %v1330 = vunpack.c.l.b16 %v1241
        %v1331 = vunpack.c.l.b16 %v1242
        %v1332 = vunpack.c.l.b16 %v1243
        %v1333 = vpack.c.b16 %v1330, %v1329
        %v1334 = vpack.c.b16 %v1332, %v1331
        %1337 = vmatprep.subr.bf16.mxu0 0
        %1338 = vmatpush1.bf16.msra.mxu0 %v1333
        %1339 = vmatprep.subr.bf16.mxu0 0
        %1340 = vmatpush1.bf16.msra.mxu0 %v1334
        %1341 = vmatprep.subr.bf16.mxu0 0
        %1342 = vmatpush1.bf16.msra.mxu0 0
        %1343 = vmatprep.subr.bf16.mxu0 0
        %1344 = vmatpush1.bf16.msra.mxu0 0
        %1345 = vmatprep.subr.bf16.mxu0 0
        %1346 = vmatpush1.bf16.msra.mxu0 0
        %1347 = vmatprep.subr.bf16.mxu0 0
        %1348 = vmatpush1.bf16.msra.mxu0 0
        %1349 = vmatprep.subr.bf16.mxu0 0
        %1350 = vmatpush1.bf16.msra.mxu0 0
        %1351 = vmatprep.subr.bf16.mxu0 0
        %1352 = vmatpush1.bf16.msra.mxu0 0
        %1353 = vmatprep.subr.bf16.mxu0 0
        %1354 = vmatpush1.bf16.msra.mxu0 0
        %1355 = vmatprep.subr.bf16.mxu0 0
        %1356 = vmatpush1.bf16.msra.mxu0 0
        %1357 = vmatprep.subr.bf16.mxu0 0
        %1358 = vmatpush1.bf16.msra.mxu0 0
        %1359 = vmatprep.subr.bf16.mxu0 0
        %1360 = vmatpush1.bf16.msra.mxu0 0
        %1361 = vmatprep.subr.bf16.mxu0 0
        %1362 = vmatpush1.bf16.msra.mxu0 0
        %1363 = vmatprep.subr.bf16.mxu0 0
        %1364 = vmatpush1.bf16.msra.mxu0 0
        %1365 = vmatprep.subr.bf16.mxu0 0
        %1366 = vmatpush1.bf16.msra.mxu0 0
        %1367 = vmatprep.subr.bf16.mxu0 0
        %1368 = vmatpush1.bf16.msra.mxu0 0
        %1369 = vmatprep.mubr.bf16.mxu0 0
        %1370 = vmatmul.mubr.bf16.gmra.mrb[0].mxu0 %v1276
        %v1371 = vpop.f32.mrb[0].mxu0
        %v1372 = vadd.f32 %v1323, %v1371
        %v1373 = vpop.f32.mrb[0].mxu0
        %v1374 = vpop.f32.mrb[0].mxu0
        %v1375 = vadd.f32 %v1323, %v1374
        %v1376 = vpop.f32.mrb[0].mxu0
        %1377 = vdwg.mxu0
        %v1379 = vlaneseq
        %v1380 = vshrl.u32 %v1379, 7
        %v1381 = vsub.s32 0, %v1380
        %v1382 = vrot.slane %v1250, %v1381
        %v1388 = vunpack.c.l.b16 %v1244
        %v1389 = vunpack.c.l.b16 %v1245
        %v1390 = vunpack.c.l.b16 %v1246
        %v1391 = vunpack.c.l.b16 %v1247
        %v1392 = vpack.c.b16 %v1389, %v1388
        %v1393 = vpack.c.b16 %v1391, %v1390
        %1396 = vmatprep.subr.bf16.mxu0 0
        %1397 = vmatpush1.bf16.msra.mxu0 %v1392
        %1398 = vmatprep.subr.bf16.mxu0 0
        %1399 = vmatpush1.bf16.msra.mxu0 %v1393
        %1400 = vmatprep.subr.bf16.mxu0 0
        %1401 = vmatpush1.bf16.msra.mxu0 0
        %1402 = vmatprep.subr.bf16.mxu0 0
        %1403 = vmatpush1.bf16.msra.mxu0 0
        %1404 = vmatprep.subr.bf16.mxu0 0
        %1405 = vmatpush1.bf16.msra.mxu0 0
        %1406 = vmatprep.subr.bf16.mxu0 0
        %1407 = vmatpush1.bf16.msra.mxu0 0
        %1408 = vmatprep.subr.bf16.mxu0 0
        %1409 = vmatpush1.bf16.msra.mxu0 0
        %1410 = vmatprep.subr.bf16.mxu0 0
        %1411 = vmatpush1.bf16.msra.mxu0 0
        %1412 = vmatprep.subr.bf16.mxu0 0
        %1413 = vmatpush1.bf16.msra.mxu0 0
        %1414 = vmatprep.subr.bf16.mxu0 0
        %1415 = vmatpush1.bf16.msra.mxu0 0
        %1416 = vmatprep.subr.bf16.mxu0 0
        %1417 = vmatpush1.bf16.msra.mxu0 0
        %1418 = vmatprep.subr.bf16.mxu0 0
        %1419 = vmatpush1.bf16.msra.mxu0 0
        %1420 = vmatprep.subr.bf16.mxu0 0
        %1421 = vmatpush1.bf16.msra.mxu0 0
        %1422 = vmatprep.subr.bf16.mxu0 0
        %1423 = vmatpush1.bf16.msra.mxu0 0
        %1424 = vmatprep.subr.bf16.mxu0 0
        %1425 = vmatpush1.bf16.msra.mxu0 0
        %1426 = vmatprep.subr.bf16.mxu0 0
        %1427 = vmatpush1.bf16.msra.mxu0 0
        %1428 = vmatprep.mubr.bf16.mxu0 0
        %1429 = vmatmul.mubr.bf16.gmra.mrb[0].mxu0 %v1276
        %v1430 = vpop.f32.mrb[0].mxu0
        %v1431 = vadd.f32 %v1382, %v1430
        %v1432 = vpop.f32.mrb[0].mxu0
        %v1433 = vpop.f32.mrb[0].mxu0
        %v1434 = vadd.f32 %v1382, %v1433
        %v1435 = vpop.f32.mrb[0].mxu0
        %1436 = vdwg.mxu0
        %v1437 = vpack.c.bf16 %v1313, %v1313
        %v1438 = vpack.c.bf16 %v1316, %v1316
        %v1439 = vpack.c.bf16 %v1372, %v1372
        %v1440 = vpack.c.bf16 %v1375, %v1375
        %vm1441 = vcmask 64512
        %v1443 = vsel %vm1441, %v1437, 0
        %v1446 = vsel %vm1441, %v1439, 0
        %1448 = vmatprep.subr.bf16.mxu0 0
        %1449 = vmatpush1.bf16.xpose.msra.mxu0 %v1446
        %1450 = vmatprep.subr.bf16.mxu0 0
        %1451 = vmatpush1.bf16.xpose.msra.mxu0 0
        %1452 = vmatprep.subr.bf16.mxu0 0
        %1453 = vmatpush1.bf16.xpose.msra.mxu0 0
        %1454 = vmatprep.subr.bf16.mxu0 0
        %1455 = vmatpush1.bf16.xpose.msra.mxu0 0
        %1456 = vmatprep.subr.bf16.mxu0 0
        %1457 = vmatpush1.bf16.xpose.msra.mxu0 0
        %1458 = vmatprep.subr.bf16.mxu0 0
        %1459 = vmatpush1.bf16.xpose.msra.mxu0 0
        %1460 = vmatprep.subr.bf16.mxu0 0
        %1461 = vmatpush1.bf16.xpose.msra.mxu0 0
        %1462 = vmatprep.subr.bf16.mxu0 0
        %1463 = vmatpush1.bf16.xpose.msra.mxu0 0
        %1464 = vmatprep.subr.bf16.mxu0 0
        %1465 = vmatpush1.bf16.xpose.msra.mxu0 0
        %1466 = vmatprep.subr.bf16.mxu0 0
        %1467 = vmatpush1.bf16.xpose.msra.mxu0 0
        %1468 = vmatprep.subr.bf16.mxu0 0
        %1469 = vmatpush1.bf16.xpose.msra.mxu0 0
        %1470 = vmatprep.subr.bf16.mxu0 0
        %1471 = vmatpush1.bf16.xpose.msra.mxu0 0
        %1472 = vmatprep.subr.bf16.mxu0 0
        %1473 = vmatpush1.bf16.xpose.msra.mxu0 0
        %1474 = vmatprep.subr.bf16.mxu0 0
        %1475 = vmatpush1.bf16.xpose.msra.mxu0 0
        %1476 = vmatprep.subr.bf16.mxu0 0
        %1477 = vmatpush1.bf16.xpose.msra.mxu0 0
        %1478 = vmatprep.subr.bf16.mxu0 0
        %1479 = vmatpush1.bf16.xpose.msra.mxu0 0
        %1480 = vmatprep.mubr.bf16.mxu0 0
        %1481 = vmatmul.mubr.bf16.gmra.mrb[0].mxu0 %v1443
        %v1482 = vpop.f32.mrb[0].mxu0
        %v1483 = vadd.f32 0.0, %v1482
        %v1484 = vpop.f32.mrb[0].mxu0
        %v1485 = vpop.f32.mrb[0].mxu0
        %v1486 = vpop.f32.mrb[0].mxu0
        %1487 = vdwg.mxu0
        %v1489 = vsel %vm1441, %v1438, 0
        %v1492 = vsel %vm1441, %v1440, 0
        %1494 = vmatprep.subr.bf16.mxu0 0
        %1495 = vmatpush1.bf16.xpose.msra.mxu0 %v1492
        %1496 = vmatprep.subr.bf16.mxu0 0
        %1497 = vmatpush1.bf16.xpose.msra.mxu0 0
        %1498 = vmatprep.subr.bf16.mxu0 0
        %1499 = vmatpush1.bf16.xpose.msra.mxu0 0
        %1500 = vmatprep.subr.bf16.mxu0 0
        %1501 = vmatpush1.bf16.xpose.msra.mxu0 0
        %1502 = vmatprep.subr.bf16.mxu0 0
        %1503 = vmatpush1.bf16.xpose.msra.mxu0 0
        %1504 = vmatprep.subr.bf16.mxu0 0
        %1505 = vmatpush1.bf16.xpose.msra.mxu0 0
        %1506 = vmatprep.subr.bf16.mxu0 0
        %1507 = vmatpush1.bf16.xpose.msra.mxu0 0
        %1508 = vmatprep.subr.bf16.mxu0 0
        %1509 = vmatpush1.bf16.xpose.msra.mxu0 0
        %1510 = vmatprep.subr.bf16.mxu0 0
        %1511 = vmatpush1.bf16.xpose.msra.mxu0 0
        %1512 = vmatprep.subr.bf16.mxu0 0
        %1513 = vmatpush1.bf16.xpose.msra.mxu0 0
        %1514 = vmatprep.subr.bf16.mxu0 0
        %1515 = vmatpush1.bf16.xpose.msra.mxu0 0
        %1516 = vmatprep.subr.bf16.mxu0 0
        %1517 = vmatpush1.bf16.xpose.msra.mxu0 0
        %1518 = vmatprep.subr.bf16.mxu0 0
        %1519 = vmatpush1.bf16.xpose.msra.mxu0 0
        %1520 = vmatprep.subr.bf16.mxu0 0
        %1521 = vmatpush1.bf16.xpose.msra.mxu0 0
        %1522 = vmatprep.subr.bf16.mxu0 0
        %1523 = vmatpush1.bf16.xpose.msra.mxu0 0
        %1524 = vmatprep.subr.bf16.mxu0 0
        %1525 = vmatpush1.bf16.xpose.msra.mxu0 0
        %1526 = vmatprep.mubr.bf16.mxu0 0
        %1527 = vmatmul.mubr.bf16.gmra.mrb[0].mxu0 %v1489
        %v1528 = vpop.f32.mrb[0].mxu0
        %v1529 = vadd.f32 0.0, %v1528
        %v1530 = vpop.f32.mrb[0].mxu0
        %v1531 = vpop.f32.mrb[0].mxu0
        %v1532 = vpop.f32.mrb[0].mxu0
        %1533 = vdwg.mxu0
        %v1534 = vmul.f32 %v1483, 0.35355338
        %v1535 = vmul.f32 %v1529, 0.35355338
        %v1536 = vsel %vm1441, %v1534, -inf
        %1537 = vmax.xlane.f32.xlu0 %v1536
        %v1538 = vpop.xlane.xlu0 %1537
        %v1539 = vsel %vm1441, %v1535, -inf
        %1540 = vmax.xlane.f32.xlu0 %v1539
        %v1541 = vpop.xlane.xlu0 %1540
        %v1542 = vsub.f32 %v1534, %v1538
        %v1543 = vsub.f32 %v1535, %v1541
        %v1544 = vmul.f32 %v1542, 1.442695
        %v1545 = vpow.pop %v1544
        %v1546 = vmul.f32 %v1543, 1.442695
        %v1547 = vpow.pop %v1546
        %v1548 = vsel %vm1441, %v1545, 0.0
        %1549 = vadd.xlane.f32.xlu0 %v1548
        %v1550 = vpop.xlane.xlu0 %1549
        %v1551 = vsel %vm1441, %v1547, 0.0
        %1552 = vadd.xlane.f32.xlu0 %v1551
        %v1553 = vpop.xlane.xlu0 %1552
        %v1554 = vrcp.pop %v1550
        %v1555 = vrcp.pop %v1553
        %v1556 = vmul.f32 %v1545, %v1554
        %v1557 = vmul.f32 %v1547, %v1555
        %v1558 = vpack.c.bf16 %v1556, %v1556
        %v1559 = vpack.c.bf16 %v1557, %v1557
        %v1560 = vpack.c.bf16 %v1431, %v1431
        %v1561 = vpack.c.bf16 %v1434, %v1434
        %v1563 = vsel %vm1441, %v1558, 0
        %vm1565 = vcmask 1043456
        %v1567 = vsel %vm1565, %v1560, 0
        %1569 = vmatprep.subr.bf16.mxu0 0
        %1570 = vmatpush1.bf16.msra.mxu0 %v1567
        %1571 = vmatprep.subr.bf16.mxu0 0
        %1572 = vmatpush1.bf16.msra.mxu0 0
        %1573 = vmatprep.subr.bf16.mxu0 0
        %1574 = vmatpush1.bf16.msra.mxu0 0
        %1575 = vmatprep.subr.bf16.mxu0 0
        %1576 = vmatpush1.bf16.msra.mxu0 0
        %1577 = vmatprep.subr.bf16.mxu0 0
        %1578 = vmatpush1.bf16.msra.mxu0 0
        %1579 = vmatprep.subr.bf16.mxu0 0
        %1580 = vmatpush1.bf16.msra.mxu0 0
        %1581 = vmatprep.subr.bf16.mxu0 0
        %1582 = vmatpush1.bf16.msra.mxu0 0
        %1583 = vmatprep.subr.bf16.mxu0 0
        %1584 = vmatpush1.bf16.msra.mxu0 0
        %1585 = vmatprep.subr.bf16.mxu0 0
        %1586 = vmatpush1.bf16.msra.mxu0 0
        %1587 = vmatprep.subr.bf16.mxu0 0
        %1588 = vmatpush1.bf16.msra.mxu0 0
        %1589 = vmatprep.subr.bf16.mxu0 0
        %1590 = vmatpush1.bf16.msra.mxu0 0
        %1591 = vmatprep.subr.bf16.mxu0 0
        %1592 = vmatpush1.bf16.msra.mxu0 0
        %1593 = vmatprep.subr.bf16.mxu0 0
        %1594 = vmatpush1.bf16.msra.mxu0 0
        %1595 = vmatprep.subr.bf16.mxu0 0
        %1596 = vmatpush1.bf16.msra.mxu0 0
        %1597 = vmatprep.subr.bf16.mxu0 0
        %1598 = vmatpush1.bf16.msra.mxu0 0
        %1599 = vmatprep.subr.bf16.mxu0 0
        %1600 = vmatpush1.bf16.msra.mxu0 0
        %1601 = vmatprep.mubr.bf16.mxu0 0
        %1602 = vmatmul.mubr.bf16.gmra.mrb[0].mxu0 %v1563
        %v1603 = vpop.f32.mrb[0].mxu0
        %v1604 = vadd.f32 0.0, %v1603
        %v1605 = vpop.f32.mrb[0].mxu0
        %v1606 = vpop.f32.mrb[0].mxu0
        %v1607 = vpop.f32.mrb[0].mxu0
        %1608 = vdwg.mxu0
        %v1610 = vsel %vm1441, %v1559, 0
        %v1613 = vsel %vm1565, %v1561, 0
        %1615 = vmatprep.subr.bf16.mxu0 0
        %1616 = vmatpush1.bf16.msra.mxu0 %v1613
        %1617 = vmatprep.subr.bf16.mxu0 0
        %1618 = vmatpush1.bf16.msra.mxu0 0
        %1619 = vmatprep.subr.bf16.mxu0 0
        %1620 = vmatpush1.bf16.msra.mxu0 0
        %1621 = vmatprep.subr.bf16.mxu0 0
        %1622 = vmatpush1.bf16.msra.mxu0 0
        %1623 = vmatprep.subr.bf16.mxu0 0
        %1624 = vmatpush1.bf16.msra.mxu0 0
        %1625 = vmatprep.subr.bf16.mxu0 0
        %1626 = vmatpush1.bf16.msra.mxu0 0
        %1627 = vmatprep.subr.bf16.mxu0 0
        %1628 = vmatpush1.bf16.msra.mxu0 0
        %1629 = vmatprep.subr.bf16.mxu0 0
        %1630 = vmatpush1.bf16.msra.mxu0 0
        %1631 = vmatprep.subr.bf16.mxu0 0
        %1632 = vmatpush1.bf16.msra.mxu0 0
        %1633 = vmatprep.subr.bf16.mxu0 0
        %1634 = vmatpush1.bf16.msra.mxu0 0
        %1635 = vmatprep.subr.bf16.mxu0 0
        %1636 = vmatpush1.bf16.msra.mxu0 0
        %1637 = vmatprep.subr.bf16.mxu0 0
        %1638 = vmatpush1.bf16.msra.mxu0 0
        %1639 = vmatprep.subr.bf16.mxu0 0
        %1640 = vmatpush1.bf16.msra.mxu0 0
        %1641 = vmatprep.subr.bf16.mxu0 0
        %1642 = vmatpush1.bf16.msra.mxu0 0
        %1643 = vmatprep.subr.bf16.mxu0 0
        %1644 = vmatpush1.bf16.msra.mxu0 0
        %1645 = vmatprep.subr.bf16.mxu0 0
        %1646 = vmatpush1.bf16.msra.mxu0 0
        %1647 = vmatprep.mubr.bf16.mxu0 0
        %1648 = vmatmul.mubr.bf16.gmra.mrb[0].mxu0 %v1610
        %v1649 = vpop.f32.mrb[0].mxu0
        %v1650 = vadd.f32 0.0, %v1649
        %v1651 = vpop.f32.mrb[0].mxu0
        %v1652 = vpop.f32.mrb[0].mxu0
        %v1653 = vpop.f32.mrb[0].mxu0
        %1654 = vdwg.mxu0
        %1656 = vrot.lane.b32.xlu0 %v1437, 120
        %v1657 = vpop.permute.xlu0 %1656
        %1659 = vrot.lane.b32.xlu0 %v1439, 120
        %v1660 = vpop.permute.xlu0 %1659
        %v1662 = vsel %vm1441, %v1657, 0
        %v1665 = vsel %vm1441, %v1660, 0
        %1667 = vmatprep.subr.bf16.mxu0 0
        %1668 = vmatpush1.bf16.xpose.msra.mxu0 %v1665
        %1669 = vmatprep.subr.bf16.mxu0 0
        %1670 = vmatpush1.bf16.xpose.msra.mxu0 0
        %1671 = vmatprep.subr.bf16.mxu0 0
        %1672 = vmatpush1.bf16.xpose.msra.mxu0 0
        %1673 = vmatprep.subr.bf16.mxu0 0
        %1674 = vmatpush1.bf16.xpose.msra.mxu0 0
        %1675 = vmatprep.subr.bf16.mxu0 0
        %1676 = vmatpush1.bf16.xpose.msra.mxu0 0
        %1677 = vmatprep.subr.bf16.mxu0 0
        %1678 = vmatpush1.bf16.xpose.msra.mxu0 0
        %1679 = vmatprep.subr.bf16.mxu0 0
        %1680 = vmatpush1.bf16.xpose.msra.mxu0 0
        %1681 = vmatprep.subr.bf16.mxu0 0
        %1682 = vmatpush1.bf16.xpose.msra.mxu0 0
        %1683 = vmatprep.subr.bf16.mxu0 0
        %1684 = vmatpush1.bf16.xpose.msra.mxu0 0
        %1685 = vmatprep.subr.bf16.mxu0 0
        %1686 = vmatpush1.bf16.xpose.msra.mxu0 0
        %1687 = vmatprep.subr.bf16.mxu0 0
        %1688 = vmatpush1.bf16.xpose.msra.mxu0 0
        %1689 = vmatprep.subr.bf16.mxu0 0
        %1690 = vmatpush1.bf16.xpose.msra.mxu0 0
        %1691 = vmatprep.subr.bf16.mxu0 0
        %1692 = vmatpush1.bf16.xpose.msra.mxu0 0
        %1693 = vmatprep.subr.bf16.mxu0 0
        %1694 = vmatpush1.bf16.xpose.msra.mxu0 0
        %1695 = vmatprep.subr.bf16.mxu0 0
        %1696 = vmatpush1.bf16.xpose.msra.mxu0 0
        %1697 = vmatprep.subr.bf16.mxu0 0
        %1698 = vmatpush1.bf16.xpose.msra.mxu0 0
        %1699 = vmatprep.mubr.bf16.mxu0 0
        %1700 = vmatmul.mubr.bf16.gmra.mrb[0].mxu0 %v1662
        %v1701 = vpop.f32.mrb[0].mxu0
        %v1702 = vadd.f32 0.0, %v1701
        %v1703 = vpop.f32.mrb[0].mxu0
        %v1704 = vpop.f32.mrb[0].mxu0
        %v1705 = vpop.f32.mrb[0].mxu0
        %1706 = vdwg.mxu0
        %1708 = vrot.lane.b32.xlu0 %v1438, 120
        %v1709 = vpop.permute.xlu0 %1708
        %1711 = vrot.lane.b32.xlu0 %v1440, 120
        %v1712 = vpop.permute.xlu0 %1711
        %v1714 = vsel %vm1441, %v1709, 0
        %v1717 = vsel %vm1441, %v1712, 0
        %1719 = vmatprep.subr.bf16.mxu0 0
        %1720 = vmatpush1.bf16.xpose.msra.mxu0 %v1717
        %1721 = vmatprep.subr.bf16.mxu0 0
        %1722 = vmatpush1.bf16.xpose.msra.mxu0 0
        %1723 = vmatprep.subr.bf16.mxu0 0
        %1724 = vmatpush1.bf16.xpose.msra.mxu0 0
        %1725 = vmatprep.subr.bf16.mxu0 0
        %1726 = vmatpush1.bf16.xpose.msra.mxu0 0
        %1727 = vmatprep.subr.bf16.mxu0 0
        %1728 = vmatpush1.bf16.xpose.msra.mxu0 0
        %1729 = vmatprep.subr.bf16.mxu0 0
        %1730 = vmatpush1.bf16.xpose.msra.mxu0 0
        %1731 = vmatprep.subr.bf16.mxu0 0
        %1732 = vmatpush1.bf16.xpose.msra.mxu0 0
        %1733 = vmatprep.subr.bf16.mxu0 0
        %1734 = vmatpush1.bf16.xpose.msra.mxu0 0
        %1735 = vmatprep.subr.bf16.mxu0 0
        %1736 = vmatpush1.bf16.xpose.msra.mxu0 0
        %1737 = vmatprep.subr.bf16.mxu0 0
        %1738 = vmatpush1.bf16.xpose.msra.mxu0 0
        %1739 = vmatprep.subr.bf16.mxu0 0
        %1740 = vmatpush1.bf16.xpose.msra.mxu0 0
        %1741 = vmatprep.subr.bf16.mxu0 0
        %1742 = vmatpush1.bf16.xpose.msra.mxu0 0
        %1743 = vmatprep.subr.bf16.mxu0 0
        %1744 = vmatpush1.bf16.xpose.msra.mxu0 0
        %1745 = vmatprep.subr.bf16.mxu0 0
        %1746 = vmatpush1.bf16.xpose.msra.mxu0 0
        %1747 = vmatprep.subr.bf16.mxu0 0
        %1748 = vmatpush1.bf16.xpose.msra.mxu0 0
        %1749 = vmatprep.subr.bf16.mxu0 0
        %1750 = vmatpush1.bf16.xpose.msra.mxu0 0
        %1751 = vmatprep.mubr.bf16.mxu0 0
        %1752 = vmatmul.mubr.bf16.gmra.mrb[0].mxu0 %v1714
        %v1753 = vpop.f32.mrb[0].mxu0
        %v1754 = vadd.f32 0.0, %v1753
        %v1755 = vpop.f32.mrb[0].mxu0
        %v1756 = vpop.f32.mrb[0].mxu0
        %v1757 = vpop.f32.mrb[0].mxu0
        %1758 = vdwg.mxu0
        %v1759 = vmul.f32 %v1702, 0.35355338
        %v1760 = vmul.f32 %v1754, 0.35355338
        %v1761 = vsel %vm1441, %v1759, -inf
        %1762 = vmax.xlane.f32.xlu0 %v1761
        %v1763 = vpop.xlane.xlu0 %1762
        %v1764 = vsel %vm1441, %v1760, -inf
        %1765 = vmax.xlane.f32.xlu0 %v1764
        %v1766 = vpop.xlane.xlu0 %1765
        %v1767 = vsub.f32 %v1759, %v1763
        %v1768 = vsub.f32 %v1760, %v1766
        %v1769 = vmul.f32 %v1767, 1.442695
        %v1770 = vpow.pop %v1769
        %v1771 = vmul.f32 %v1768, 1.442695
        %v1772 = vpow.pop %v1771
        %v1773 = vsel %vm1441, %v1770, 0.0
        %1774 = vadd.xlane.f32.xlu0 %v1773
        %v1775 = vpop.xlane.xlu0 %1774
        %v1776 = vsel %vm1441, %v1772, 0.0
        %1777 = vadd.xlane.f32.xlu0 %v1776
        %v1778 = vpop.xlane.xlu0 %1777
        %v1779 = vrcp.pop %v1775
        %v1780 = vrcp.pop %v1778
        %v1781 = vmul.f32 %v1770, %v1779
        %v1782 = vmul.f32 %v1772, %v1780
        %v1783 = vpack.c.bf16 %v1781, %v1781
        %v1784 = vpack.c.bf16 %v1782, %v1782
        %1786 = vrot.lane.b32.xlu0 %v1560, 120
        %v1787 = vpop.permute.xlu0 %1786
        %v1789 = vsel %vm1441, %v1783, 0
        %v1792 = vsel %vm1565, %v1787, 0
        %1794 = vmatprep.subr.bf16.mxu0 0
        %1795 = vmatpush1.bf16.msra.mxu0 %v1792
        %1796 = vmatprep.subr.bf16.mxu0 0
        %1797 = vmatpush1.bf16.msra.mxu0 0
        %1798 = vmatprep.subr.bf16.mxu0 0
        %1799 = vmatpush1.bf16.msra.mxu0 0
        %1800 = vmatprep.subr.bf16.mxu0 0
        %1801 = vmatpush1.bf16.msra.mxu0 0
        %1802 = vmatprep.subr.bf16.mxu0 0
        %1803 = vmatpush1.bf16.msra.mxu0 0
        %1804 = vmatprep.subr.bf16.mxu0 0
        %1805 = vmatpush1.bf16.msra.mxu0 0
        %1806 = vmatprep.subr.bf16.mxu0 0
        %1807 = vmatpush1.bf16.msra.mxu0 0
        %1808 = vmatprep.subr.bf16.mxu0 0
        %1809 = vmatpush1.bf16.msra.mxu0 0
        %1810 = vmatprep.subr.bf16.mxu0 0
        %1811 = vmatpush1.bf16.msra.mxu0 0
        %1812 = vmatprep.subr.bf16.mxu0 0
        %1813 = vmatpush1.bf16.msra.mxu0 0
        %1814 = vmatprep.subr.bf16.mxu0 0
        %1815 = vmatpush1.bf16.msra.mxu0 0
        %1816 = vmatprep.subr.bf16.mxu0 0
        %1817 = vmatpush1.bf16.msra.mxu0 0
        %1818 = vmatprep.subr.bf16.mxu0 0
        %1819 = vmatpush1.bf16.msra.mxu0 0
        %1820 = vmatprep.subr.bf16.mxu0 0
        %1821 = vmatpush1.bf16.msra.mxu0 0
        %1822 = vmatprep.subr.bf16.mxu0 0
        %1823 = vmatpush1.bf16.msra.mxu0 0
        %1824 = vmatprep.subr.bf16.mxu0 0
        %1825 = vmatpush1.bf16.msra.mxu0 0
        %1826 = vmatprep.mubr.bf16.mxu0 0
        %1827 = vmatmul.mubr.bf16.gmra.mrb[0].mxu0 %v1789
        %v1828 = vpop.f32.mrb[0].mxu0
        %v1829 = vadd.f32 0.0, %v1828
        %v1830 = vpop.f32.mrb[0].mxu0
        %v1831 = vpop.f32.mrb[0].mxu0
        %v1832 = vpop.f32.mrb[0].mxu0
        %1833 = vdwg.mxu0
        %1835 = vrot.lane.b32.xlu0 %v1561, 120
        %v1836 = vpop.permute.xlu0 %1835
        %v1838 = vsel %vm1441, %v1784, 0
        %v1841 = vsel %vm1565, %v1836, 0
        %1843 = vmatprep.subr.bf16.mxu0 0
        %1844 = vmatpush1.bf16.msra.mxu0 %v1841
        %1845 = vmatprep.subr.bf16.mxu0 0
        %1846 = vmatpush1.bf16.msra.mxu0 0
        %1847 = vmatprep.subr.bf16.mxu0 0
        %1848 = vmatpush1.bf16.msra.mxu0 0
        %1849 = vmatprep.subr.bf16.mxu0 0
        %1850 = vmatpush1.bf16.msra.mxu0 0
        %1851 = vmatprep.subr.bf16.mxu0 0
        %1852 = vmatpush1.bf16.msra.mxu0 0
        %1853 = vmatprep.subr.bf16.mxu0 0
        %1854 = vmatpush1.bf16.msra.mxu0 0
        %1855 = vmatprep.subr.bf16.mxu0 0
        %1856 = vmatpush1.bf16.msra.mxu0 0
        %1857 = vmatprep.subr.bf16.mxu0 0
        %1858 = vmatpush1.bf16.msra.mxu0 0
        %1859 = vmatprep.subr.bf16.mxu0 0
        %1860 = vmatpush1.bf16.msra.mxu0 0
        %1861 = vmatprep.subr.bf16.mxu0 0
        %1862 = vmatpush1.bf16.msra.mxu0 0
        %1863 = vmatprep.subr.bf16.mxu0 0
        %1864 = vmatpush1.bf16.msra.mxu0 0
        %1865 = vmatprep.subr.bf16.mxu0 0
        %1866 = vmatpush1.bf16.msra.mxu0 0
        %1867 = vmatprep.subr.bf16.mxu0 0
        %1868 = vmatpush1.bf16.msra.mxu0 0
        %1869 = vmatprep.subr.bf16.mxu0 0
        %1870 = vmatpush1.bf16.msra.mxu0 0
        %1871 = vmatprep.subr.bf16.mxu0 0
        %1872 = vmatpush1.bf16.msra.mxu0 0
        %1873 = vmatprep.subr.bf16.mxu0 0
        %1874 = vmatpush1.bf16.msra.mxu0 0
        %1875 = vmatprep.mubr.bf16.mxu0 0
        %1876 = vmatmul.mubr.bf16.gmra.mrb[0].mxu0 %v1838
        %v1877 = vpop.f32.mrb[0].mxu0
        %v1878 = vadd.f32 0.0, %v1877
        %v1879 = vpop.f32.mrb[0].mxu0
        %v1880 = vpop.f32.mrb[0].mxu0
        %v1881 = vpop.f32.mrb[0].mxu0
        %1882 = vdwg.mxu0
        %1883 = vrot.lane.b32.xlu0 %v1437, 112
        %v1884 = vpop.permute.xlu0 %1883
        %1885 = vrot.lane.b32.xlu0 %v1439, 112
        %v1886 = vpop.permute.xlu0 %1885
        %v1888 = vsel %vm1441, %v1884, 0
        %v1891 = vsel %vm1441, %v1886, 0
        %1893 = vmatprep.subr.bf16.mxu0 0
        %1894 = vmatpush1.bf16.xpose.msra.mxu0 %v1891
        %1895 = vmatprep.subr.bf16.mxu0 0
        %1896 = vmatpush1.bf16.xpose.msra.mxu0 0
        %1897 = vmatprep.subr.bf16.mxu0 0
        %1898 = vmatpush1.bf16.xpose.msra.mxu0 0
        %1899 = vmatprep.subr.bf16.mxu0 0
        %1900 = vmatpush1.bf16.xpose.msra.mxu0 0
        %1901 = vmatprep.subr.bf16.mxu0 0
        %1902 = vmatpush1.bf16.xpose.msra.mxu0 0
        %1903 = vmatprep.subr.bf16.mxu0 0
        %1904 = vmatpush1.bf16.xpose.msra.mxu0 0
        %1905 = vmatprep.subr.bf16.mxu0 0
        %1906 = vmatpush1.bf16.xpose.msra.mxu0 0
        %1907 = vmatprep.subr.bf16.mxu0 0
        %1908 = vmatpush1.bf16.xpose.msra.mxu0 0
        %1909 = vmatprep.subr.bf16.mxu0 0
        %1910 = vmatpush1.bf16.xpose.msra.mxu0 0
        %1911 = vmatprep.subr.bf16.mxu0 0
        %1912 = vmatpush1.bf16.xpose.msra.mxu0 0
        %1913 = vmatprep.subr.bf16.mxu0 0
        %1914 = vmatpush1.bf16.xpose.msra.mxu0 0
        %1915 = vmatprep.subr.bf16.mxu0 0
        %1916 = vmatpush1.bf16.xpose.msra.mxu0 0
        %1917 = vmatprep.subr.bf16.mxu0 0
        %1918 = vmatpush1.bf16.xpose.msra.mxu0 0
        %1919 = vmatprep.subr.bf16.mxu0 0
        %1920 = vmatpush1.bf16.xpose.msra.mxu0 0
        %1921 = vmatprep.subr.bf16.mxu0 0
        %1922 = vmatpush1.bf16.xpose.msra.mxu0 0
        %1923 = vmatprep.subr.bf16.mxu0 0
        %1924 = vmatpush1.bf16.xpose.msra.mxu0 0
        %1925 = vmatprep.mubr.bf16.mxu0 0
        %1926 = vmatmul.mubr.bf16.gmra.mrb[0].mxu0 %v1888
        %v1927 = vpop.f32.mrb[0].mxu0
        %v1928 = vadd.f32 0.0, %v1927
        %v1929 = vpop.f32.mrb[0].mxu0
        %v1930 = vpop.f32.mrb[0].mxu0
        %v1931 = vpop.f32.mrb[0].mxu0
        %1932 = vdwg.mxu0
        %1933 = vrot.lane.b32.xlu0 %v1438, 112
        %v1934 = vpop.permute.xlu0 %1933
        %1935 = vrot.lane.b32.xlu0 %v1440, 112
        %v1936 = vpop.permute.xlu0 %1935
        %v1938 = vsel %vm1441, %v1934, 0
        %v1941 = vsel %vm1441, %v1936, 0
        %1943 = vmatprep.subr.bf16.mxu0 0
        %1944 = vmatpush1.bf16.xpose.msra.mxu0 %v1941
        %1945 = vmatprep.subr.bf16.mxu0 0
        %1946 = vmatpush1.bf16.xpose.msra.mxu0 0
        %1947 = vmatprep.subr.bf16.mxu0 0
        %1948 = vmatpush1.bf16.xpose.msra.mxu0 0
        %1949 = vmatprep.subr.bf16.mxu0 0
        %1950 = vmatpush1.bf16.xpose.msra.mxu0 0
        %1951 = vmatprep.subr.bf16.mxu0 0
        %1952 = vmatpush1.bf16.xpose.msra.mxu0 0
        %1953 = vmatprep.subr.bf16.mxu0 0
        %1954 = vmatpush1.bf16.xpose.msra.mxu0 0
        %1955 = vmatprep.subr.bf16.mxu0 0
        %1956 = vmatpush1.bf16.xpose.msra.mxu0 0
        %1957 = vmatprep.subr.bf16.mxu0 0
        %1958 = vmatpush1.bf16.xpose.msra.mxu0 0
        %1959 = vmatprep.subr.bf16.mxu0 0
        %1960 = vmatpush1.bf16.xpose.msra.mxu0 0
        %1961 = vmatprep.subr.bf16.mxu0 0
        %1962 = vmatpush1.bf16.xpose.msra.mxu0 0
        %1963 = vmatprep.subr.bf16.mxu0 0
        %1964 = vmatpush1.bf16.xpose.msra.mxu0 0
        %1965 = vmatprep.subr.bf16.mxu0 0
        %1966 = vmatpush1.bf16.xpose.msra.mxu0 0
        %1967 = vmatprep.subr.bf16.mxu0 0
        %1968 = vmatpush1.bf16.xpose.msra.mxu0 0
        %1969 = vmatprep.subr.bf16.mxu0 0
        %1970 = vmatpush1.bf16.xpose.msra.mxu0 0
        %1971 = vmatprep.subr.bf16.mxu0 0
        %1972 = vmatpush1.bf16.xpose.msra.mxu0 0
        %1973 = vmatprep.subr.bf16.mxu0 0
        %1974 = vmatpush1.bf16.xpose.msra.mxu0 0
        %1975 = vmatprep.mubr.bf16.mxu0 0
        %1976 = vmatmul.mubr.bf16.gmra.mrb[0].mxu0 %v1938
        %v1977 = vpop.f32.mrb[0].mxu0
        %v1978 = vadd.f32 0.0, %v1977
        %v1979 = vpop.f32.mrb[0].mxu0
        %v1980 = vpop.f32.mrb[0].mxu0
        %v1981 = vpop.f32.mrb[0].mxu0
        %1982 = vdwg.mxu0
        %v1983 = vmul.f32 %v1928, 0.35355338
        %v1984 = vmul.f32 %v1978, 0.35355338
        %v1985 = vsel %vm1441, %v1983, -inf
        %1986 = vmax.xlane.f32.xlu0 %v1985
        %v1987 = vpop.xlane.xlu0 %1986
        %v1988 = vsel %vm1441, %v1984, -inf
        %1989 = vmax.xlane.f32.xlu0 %v1988
        %v1990 = vpop.xlane.xlu0 %1989
        %v1991 = vsub.f32 %v1983, %v1987
        %v1992 = vsub.f32 %v1984, %v1990
        %v1993 = vmul.f32 %v1991, 1.442695
        %v1994 = vpow.pop %v1993
        %v1995 = vmul.f32 %v1992, 1.442695
        %v1996 = vpow.pop %v1995
        %v1997 = vsel %vm1441, %v1994, 0.0
        %1998 = vadd.xlane.f32.xlu0 %v1997
        %v1999 = vpop.xlane.xlu0 %1998
        %v2000 = vsel %vm1441, %v1996, 0.0
        %2001 = vadd.xlane.f32.xlu0 %v2000
        %v2002 = vpop.xlane.xlu0 %2001
        %v2003 = vrcp.pop %v1999
        %v2004 = vrcp.pop %v2002
        %v2005 = vmul.f32 %v1994, %v2003
        %v2006 = vmul.f32 %v1996, %v2004
        %v2007 = vpack.c.bf16 %v2005, %v2005
        %v2008 = vpack.c.bf16 %v2006, %v2006
        %2009 = vrot.lane.b32.xlu0 %v1560, 112
        %v2010 = vpop.permute.xlu0 %2009
        %v2012 = vsel %vm1441, %v2007, 0
        %v2015 = vsel %vm1565, %v2010, 0
        %2017 = vmatprep.subr.bf16.mxu0 0
        %2018 = vmatpush1.bf16.msra.mxu0 %v2015
        %2019 = vmatprep.subr.bf16.mxu0 0
        %2020 = vmatpush1.bf16.msra.mxu0 0
        %2021 = vmatprep.subr.bf16.mxu0 0
        %2022 = vmatpush1.bf16.msra.mxu0 0
        %2023 = vmatprep.subr.bf16.mxu0 0
        %2024 = vmatpush1.bf16.msra.mxu0 0
        %2025 = vmatprep.subr.bf16.mxu0 0
        %2026 = vmatpush1.bf16.msra.mxu0 0
        %2027 = vmatprep.subr.bf16.mxu0 0
        %2028 = vmatpush1.bf16.msra.mxu0 0
        %2029 = vmatprep.subr.bf16.mxu0 0
        %2030 = vmatpush1.bf16.msra.mxu0 0
        %2031 = vmatprep.subr.bf16.mxu0 0
        %2032 = vmatpush1.bf16.msra.mxu0 0
        %2033 = vmatprep.subr.bf16.mxu0 0
        %2034 = vmatpush1.bf16.msra.mxu0 0
        %2035 = vmatprep.subr.bf16.mxu0 0
        %2036 = vmatpush1.bf16.msra.mxu0 0
        %2037 = vmatprep.subr.bf16.mxu0 0
        %2038 = vmatpush1.bf16.msra.mxu0 0
        %2039 = vmatprep.subr.bf16.mxu0 0
        %2040 = vmatpush1.bf16.msra.mxu0 0
        %2041 = vmatprep.subr.bf16.mxu0 0
        %2042 = vmatpush1.bf16.msra.mxu0 0
        %2043 = vmatprep.subr.bf16.mxu0 0
        %2044 = vmatpush1.bf16.msra.mxu0 0
        %2045 = vmatprep.subr.bf16.mxu0 0
        %2046 = vmatpush1.bf16.msra.mxu0 0
        %2047 = vmatprep.subr.bf16.mxu0 0
        %2048 = vmatpush1.bf16.msra.mxu0 0
        %2049 = vmatprep.mubr.bf16.mxu0 0
        %2050 = vmatmul.mubr.bf16.gmra.mrb[0].mxu0 %v2012
        %v2051 = vpop.f32.mrb[0].mxu0
        %v2052 = vadd.f32 0.0, %v2051
        %v2053 = vpop.f32.mrb[0].mxu0
        %v2054 = vpop.f32.mrb[0].mxu0
        %v2055 = vpop.f32.mrb[0].mxu0
        %2056 = vdwg.mxu0
        %2057 = vrot.lane.b32.xlu0 %v1561, 112
        %v2058 = vpop.permute.xlu0 %2057
        %v2060 = vsel %vm1441, %v2008, 0
        %v2063 = vsel %vm1565, %v2058, 0
        %2065 = vmatprep.subr.bf16.mxu0 0
        %2066 = vmatpush1.bf16.msra.mxu0 %v2063
        %2067 = vmatprep.subr.bf16.mxu0 0
        %2068 = vmatpush1.bf16.msra.mxu0 0
        %2069 = vmatprep.subr.bf16.mxu0 0
        %2070 = vmatpush1.bf16.msra.mxu0 0
        %2071 = vmatprep.subr.bf16.mxu0 0
        %2072 = vmatpush1.bf16.msra.mxu0 0
        %2073 = vmatprep.subr.bf16.mxu0 0
        %2074 = vmatpush1.bf16.msra.mxu0 0
        %2075 = vmatprep.subr.bf16.mxu0 0
        %2076 = vmatpush1.bf16.msra.mxu0 0
        %2077 = vmatprep.subr.bf16.mxu0 0
        %2078 = vmatpush1.bf16.msra.mxu0 0
        %2079 = vmatprep.subr.bf16.mxu0 0
        %2080 = vmatpush1.bf16.msra.mxu0 0
        %2081 = vmatprep.subr.bf16.mxu0 0
        %2082 = vmatpush1.bf16.msra.mxu0 0
        %2083 = vmatprep.subr.bf16.mxu0 0
        %2084 = vmatpush1.bf16.msra.mxu0 0
        %2085 = vmatprep.subr.bf16.mxu0 0
        %2086 = vmatpush1.bf16.msra.mxu0 0
        %2087 = vmatprep.subr.bf16.mxu0 0
        %2088 = vmatpush1.bf16.msra.mxu0 0
        %2089 = vmatprep.subr.bf16.mxu0 0
        %2090 = vmatpush1.bf16.msra.mxu0 0
        %2091 = vmatprep.subr.bf16.mxu0 0
        %2092 = vmatpush1.bf16.msra.mxu0 0
        %2093 = vmatprep.subr.bf16.mxu0 0
        %2094 = vmatpush1.bf16.msra.mxu0 0
        %2095 = vmatprep.subr.bf16.mxu0 0
        %2096 = vmatpush1.bf16.msra.mxu0 0
        %2097 = vmatprep.mubr.bf16.mxu0 0
        %2098 = vmatmul.mubr.bf16.gmra.mrb[0].mxu0 %v2060
        %v2099 = vpop.f32.mrb[0].mxu0
        %v2100 = vadd.f32 0.0, %v2099
        %v2101 = vpop.f32.mrb[0].mxu0
        %v2102 = vpop.f32.mrb[0].mxu0
        %v2103 = vpop.f32.mrb[0].mxu0
        %2104 = vdwg.mxu0
        %2105 = vrot.lane.b32.xlu0 %v1437, 104
        %v2106 = vpop.permute.xlu0 %2105
        %2107 = vrot.lane.b32.xlu0 %v1439, 104
        %v2108 = vpop.permute.xlu0 %2107
        %v2110 = vsel %vm1441, %v2106, 0
        %v2113 = vsel %vm1441, %v2108, 0
        %2115 = vmatprep.subr.bf16.mxu0 0
        %2116 = vmatpush1.bf16.xpose.msra.mxu0 %v2113
        %2117 = vmatprep.subr.bf16.mxu0 0
        %2118 = vmatpush1.bf16.xpose.msra.mxu0 0
        %2119 = vmatprep.subr.bf16.mxu0 0
        %2120 = vmatpush1.bf16.xpose.msra.mxu0 0
        %2121 = vmatprep.subr.bf16.mxu0 0
        %2122 = vmatpush1.bf16.xpose.msra.mxu0 0
        %2123 = vmatprep.subr.bf16.mxu0 0
        %2124 = vmatpush1.bf16.xpose.msra.mxu0 0
        %2125 = vmatprep.subr.bf16.mxu0 0
        %2126 = vmatpush1.bf16.xpose.msra.mxu0 0
        %2127 = vmatprep.subr.bf16.mxu0 0
        %2128 = vmatpush1.bf16.xpose.msra.mxu0 0
        %2129 = vmatprep.subr.bf16.mxu0 0
        %2130 = vmatpush1.bf16.xpose.msra.mxu0 0
        %2131 = vmatprep.subr.bf16.mxu0 0
        %2132 = vmatpush1.bf16.xpose.msra.mxu0 0
        %2133 = vmatprep.subr.bf16.mxu0 0
        %2134 = vmatpush1.bf16.xpose.msra.mxu0 0
        %2135 = vmatprep.subr.bf16.mxu0 0
        %2136 = vmatpush1.bf16.xpose.msra.mxu0 0
        %2137 = vmatprep.subr.bf16.mxu0 0
        %2138 = vmatpush1.bf16.xpose.msra.mxu0 0
        %2139 = vmatprep.subr.bf16.mxu0 0
        %2140 = vmatpush1.bf16.xpose.msra.mxu0 0
        %2141 = vmatprep.subr.bf16.mxu0 0
        %2142 = vmatpush1.bf16.xpose.msra.mxu0 0
        %2143 = vmatprep.subr.bf16.mxu0 0
        %2144 = vmatpush1.bf16.xpose.msra.mxu0 0
        %2145 = vmatprep.subr.bf16.mxu0 0
        %2146 = vmatpush1.bf16.xpose.msra.mxu0 0
        %2147 = vmatprep.mubr.bf16.mxu0 0
        %2148 = vmatmul.mubr.bf16.gmra.mrb[0].mxu0 %v2110
        %v2149 = vpop.f32.mrb[0].mxu0
        %v2150 = vadd.f32 0.0, %v2149
        %v2151 = vpop.f32.mrb[0].mxu0
        %v2152 = vpop.f32.mrb[0].mxu0
        %v2153 = vpop.f32.mrb[0].mxu0
        %2154 = vdwg.mxu0
        %2155 = vrot.lane.b32.xlu0 %v1438, 104
        %v2156 = vpop.permute.xlu0 %2155
        %2157 = vrot.lane.b32.xlu0 %v1440, 104
        %v2158 = vpop.permute.xlu0 %2157
        %v2160 = vsel %vm1441, %v2156, 0
        %v2163 = vsel %vm1441, %v2158, 0
        %2165 = vmatprep.subr.bf16.mxu0 0
        %2166 = vmatpush1.bf16.xpose.msra.mxu0 %v2163
        %2167 = vmatprep.subr.bf16.mxu0 0
        %2168 = vmatpush1.bf16.xpose.msra.mxu0 0
        %2169 = vmatprep.subr.bf16.mxu0 0
        %2170 = vmatpush1.bf16.xpose.msra.mxu0 0
        %2171 = vmatprep.subr.bf16.mxu0 0
        %2172 = vmatpush1.bf16.xpose.msra.mxu0 0
        %2173 = vmatprep.subr.bf16.mxu0 0
        %2174 = vmatpush1.bf16.xpose.msra.mxu0 0
        %2175 = vmatprep.subr.bf16.mxu0 0
        %2176 = vmatpush1.bf16.xpose.msra.mxu0 0
        %2177 = vmatprep.subr.bf16.mxu0 0
        %2178 = vmatpush1.bf16.xpose.msra.mxu0 0
        %2179 = vmatprep.subr.bf16.mxu0 0
        %2180 = vmatpush1.bf16.xpose.msra.mxu0 0
        %2181 = vmatprep.subr.bf16.mxu0 0
        %2182 = vmatpush1.bf16.xpose.msra.mxu0 0
        %2183 = vmatprep.subr.bf16.mxu0 0
        %2184 = vmatpush1.bf16.xpose.msra.mxu0 0
        %2185 = vmatprep.subr.bf16.mxu0 0
        %2186 = vmatpush1.bf16.xpose.msra.mxu0 0
        %2187 = vmatprep.subr.bf16.mxu0 0
        %2188 = vmatpush1.bf16.xpose.msra.mxu0 0
        %2189 = vmatprep.subr.bf16.mxu0 0
        %2190 = vmatpush1.bf16.xpose.msra.mxu0 0
        %2191 = vmatprep.subr.bf16.mxu0 0
        %2192 = vmatpush1.bf16.xpose.msra.mxu0 0
        %2193 = vmatprep.subr.bf16.mxu0 0
        %2194 = vmatpush1.bf16.xpose.msra.mxu0 0
        %2195 = vmatprep.subr.bf16.mxu0 0
        %2196 = vmatpush1.bf16.xpose.msra.mxu0 0
        %2197 = vmatprep.mubr.bf16.mxu0 0
        %2198 = vmatmul.mubr.bf16.gmra.mrb[0].mxu0 %v2160
        %v2199 = vpop.f32.mrb[0].mxu0
        %v2200 = vadd.f32 0.0, %v2199
        %v2201 = vpop.f32.mrb[0].mxu0
        %v2202 = vpop.f32.mrb[0].mxu0
        %v2203 = vpop.f32.mrb[0].mxu0
        %2204 = vdwg.mxu0
        %v2205 = vmul.f32 %v2150, 0.35355338
        %v2206 = vmul.f32 %v2200, 0.35355338
        %v2207 = vsel %vm1441, %v2205, -inf
        %2208 = vmax.xlane.f32.xlu0 %v2207
        %v2209 = vpop.xlane.xlu0 %2208
        %v2210 = vsel %vm1441, %v2206, -inf
        %2211 = vmax.xlane.f32.xlu0 %v2210
        %v2212 = vpop.xlane.xlu0 %2211
        %v2213 = vsub.f32 %v2205, %v2209
        %v2214 = vsub.f32 %v2206, %v2212
        %v2215 = vmul.f32 %v2213, 1.442695
        %v2216 = vpow.pop %v2215
        %v2217 = vmul.f32 %v2214, 1.442695
        %v2218 = vpow.pop %v2217
        %v2219 = vsel %vm1441, %v2216, 0.0
        %2220 = vadd.xlane.f32.xlu0 %v2219
        %v2221 = vpop.xlane.xlu0 %2220
        %v2222 = vsel %vm1441, %v2218, 0.0
        %2223 = vadd.xlane.f32.xlu0 %v2222
        %v2224 = vpop.xlane.xlu0 %2223
        %v2225 = vrcp.pop %v2221
        %v2226 = vrcp.pop %v2224
        %v2227 = vmul.f32 %v2216, %v2225
        %v2228 = vmul.f32 %v2218, %v2226
        %v2229 = vpack.c.bf16 %v2227, %v2227
        %v2230 = vpack.c.bf16 %v2228, %v2228
        %2231 = vrot.lane.b32.xlu0 %v1560, 104
        %v2232 = vpop.permute.xlu0 %2231
        %v2234 = vsel %vm1441, %v2229, 0
        %v2237 = vsel %vm1565, %v2232, 0
        %2239 = vmatprep.subr.bf16.mxu0 0
        %2240 = vmatpush1.bf16.msra.mxu0 %v2237
        %2241 = vmatprep.subr.bf16.mxu0 0
        %2242 = vmatpush1.bf16.msra.mxu0 0
        %2243 = vmatprep.subr.bf16.mxu0 0
        %2244 = vmatpush1.bf16.msra.mxu0 0
        %2245 = vmatprep.subr.bf16.mxu0 0
        %2246 = vmatpush1.bf16.msra.mxu0 0
        %2247 = vmatprep.subr.bf16.mxu0 0
        %2248 = vmatpush1.bf16.msra.mxu0 0
        %2249 = vmatprep.subr.bf16.mxu0 0
        %2250 = vmatpush1.bf16.msra.mxu0 0
        %2251 = vmatprep.subr.bf16.mxu0 0
        %2252 = vmatpush1.bf16.msra.mxu0 0
        %2253 = vmatprep.subr.bf16.mxu0 0
        %2254 = vmatpush1.bf16.msra.mxu0 0
        %2255 = vmatprep.subr.bf16.mxu0 0
        %2256 = vmatpush1.bf16.msra.mxu0 0
        %2257 = vmatprep.subr.bf16.mxu0 0
        %2258 = vmatpush1.bf16.msra.mxu0 0
        %2259 = vmatprep.subr.bf16.mxu0 0
        %2260 = vmatpush1.bf16.msra.mxu0 0
        %2261 = vmatprep.subr.bf16.mxu0 0
        %2262 = vmatpush1.bf16.msra.mxu0 0
        %2263 = vmatprep.subr.bf16.mxu0 0
        %2264 = vmatpush1.bf16.msra.mxu0 0
        %2265 = vmatprep.subr.bf16.mxu0 0
        %2266 = vmatpush1.bf16.msra.mxu0 0
        %2267 = vmatprep.subr.bf16.mxu0 0
        %2268 = vmatpush1.bf16.msra.mxu0 0
        %2269 = vmatprep.subr.bf16.mxu0 0
        %2270 = vmatpush1.bf16.msra.mxu0 0
        %2271 = vmatprep.mubr.bf16.mxu0 0
        %2272 = vmatmul.mubr.bf16.gmra.mrb[0].mxu0 %v2234
        %v2273 = vpop.f32.mrb[0].mxu0
        %v2274 = vadd.f32 0.0, %v2273
        %v2275 = vpop.f32.mrb[0].mxu0
        %v2276 = vpop.f32.mrb[0].mxu0
        %v2277 = vpop.f32.mrb[0].mxu0
        %2278 = vdwg.mxu0
        %2279 = vrot.lane.b32.xlu0 %v1561, 104
        %v2280 = vpop.permute.xlu0 %2279
        %v2282 = vsel %vm1441, %v2230, 0
        %v2285 = vsel %vm1565, %v2280, 0
        %2287 = vmatprep.subr.bf16.mxu0 0
        %2288 = vmatpush1.bf16.msra.mxu0 %v2285
        %2289 = vmatprep.subr.bf16.mxu0 0
        %2290 = vmatpush1.bf16.msra.mxu0 0
        %2291 = vmatprep.subr.bf16.mxu0 0
        %2292 = vmatpush1.bf16.msra.mxu0 0
        %2293 = vmatprep.subr.bf16.mxu0 0
        %2294 = vmatpush1.bf16.msra.mxu0 0
        %2295 = vmatprep.subr.bf16.mxu0 0
        %2296 = vmatpush1.bf16.msra.mxu0 0
        %2297 = vmatprep.subr.bf16.mxu0 0
        %2298 = vmatpush1.bf16.msra.mxu0 0
        %2299 = vmatprep.subr.bf16.mxu0 0
        %2300 = vmatpush1.bf16.msra.mxu0 0
        %2301 = vmatprep.subr.bf16.mxu0 0
        %2302 = vmatpush1.bf16.msra.mxu0 0
        %2303 = vmatprep.subr.bf16.mxu0 0
        %2304 = vmatpush1.bf16.msra.mxu0 0
        %2305 = vmatprep.subr.bf16.mxu0 0
        %2306 = vmatpush1.bf16.msra.mxu0 0
        %2307 = vmatprep.subr.bf16.mxu0 0
        %2308 = vmatpush1.bf16.msra.mxu0 0
        %2309 = vmatprep.subr.bf16.mxu0 0
        %2310 = vmatpush1.bf16.msra.mxu0 0
        %2311 = vmatprep.subr.bf16.mxu0 0
        %2312 = vmatpush1.bf16.msra.mxu0 0
        %2313 = vmatprep.subr.bf16.mxu0 0
        %2314 = vmatpush1.bf16.msra.mxu0 0
        %2315 = vmatprep.subr.bf16.mxu0 0
        %2316 = vmatpush1.bf16.msra.mxu0 0
        %2317 = vmatprep.subr.bf16.mxu0 0
        %2318 = vmatpush1.bf16.msra.mxu0 0
        %2319 = vmatprep.mubr.bf16.mxu0 0
        %2320 = vmatmul.mubr.bf16.gmra.mrb[0].mxu0 %v2282
        %v2321 = vpop.f32.mrb[0].mxu0
        %v2322 = vadd.f32 0.0, %v2321
        %v2323 = vpop.f32.mrb[0].mxu0
        %v2324 = vpop.f32.mrb[0].mxu0
        %v2325 = vpop.f32.mrb[0].mxu0
        %2326 = vdwg.mxu0
        %2329 = vrot.lane.b32.xlu0 %v1829, 8
        %v2330 = vpop.permute.xlu0 %2329
        %2331 = vrot.lane.b32.xlu0 %v1878, 8
        %v2332 = vpop.permute.xlu0 %2331
        %2337 = vrot.lane.b32.xlu0 %v2052, 16
        %v2338 = vpop.permute.xlu0 %2337
        %2339 = vrot.lane.b32.xlu0 %v2100, 16
        %v2340 = vpop.permute.xlu0 %2339
        %2345 = vrot.lane.b32.xlu0 %v2274, 24
        %v2346 = vpop.permute.xlu0 %2345
        %2347 = vrot.lane.b32.xlu0 %v2322, 24
        %v2348 = vpop.permute.xlu0 %2347
        %v2351 = vsel %vm1441, %v1604, %v2330
        %v2352 = vsel %vm1441, %v1650, %v2332
        %vm2353 = vcmask 130048
        %v2354 = vsel %vm2353, %v2351, %v2338
        %v2355 = vsel %vm2353, %v2352, %v2340
        %vm2356 = vcmask 195584
        %v2357 = vsel %vm2356, %v2354, %v2346
        %v2358 = vsel %vm2356, %v2355, %v2348
        %v2359 = vpack.c.bf16 %v2358, %v2357
        %v2361 = vlaneseq
        %v2362 = vshrl.u32 %v2361, 7
        %v2363 = vsub.s32 0, %v2362
        %v2364 = vrot.slane %v1255, %v2363
        %v2370 = vunpack.c.l.b16 %v1251
        %v2371 = vunpack.c.l.b16 %v1252
        %v2372 = vunpack.c.l.b16 %v1253
        %v2373 = vunpack.c.l.b16 %v1254
        %v2374 = vpack.c.b16 %v2371, %v2370
        %v2375 = vpack.c.b16 %v2373, %v2372
        %v2379 = vsel %vm1192, %v2359, 0
        %2381 = vmatprep.subr.bf16.mxu0 0
        %2382 = vmatpush1.bf16.msra.mxu0 %v2374
        %2383 = vmatprep.subr.bf16.mxu0 0
        %2384 = vmatpush1.bf16.msra.mxu0 %v2375
        %2385 = vmatprep.subr.bf16.mxu0 0
        %2386 = vmatpush1.bf16.msra.mxu0 0
        %2387 = vmatprep.subr.bf16.mxu0 0
        %2388 = vmatpush1.bf16.msra.mxu0 0
        %2389 = vmatprep.subr.bf16.mxu0 0
        %2390 = vmatpush1.bf16.msra.mxu0 0
        %2391 = vmatprep.subr.bf16.mxu0 0
        %2392 = vmatpush1.bf16.msra.mxu0 0
        %2393 = vmatprep.subr.bf16.mxu0 0
        %2394 = vmatpush1.bf16.msra.mxu0 0
        %2395 = vmatprep.subr.bf16.mxu0 0
        %2396 = vmatpush1.bf16.msra.mxu0 0
        %2397 = vmatprep.subr.bf16.mxu0 0
        %2398 = vmatpush1.bf16.msra.mxu0 0
        %2399 = vmatprep.subr.bf16.mxu0 0
        %2400 = vmatpush1.bf16.msra.mxu0 0
        %2401 = vmatprep.subr.bf16.mxu0 0
        %2402 = vmatpush1.bf16.msra.mxu0 0
        %2403 = vmatprep.subr.bf16.mxu0 0
        %2404 = vmatpush1.bf16.msra.mxu0 0
        %2405 = vmatprep.subr.bf16.mxu0 0
        %2406 = vmatpush1.bf16.msra.mxu0 0
        %2407 = vmatprep.subr.bf16.mxu0 0
        %2408 = vmatpush1.bf16.msra.mxu0 0
        %2409 = vmatprep.subr.bf16.mxu0 0
        %2410 = vmatpush1.bf16.msra.mxu0 0
        %2411 = vmatprep.subr.bf16.mxu0 0
        %2412 = vmatpush1.bf16.msra.mxu0 0
        %2413 = vmatprep.mubr.bf16.mxu0 0
        %2414 = vmatmul.mubr.bf16.gmra.mrb[0].mxu0 %v2379
        %v2415 = vpop.f32.mrb[0].mxu0
        %v2416 = vadd.f32 %v2364, %v2415
        %v2417 = vpop.f32.mrb[0].mxu0
        %v2418 = vpop.f32.mrb[0].mxu0
        %v2419 = vadd.f32 %v2364, %v2418
        %v2420 = vpop.f32.mrb[0].mxu0
        %2421 = vdwg.mxu0
        %v2422 = vadd.f32 %v1182, %v2416
        %v2423 = vadd.f32 %v1183, %v2419
        %v2424 = vsel %vm1192, %v2422, 0.0
        %2425 = vadd.xlane.f32.xlu0 %v2424
        %v2426 = vpop.xlane.xlu0 %2425
        %v2427 = vsel %vm1192, %v2423, 0.0
        %2428 = vadd.xlane.f32.xlu0 %v2427
        %v2429 = vpop.xlane.xlu0 %2428
        %v2430 = vmul.f32 %v2426, %v1199
        %v2431 = vmul.f32 %v2429, %v1199
        %v2432 = vsub.f32 %v2422, %v2430
        %v2433 = vsub.f32 %v2423, %v2431
        %v2434 = vmul.f32 %v2432, %v2432
        %v2435 = vmul.f32 %v2433, %v2433
        %v2436 = vsel %vm1192, %v2434, 0.0
        %2437 = vadd.xlane.f32.xlu0 %v2436
        %v2438 = vpop.xlane.xlu0 %2437
        %v2439 = vsel %vm1192, %v2435, 0.0
        %2440 = vadd.xlane.f32.xlu0 %v2439
        %v2441 = vpop.xlane.xlu0 %2440
        %v2442 = vmul.f32 %v2438, %v1199
        %v2443 = vmul.f32 %v2441, %v1199
        %v2444 = vadd.f32 %v2442, 1e-05
        %v2445 = vadd.f32 %v2443, 1e-05
        %v2446 = vrsqrt.pop %v2444
        %v2447 = vrsqrt.pop %v2445
        %v2448 = vmul.f32 %v2432, %v2446
        %v2449 = vmul.f32 %v2433, %v2447
        %v2451 = vlaneseq
        %v2452 = vshrl.u32 %v2451, 7
        %v2453 = vsub.s32 0, %v2452
        %v2454 = vrot.slane %v1187, %v2453
        %v2456 = vmul.f32 %v2448, %v2454
        %v2457 = vmul.f32 %v2449, %v2454
        %v2459 = vlaneseq
        %v2460 = vshrl.u32 %v2459, 7
        %v2461 = vsub.s32 0, %v2460
        %v2462 = vrot.slane %v1190, %v2461
        %v2464 = vadd.f32 %v2456, %v2462
        %v2465 = vadd.f32 %v2457, %v2462
        %v2466 = vsel %vm1192, %v1184, 0.0
        %2467 = vadd.xlane.f32.xlu0 %v2466
        %v2468 = vpop.xlane.xlu0 %2467
        %v2469 = vsel %vm1192, %v1185, 0.0
        %2470 = vadd.xlane.f32.xlu0 %v2469
        %v2471 = vpop.xlane.xlu0 %2470
        %v2472 = vmul.f32 %v2468, %v1199
        %v2473 = vmul.f32 %v2471, %v1199
        %v2474 = vsub.f32 %v1184, %v2472
        %v2475 = vsub.f32 %v1185, %v2473
        %v2476 = vmul.f32 %v2474, %v2474
        %v2477 = vmul.f32 %v2475, %v2475
        %v2478 = vsel %vm1192, %v2476, 0.0
        %2479 = vadd.xlane.f32.xlu0 %v2478
        %v2480 = vpop.xlane.xlu0 %2479
        %v2481 = vsel %vm1192, %v2477, 0.0
        %2482 = vadd.xlane.f32.xlu0 %v2481
        %v2483 = vpop.xlane.xlu0 %2482
        %v2484 = vmul.f32 %v2480, %v1199
        %v2485 = vmul.f32 %v2483, %v1199
        %v2486 = vadd.f32 %v2484, 1e-05
        %v2487 = vadd.f32 %v2485, 1e-05
        %v2488 = vrsqrt.pop %v2486
        %v2489 = vrsqrt.pop %v2487
        %v2490 = vmul.f32 %v2474, %v2488
        %v2491 = vmul.f32 %v2475, %v2489
        %v2492 = vmul.f32 %v2490, %v2454
        %v2493 = vmul.f32 %v2491, %v2454
        %v2494 = vadd.f32 %v2492, %v2462
        %v2495 = vadd.f32 %v2493, %v2462
        %v2496 = vld [vmem:[%s983] sm:$0xf]
        %v2497 = vld [vmem:[%s983 + $0x4] sm:$0xf]
        %v2498 = vld [vmem:[%s983 + $0x8] sm:$0xf]
        %v2499 = vld [vmem:[%s983 + $0xc] sm:$0xf]
        %v2500 = vld [vmem:[%s983 + $0x10] sm:$0xf]
        %v2501 = vld [vmem:[%s983 + $0x14] sm:$0xf]
        %v2502 = vld [vmem:[%s983 + $0x18] sm:$0xf]
        %v2503 = vld [vmem:[%s983 + $0x1c] sm:$0xf]
        %v2504 = vld [vmem:[%s983 + $0x20] sm:$0xf]
        %v2505 = vld [vmem:[%s983 + $0x24] sm:$0xf]
        %v2506 = vld [vmem:[%s983 + $0x28] sm:$0xf]
        %v2507 = vld [vmem:[%s983 + $0x2c] sm:$0xf]
        %v2508 = vld [vmem:[%s992] sm:$0x1]
        %v2509 = vld [vmem:[%s992 + $0x1] sm:$0x1]
        %v2510 = vld [vmem:[%s992 + $0x2] sm:$0x1]
        %v2511 = vld [vmem:[%s1001] sm:$0xf]
        %v2512 = vld [vmem:[%s1001 + $0x4] sm:$0xf]
        %v2513 = vld [vmem:[%s1001 + $0x8] sm:$0xf]
        %v2514 = vld [vmem:[%s1001 + $0xc] sm:$0xf]
        %v2515 = vld [vmem:[%s1009] sm:$0x1]
        %v2516 = vpack.c.bf16 %v2465, %v2464
        %v2518 = vlaneseq
        %v2519 = vshrl.u32 %v2518, 7
        %v2520 = vsub.s32 0, %v2519
        %v2521 = vrot.slane %v2508, %v2520
        %v2527 = vunpack.c.l.b16 %v2496
        %v2528 = vunpack.c.l.b16 %v2497
        %v2529 = vunpack.c.l.b16 %v2498
        %v2530 = vunpack.c.l.b16 %v2499
        %v2531 = vpack.c.b16 %v2528, %v2527
        %v2532 = vpack.c.b16 %v2530, %v2529
        %v2536 = vsel %vm1192, %v2516, 0
        %2538 = vmatprep.subr.bf16.mxu0 0
        %2539 = vmatpush1.bf16.msra.mxu0 %v2531
        %2540 = vmatprep.subr.bf16.mxu0 0
        %2541 = vmatpush1.bf16.msra.mxu0 %v2532
        %2542 = vmatprep.subr.bf16.mxu0 0
        %2543 = vmatpush1.bf16.msra.mxu0 0
        %2544 = vmatprep.subr.bf16.mxu0 0
        %2545 = vmatpush1.bf16.msra.mxu0 0
        %2546 = vmatprep.subr.bf16.mxu0 0
        %2547 = vmatpush1.bf16.msra.mxu0 0
        %2548 = vmatprep.subr.bf16.mxu0 0
        %2549 = vmatpush1.bf16.msra.mxu0 0
        %2550 = vmatprep.subr.bf16.mxu0 0
        %2551 = vmatpush1.bf16.msra.mxu0 0
        %2552 = vmatprep.subr.bf16.mxu0 0
        %2553 = vmatpush1.bf16.msra.mxu0 0
        %2554 = vmatprep.subr.bf16.mxu0 0
        %2555 = vmatpush1.bf16.msra.mxu0 0
        %2556 = vmatprep.subr.bf16.mxu0 0
        %2557 = vmatpush1.bf16.msra.mxu0 0
        %2558 = vmatprep.subr.bf16.mxu0 0
        %2559 = vmatpush1.bf16.msra.mxu0 0
        %2560 = vmatprep.subr.bf16.mxu0 0
        %2561 = vmatpush1.bf16.msra.mxu0 0
        %2562 = vmatprep.subr.bf16.mxu0 0
        %2563 = vmatpush1.bf16.msra.mxu0 0
        %2564 = vmatprep.subr.bf16.mxu0 0
        %2565 = vmatpush1.bf16.msra.mxu0 0
        %2566 = vmatprep.subr.bf16.mxu0 0
        %2567 = vmatpush1.bf16.msra.mxu0 0
        %2568 = vmatprep.subr.bf16.mxu0 0
        %2569 = vmatpush1.bf16.msra.mxu0 0
        %2570 = vmatprep.mubr.bf16.mxu0 0
        %2571 = vmatmul.mubr.bf16.gmra.mrb[0].mxu0 %v2536
        %v2572 = vpop.f32.mrb[0].mxu0
        %v2573 = vadd.f32 %v2521, %v2572
        %v2574 = vpop.f32.mrb[0].mxu0
        %v2575 = vpop.f32.mrb[0].mxu0
        %v2576 = vadd.f32 %v2521, %v2575
        %v2577 = vpop.f32.mrb[0].mxu0
        %2578 = vdwg.mxu0
        %v2579 = vpack.c.bf16 %v2495, %v2494
        %v2581 = vlaneseq
        %v2582 = vshrl.u32 %v2581, 7
        %v2583 = vsub.s32 0, %v2582
        %v2584 = vrot.slane %v2509, %v2583
        %v2590 = vunpack.c.l.b16 %v2500
        %v2591 = vunpack.c.l.b16 %v2501
        %v2592 = vunpack.c.l.b16 %v2502
        %v2593 = vunpack.c.l.b16 %v2503
        %v2594 = vpack.c.b16 %v2591, %v2590
        %v2595 = vpack.c.b16 %v2593, %v2592
        %v2599 = vsel %vm1192, %v2579, 0
        %2601 = vmatprep.subr.bf16.mxu0 0
        %2602 = vmatpush1.bf16.msra.mxu0 %v2594
        %2603 = vmatprep.subr.bf16.mxu0 0
        %2604 = vmatpush1.bf16.msra.mxu0 %v2595
        %2605 = vmatprep.subr.bf16.mxu0 0
        %2606 = vmatpush1.bf16.msra.mxu0 0
        %2607 = vmatprep.subr.bf16.mxu0 0
        %2608 = vmatpush1.bf16.msra.mxu0 0
        %2609 = vmatprep.subr.bf16.mxu0 0
        %2610 = vmatpush1.bf16.msra.mxu0 0
        %2611 = vmatprep.subr.bf16.mxu0 0
        %2612 = vmatpush1.bf16.msra.mxu0 0
        %2613 = vmatprep.subr.bf16.mxu0 0
        %2614 = vmatpush1.bf16.msra.mxu0 0
        %2615 = vmatprep.subr.bf16.mxu0 0
        %2616 = vmatpush1.bf16.msra.mxu0 0
        %2617 = vmatprep.subr.bf16.mxu0 0
        %2618 = vmatpush1.bf16.msra.mxu0 0
        %2619 = vmatprep.subr.bf16.mxu0 0
        %2620 = vmatpush1.bf16.msra.mxu0 0
        %2621 = vmatprep.subr.bf16.mxu0 0
        %2622 = vmatpush1.bf16.msra.mxu0 0
        %2623 = vmatprep.subr.bf16.mxu0 0
        %2624 = vmatpush1.bf16.msra.mxu0 0
        %2625 = vmatprep.subr.bf16.mxu0 0
        %2626 = vmatpush1.bf16.msra.mxu0 0
        %2627 = vmatprep.subr.bf16.mxu0 0
        %2628 = vmatpush1.bf16.msra.mxu0 0
        %2629 = vmatprep.subr.bf16.mxu0 0
        %2630 = vmatpush1.bf16.msra.mxu0 0
        %2631 = vmatprep.subr.bf16.mxu0 0
        %2632 = vmatpush1.bf16.msra.mxu0 0
        %2633 = vmatprep.mubr.bf16.mxu0 0
        %2634 = vmatmul.mubr.bf16.gmra.mrb[0].mxu0 %v2599
        %v2635 = vpop.f32.mrb[0].mxu0
        %v2636 = vadd.f32 %v2584, %v2635
        %v2637 = vpop.f32.mrb[0].mxu0
        %v2638 = vpop.f32.mrb[0].mxu0
        %v2639 = vadd.f32 %v2584, %v2638
        %v2640 = vpop.f32.mrb[0].mxu0
        %2641 = vdwg.mxu0
        %v2643 = vlaneseq
        %v2644 = vshrl.u32 %v2643, 7
        %v2645 = vsub.s32 0, %v2644
        %v2646 = vrot.slane %v2510, %v2645
        %v2652 = vunpack.c.l.b16 %v2504
        %v2653 = vunpack.c.l.b16 %v2505
        %v2654 = vunpack.c.l.b16 %v2506
        %v2655 = vunpack.c.l.b16 %v2507
        %v2656 = vpack.c.b16 %v2653, %v2652
        %v2657 = vpack.c.b16 %v2655, %v2654
        %2660 = vmatprep.subr.bf16.mxu0 0
        %2661 = vmatpush1.bf16.msra.mxu0 %v2656
        %2662 = vmatprep.subr.bf16.mxu0 0
        %2663 = vmatpush1.bf16.msra.mxu0 %v2657
        %2664 = vmatprep.subr.bf16.mxu0 0
        %2665 = vmatpush1.bf16.msra.mxu0 0
        %2666 = vmatprep.subr.bf16.mxu0 0
        %2667 = vmatpush1.bf16.msra.mxu0 0
        %2668 = vmatprep.subr.bf16.mxu0 0
        %2669 = vmatpush1.bf16.msra.mxu0 0
        %2670 = vmatprep.subr.bf16.mxu0 0
        %2671 = vmatpush1.bf16.msra.mxu0 0
        %2672 = vmatprep.subr.bf16.mxu0 0
        %2673 = vmatpush1.bf16.msra.mxu0 0
        %2674 = vmatprep.subr.bf16.mxu0 0
        %2675 = vmatpush1.bf16.msra.mxu0 0
        %2676 = vmatprep.subr.bf16.mxu0 0
        %2677 = vmatpush1.bf16.msra.mxu0 0
        %2678 = vmatprep.subr.bf16.mxu0 0
        %2679 = vmatpush1.bf16.msra.mxu0 0
        %2680 = vmatprep.subr.bf16.mxu0 0
        %2681 = vmatpush1.bf16.msra.mxu0 0
        %2682 = vmatprep.subr.bf16.mxu0 0
        %2683 = vmatpush1.bf16.msra.mxu0 0
        %2684 = vmatprep.subr.bf16.mxu0 0
        %2685 = vmatpush1.bf16.msra.mxu0 0
        %2686 = vmatprep.subr.bf16.mxu0 0
        %2687 = vmatpush1.bf16.msra.mxu0 0
        %2688 = vmatprep.subr.bf16.mxu0 0
        %2689 = vmatpush1.bf16.msra.mxu0 0
        %2690 = vmatprep.subr.bf16.mxu0 0
        %2691 = vmatpush1.bf16.msra.mxu0 0
        %2692 = vmatprep.mubr.bf16.mxu0 0
        %2693 = vmatmul.mubr.bf16.gmra.mrb[0].mxu0 %v2599
        %v2694 = vpop.f32.mrb[0].mxu0
        %v2695 = vadd.f32 %v2646, %v2694
        %v2696 = vpop.f32.mrb[0].mxu0
        %v2697 = vpop.f32.mrb[0].mxu0
        %v2698 = vadd.f32 %v2646, %v2697
        %v2699 = vpop.f32.mrb[0].mxu0
        %2700 = vdwg.mxu0
        %v2701 = vpack.c.bf16 %v2573, %v2573
        %v2702 = vpack.c.bf16 %v2576, %v2576
        %v2703 = vpack.c.bf16 %v2636, %v2636
        %v2704 = vpack.c.bf16 %v2639, %v2639
        %v2706 = vsel %vm1441, %v2701, 0
        %v2709 = vsel %vm1441, %v2703, 0
        %2711 = vmatprep.subr.bf16.mxu0 0
        %2712 = vmatpush1.bf16.xpose.msra.mxu0 %v2709
        %2713 = vmatprep.subr.bf16.mxu0 0
        %2714 = vmatpush1.bf16.xpose.msra.mxu0 0
        %2715 = vmatprep.subr.bf16.mxu0 0
        %2716 = vmatpush1.bf16.xpose.msra.mxu0 0
        %2717 = vmatprep.subr.bf16.mxu0 0
        %2718 = vmatpush1.bf16.xpose.msra.mxu0 0
        %2719 = vmatprep.subr.bf16.mxu0 0
        %2720 = vmatpush1.bf16.xpose.msra.mxu0 0
        %2721 = vmatprep.subr.bf16.mxu0 0
        %2722 = vmatpush1.bf16.xpose.msra.mxu0 0
        %2723 = vmatprep.subr.bf16.mxu0 0
        %2724 = vmatpush1.bf16.xpose.msra.mxu0 0
        %2725 = vmatprep.subr.bf16.mxu0 0
        %2726 = vmatpush1.bf16.xpose.msra.mxu0 0
        %2727 = vmatprep.subr.bf16.mxu0 0
        %2728 = vmatpush1.bf16.xpose.msra.mxu0 0
        %2729 = vmatprep.subr.bf16.mxu0 0
        %2730 = vmatpush1.bf16.xpose.msra.mxu0 0
        %2731 = vmatprep.subr.bf16.mxu0 0
        %2732 = vmatpush1.bf16.xpose.msra.mxu0 0
        %2733 = vmatprep.subr.bf16.mxu0 0
        %2734 = vmatpush1.bf16.xpose.msra.mxu0 0
        %2735 = vmatprep.subr.bf16.mxu0 0
        %2736 = vmatpush1.bf16.xpose.msra.mxu0 0
        %2737 = vmatprep.subr.bf16.mxu0 0
        %2738 = vmatpush1.bf16.xpose.msra.mxu0 0
        %2739 = vmatprep.subr.bf16.mxu0 0
        %2740 = vmatpush1.bf16.xpose.msra.mxu0 0
        %2741 = vmatprep.subr.bf16.mxu0 0
        %2742 = vmatpush1.bf16.xpose.msra.mxu0 0
        %2743 = vmatprep.mubr.bf16.mxu0 0
        %2744 = vmatmul.mubr.bf16.gmra.mrb[0].mxu0 %v2706
        %v2745 = vpop.f32.mrb[0].mxu0
        %v2746 = vadd.f32 0.0, %v2745
        %v2747 = vpop.f32.mrb[0].mxu0
        %v2748 = vpop.f32.mrb[0].mxu0
        %v2749 = vpop.f32.mrb[0].mxu0
        %2750 = vdwg.mxu0
        %v2752 = vsel %vm1441, %v2702, 0
        %v2755 = vsel %vm1441, %v2704, 0
        %2757 = vmatprep.subr.bf16.mxu0 0
        %2758 = vmatpush1.bf16.xpose.msra.mxu0 %v2755
        %2759 = vmatprep.subr.bf16.mxu0 0
        %2760 = vmatpush1.bf16.xpose.msra.mxu0 0
        %2761 = vmatprep.subr.bf16.mxu0 0
        %2762 = vmatpush1.bf16.xpose.msra.mxu0 0
        %2763 = vmatprep.subr.bf16.mxu0 0
        %2764 = vmatpush1.bf16.xpose.msra.mxu0 0
        %2765 = vmatprep.subr.bf16.mxu0 0
        %2766 = vmatpush1.bf16.xpose.msra.mxu0 0
        %2767 = vmatprep.subr.bf16.mxu0 0
        %2768 = vmatpush1.bf16.xpose.msra.mxu0 0
        %2769 = vmatprep.subr.bf16.mxu0 0
        %2770 = vmatpush1.bf16.xpose.msra.mxu0 0
        %2771 = vmatprep.subr.bf16.mxu0 0
        %2772 = vmatpush1.bf16.xpose.msra.mxu0 0
        %2773 = vmatprep.subr.bf16.mxu0 0
        %2774 = vmatpush1.bf16.xpose.msra.mxu0 0
        %2775 = vmatprep.subr.bf16.mxu0 0
        %2776 = vmatpush1.bf16.xpose.msra.mxu0 0
        %2777 = vmatprep.subr.bf16.mxu0 0
        %2778 = vmatpush1.bf16.xpose.msra.mxu0 0
        %2779 = vmatprep.subr.bf16.mxu0 0
        %2780 = vmatpush1.bf16.xpose.msra.mxu0 0
        %2781 = vmatprep.subr.bf16.mxu0 0
        %2782 = vmatpush1.bf16.xpose.msra.mxu0 0
        %2783 = vmatprep.subr.bf16.mxu0 0
        %2784 = vmatpush1.bf16.xpose.msra.mxu0 0
        %2785 = vmatprep.subr.bf16.mxu0 0
        %2786 = vmatpush1.bf16.xpose.msra.mxu0 0
        %2787 = vmatprep.subr.bf16.mxu0 0
        %2788 = vmatpush1.bf16.xpose.msra.mxu0 0
        %2789 = vmatprep.mubr.bf16.mxu0 0
        %2790 = vmatmul.mubr.bf16.gmra.mrb[0].mxu0 %v2752
        %v2791 = vpop.f32.mrb[0].mxu0
        %v2792 = vadd.f32 0.0, %v2791
        %v2793 = vpop.f32.mrb[0].mxu0
        %v2794 = vpop.f32.mrb[0].mxu0
        %v2795 = vpop.f32.mrb[0].mxu0
        %2796 = vdwg.mxu0
        %v2797 = vmul.f32 %v2746, 0.35355338
        %v2798 = vmul.f32 %v2792, 0.35355338
        %v2799 = vsel %vm1441, %v2797, -inf
        %2800 = vmax.xlane.f32.xlu0 %v2799
        %v2801 = vpop.xlane.xlu0 %2800
        %v2802 = vsel %vm1441, %v2798, -inf
        %2803 = vmax.xlane.f32.xlu0 %v2802
        %v2804 = vpop.xlane.xlu0 %2803
        %v2805 = vsub.f32 %v2797, %v2801
        %v2806 = vsub.f32 %v2798, %v2804
        %v2807 = vmul.f32 %v2805, 1.442695
        %v2808 = vpow.pop %v2807
        %v2809 = vmul.f32 %v2806, 1.442695
        %v2810 = vpow.pop %v2809
        %v2811 = vsel %vm1441, %v2808, 0.0
        %2812 = vadd.xlane.f32.xlu0 %v2811
        %v2813 = vpop.xlane.xlu0 %2812
        %v2814 = vsel %vm1441, %v2810, 0.0
        %2815 = vadd.xlane.f32.xlu0 %v2814
        %v2816 = vpop.xlane.xlu0 %2815
        %v2817 = vrcp.pop %v2813
        %v2818 = vrcp.pop %v2816
        %v2819 = vmul.f32 %v2808, %v2817
        %v2820 = vmul.f32 %v2810, %v2818
        %v2821 = vpack.c.bf16 %v2819, %v2819
        %v2822 = vpack.c.bf16 %v2820, %v2820
        %v2823 = vpack.c.bf16 %v2695, %v2695
        %v2824 = vpack.c.bf16 %v2698, %v2698
        %v2826 = vsel %vm1441, %v2821, 0
        %v2829 = vsel %vm1565, %v2823, 0
        %2831 = vmatprep.subr.bf16.mxu0 0
        %2832 = vmatpush1.bf16.msra.mxu0 %v2829
        %2833 = vmatprep.subr.bf16.mxu0 0
        %2834 = vmatpush1.bf16.msra.mxu0 0
        %2835 = vmatprep.subr.bf16.mxu0 0
        %2836 = vmatpush1.bf16.msra.mxu0 0
        %2837 = vmatprep.subr.bf16.mxu0 0
        %2838 = vmatpush1.bf16.msra.mxu0 0
        %2839 = vmatprep.subr.bf16.mxu0 0
        %2840 = vmatpush1.bf16.msra.mxu0 0
        %2841 = vmatprep.subr.bf16.mxu0 0
        %2842 = vmatpush1.bf16.msra.mxu0 0
        %2843 = vmatprep.subr.bf16.mxu0 0
        %2844 = vmatpush1.bf16.msra.mxu0 0
        %2845 = vmatprep.subr.bf16.mxu0 0
        %2846 = vmatpush1.bf16.msra.mxu0 0
        %2847 = vmatprep.subr.bf16.mxu0 0
        %2848 = vmatpush1.bf16.msra.mxu0 0
        %2849 = vmatprep.subr.bf16.mxu0 0
        %2850 = vmatpush1.bf16.msra.mxu0 0
        %2851 = vmatprep.subr.bf16.mxu0 0
        %2852 = vmatpush1.bf16.msra.mxu0 0
        %2853 = vmatprep.subr.bf16.mxu0 0
        %2854 = vmatpush1.bf16.msra.mxu0 0
        %2855 = vmatprep.subr.bf16.mxu0 0
        %2856 = vmatpush1.bf16.msra.mxu0 0
        %2857 = vmatprep.subr.bf16.mxu0 0
        %2858 = vmatpush1.bf16.msra.mxu0 0
        %2859 = vmatprep.subr.bf16.mxu0 0
        %2860 = vmatpush1.bf16.msra.mxu0 0
        %2861 = vmatprep.subr.bf16.mxu0 0
        %2862 = vmatpush1.bf16.msra.mxu0 0
        %2863 = vmatprep.mubr.bf16.mxu0 0
        %2864 = vmatmul.mubr.bf16.gmra.mrb[0].mxu0 %v2826
        %v2865 = vpop.f32.mrb[0].mxu0
        %v2866 = vadd.f32 0.0, %v2865
        %v2867 = vpop.f32.mrb[0].mxu0
        %v2868 = vpop.f32.mrb[0].mxu0
        %v2869 = vpop.f32.mrb[0].mxu0
        %2870 = vdwg.mxu0
        %v2872 = vsel %vm1441, %v2822, 0
        %v2875 = vsel %vm1565, %v2824, 0
        %2877 = vmatprep.subr.bf16.mxu0 0
        %2878 = vmatpush1.bf16.msra.mxu0 %v2875
        %2879 = vmatprep.subr.bf16.mxu0 0
        %2880 = vmatpush1.bf16.msra.mxu0 0
        %2881 = vmatprep.subr.bf16.mxu0 0
        %2882 = vmatpush1.bf16.msra.mxu0 0
        %2883 = vmatprep.subr.bf16.mxu0 0
        %2884 = vmatpush1.bf16.msra.mxu0 0
        %2885 = vmatprep.subr.bf16.mxu0 0
        %2886 = vmatpush1.bf16.msra.mxu0 0
        %2887 = vmatprep.subr.bf16.mxu0 0
        %2888 = vmatpush1.bf16.msra.mxu0 0
        %2889 = vmatprep.subr.bf16.mxu0 0
        %2890 = vmatpush1.bf16.msra.mxu0 0
        %2891 = vmatprep.subr.bf16.mxu0 0
        %2892 = vmatpush1.bf16.msra.mxu0 0
        %2893 = vmatprep.subr.bf16.mxu0 0
        %2894 = vmatpush1.bf16.msra.mxu0 0
        %2895 = vmatprep.subr.bf16.mxu0 0
        %2896 = vmatpush1.bf16.msra.mxu0 0
        %2897 = vmatprep.subr.bf16.mxu0 0
        %2898 = vmatpush1.bf16.msra.mxu0 0
        %2899 = vmatprep.subr.bf16.mxu0 0
        %2900 = vmatpush1.bf16.msra.mxu0 0
        %2901 = vmatprep.subr.bf16.mxu0 0
        %2902 = vmatpush1.bf16.msra.mxu0 0
        %2903 = vmatprep.subr.bf16.mxu0 0
        %2904 = vmatpush1.bf16.msra.mxu0 0
        %2905 = vmatprep.subr.bf16.mxu0 0
        %2906 = vmatpush1.bf16.msra.mxu0 0
        %2907 = vmatprep.subr.bf16.mxu0 0
        %2908 = vmatpush1.bf16.msra.mxu0 0
        %2909 = vmatprep.mubr.bf16.mxu0 0
        %2910 = vmatmul.mubr.bf16.gmra.mrb[0].mxu0 %v2872
        %v2911 = vpop.f32.mrb[0].mxu0
        %v2912 = vadd.f32 0.0, %v2911
        %v2913 = vpop.f32.mrb[0].mxu0
        %v2914 = vpop.f32.mrb[0].mxu0
        %v2915 = vpop.f32.mrb[0].mxu0
        %2916 = vdwg.mxu0
        %2918 = vrot.lane.b32.xlu0 %v2701, 120
        %v2919 = vpop.permute.xlu0 %2918
        %2921 = vrot.lane.b32.xlu0 %v2703, 120
        %v2922 = vpop.permute.xlu0 %2921
        %v2924 = vsel %vm1441, %v2919, 0
        %v2927 = vsel %vm1441, %v2922, 0
        %2929 = vmatprep.subr.bf16.mxu0 0
        %2930 = vmatpush1.bf16.xpose.msra.mxu0 %v2927
        %2931 = vmatprep.subr.bf16.mxu0 0
        %2932 = vmatpush1.bf16.xpose.msra.mxu0 0
        %2933 = vmatprep.subr.bf16.mxu0 0
        %2934 = vmatpush1.bf16.xpose.msra.mxu0 0
        %2935 = vmatprep.subr.bf16.mxu0 0
        %2936 = vmatpush1.bf16.xpose.msra.mxu0 0
        %2937 = vmatprep.subr.bf16.mxu0 0
        %2938 = vmatpush1.bf16.xpose.msra.mxu0 0
        %2939 = vmatprep.subr.bf16.mxu0 0
        %2940 = vmatpush1.bf16.xpose.msra.mxu0 0
        %2941 = vmatprep.subr.bf16.mxu0 0
        %2942 = vmatpush1.bf16.xpose.msra.mxu0 0
        %2943 = vmatprep.subr.bf16.mxu0 0
        %2944 = vmatpush1.bf16.xpose.msra.mxu0 0
        %2945 = vmatprep.subr.bf16.mxu0 0
        %2946 = vmatpush1.bf16.xpose.msra.mxu0 0
        %2947 = vmatprep.subr.bf16.mxu0 0
        %2948 = vmatpush1.bf16.xpose.msra.mxu0 0
        %2949 = vmatprep.subr.bf16.mxu0 0
        %2950 = vmatpush1.bf16.xpose.msra.mxu0 0
        %2951 = vmatprep.subr.bf16.mxu0 0
        %2952 = vmatpush1.bf16.xpose.msra.mxu0 0
        %2953 = vmatprep.subr.bf16.mxu0 0
        %2954 = vmatpush1.bf16.xpose.msra.mxu0 0
        %2955 = vmatprep.subr.bf16.mxu0 0
        %2956 = vmatpush1.bf16.xpose.msra.mxu0 0
        %2957 = vmatprep.subr.bf16.mxu0 0
        %2958 = vmatpush1.bf16.xpose.msra.mxu0 0
        %2959 = vmatprep.subr.bf16.mxu0 0
        %2960 = vmatpush1.bf16.xpose.msra.mxu0 0
        %2961 = vmatprep.mubr.bf16.mxu0 0
        %2962 = vmatmul.mubr.bf16.gmra.mrb[0].mxu0 %v2924
        %v2963 = vpop.f32.mrb[0].mxu0
        %v2964 = vadd.f32 0.0, %v2963
        %v2965 = vpop.f32.mrb[0].mxu0
        %v2966 = vpop.f32.mrb[0].mxu0
        %v2967 = vpop.f32.mrb[0].mxu0
        %2968 = vdwg.mxu0
        %2970 = vrot.lane.b32.xlu0 %v2702, 120
        %v2971 = vpop.permute.xlu0 %2970
        %2973 = vrot.lane.b32.xlu0 %v2704, 120
        %v2974 = vpop.permute.xlu0 %2973
        %v2976 = vsel %vm1441, %v2971, 0
        %v2979 = vsel %vm1441, %v2974, 0
        %2981 = vmatprep.subr.bf16.mxu0 0
        %2982 = vmatpush1.bf16.xpose.msra.mxu0 %v2979
        %2983 = vmatprep.subr.bf16.mxu0 0
        %2984 = vmatpush1.bf16.xpose.msra.mxu0 0
        %2985 = vmatprep.subr.bf16.mxu0 0
        %2986 = vmatpush1.bf16.xpose.msra.mxu0 0
        %2987 = vmatprep.subr.bf16.mxu0 0
        %2988 = vmatpush1.bf16.xpose.msra.mxu0 0
        %2989 = vmatprep.subr.bf16.mxu0 0
        %2990 = vmatpush1.bf16.xpose.msra.mxu0 0
        %2991 = vmatprep.subr.bf16.mxu0 0
        %2992 = vmatpush1.bf16.xpose.msra.mxu0 0
        %2993 = vmatprep.subr.bf16.mxu0 0
        %2994 = vmatpush1.bf16.xpose.msra.mxu0 0
        %2995 = vmatprep.subr.bf16.mxu0 0
        %2996 = vmatpush1.bf16.xpose.msra.mxu0 0
        %2997 = vmatprep.subr.bf16.mxu0 0
        %2998 = vmatpush1.bf16.xpose.msra.mxu0 0
        %2999 = vmatprep.subr.bf16.mxu0 0
        %3000 = vmatpush1.bf16.xpose.msra.mxu0 0
        %3001 = vmatprep.subr.bf16.mxu0 0
        %3002 = vmatpush1.bf16.xpose.msra.mxu0 0
        %3003 = vmatprep.subr.bf16.mxu0 0
        %3004 = vmatpush1.bf16.xpose.msra.mxu0 0
        %3005 = vmatprep.subr.bf16.mxu0 0
        %3006 = vmatpush1.bf16.xpose.msra.mxu0 0
        %3007 = vmatprep.subr.bf16.mxu0 0
        %3008 = vmatpush1.bf16.xpose.msra.mxu0 0
        %3009 = vmatprep.subr.bf16.mxu0 0
        %3010 = vmatpush1.bf16.xpose.msra.mxu0 0
        %3011 = vmatprep.subr.bf16.mxu0 0
        %3012 = vmatpush1.bf16.xpose.msra.mxu0 0
        %3013 = vmatprep.mubr.bf16.mxu0 0
        %3014 = vmatmul.mubr.bf16.gmra.mrb[0].mxu0 %v2976
        %v3015 = vpop.f32.mrb[0].mxu0
        %v3016 = vadd.f32 0.0, %v3015
        %v3017 = vpop.f32.mrb[0].mxu0
        %v3018 = vpop.f32.mrb[0].mxu0
        %v3019 = vpop.f32.mrb[0].mxu0
        %3020 = vdwg.mxu0
        %v3021 = vmul.f32 %v2964, 0.35355338
        %v3022 = vmul.f32 %v3016, 0.35355338
        %v3023 = vsel %vm1441, %v3021, -inf
        %3024 = vmax.xlane.f32.xlu0 %v3023
        %v3025 = vpop.xlane.xlu0 %3024
        %v3026 = vsel %vm1441, %v3022, -inf
        %3027 = vmax.xlane.f32.xlu0 %v3026
        %v3028 = vpop.xlane.xlu0 %3027
        %v3029 = vsub.f32 %v3021, %v3025
        %v3030 = vsub.f32 %v3022, %v3028
        %v3031 = vmul.f32 %v3029, 1.442695
        %v3032 = vpow.pop %v3031
        %v3033 = vmul.f32 %v3030, 1.442695
        %v3034 = vpow.pop %v3033
        %v3035 = vsel %vm1441, %v3032, 0.0
        %3036 = vadd.xlane.f32.xlu0 %v3035
        %v3037 = vpop.xlane.xlu0 %3036
        %v3038 = vsel %vm1441, %v3034, 0.0
        %3039 = vadd.xlane.f32.xlu0 %v3038
        %v3040 = vpop.xlane.xlu0 %3039
        %v3041 = vrcp.pop %v3037
        %v3042 = vrcp.pop %v3040
        %v3043 = vmul.f32 %v3032, %v3041
        %v3044 = vmul.f32 %v3034, %v3042
        %v3045 = vpack.c.bf16 %v3043, %v3043
        %v3046 = vpack.c.bf16 %v3044, %v3044
        %3048 = vrot.lane.b32.xlu0 %v2823, 120
        %v3049 = vpop.permute.xlu0 %3048
        %v3051 = vsel %vm1441, %v3045, 0
        %v3054 = vsel %vm1565, %v3049, 0
        %3056 = vmatprep.subr.bf16.mxu0 0
        %3057 = vmatpush1.bf16.msra.mxu0 %v3054
        %3058 = vmatprep.subr.bf16.mxu0 0
        %3059 = vmatpush1.bf16.msra.mxu0 0
        %3060 = vmatprep.subr.bf16.mxu0 0
        %3061 = vmatpush1.bf16.msra.mxu0 0
        %3062 = vmatprep.subr.bf16.mxu0 0
        %3063 = vmatpush1.bf16.msra.mxu0 0
        %3064 = vmatprep.subr.bf16.mxu0 0
        %3065 = vmatpush1.bf16.msra.mxu0 0
        %3066 = vmatprep.subr.bf16.mxu0 0
        %3067 = vmatpush1.bf16.msra.mxu0 0
        %3068 = vmatprep.subr.bf16.mxu0 0
        %3069 = vmatpush1.bf16.msra.mxu0 0
        %3070 = vmatprep.subr.bf16.mxu0 0
        %3071 = vmatpush1.bf16.msra.mxu0 0
        %3072 = vmatprep.subr.bf16.mxu0 0
        %3073 = vmatpush1.bf16.msra.mxu0 0
        %3074 = vmatprep.subr.bf16.mxu0 0
        %3075 = vmatpush1.bf16.msra.mxu0 0
        %3076 = vmatprep.subr.bf16.mxu0 0
        %3077 = vmatpush1.bf16.msra.mxu0 0
        %3078 = vmatprep.subr.bf16.mxu0 0
        %3079 = vmatpush1.bf16.msra.mxu0 0
        %3080 = vmatprep.subr.bf16.mxu0 0
        %3081 = vmatpush1.bf16.msra.mxu0 0
        %3082 = vmatprep.subr.bf16.mxu0 0
        %3083 = vmatpush1.bf16.msra.mxu0 0
        %3084 = vmatprep.subr.bf16.mxu0 0
        %3085 = vmatpush1.bf16.msra.mxu0 0
        %3086 = vmatprep.subr.bf16.mxu0 0
        %3087 = vmatpush1.bf16.msra.mxu0 0
        %3088 = vmatprep.mubr.bf16.mxu0 0
        %3089 = vmatmul.mubr.bf16.gmra.mrb[0].mxu0 %v3051
        %v3090 = vpop.f32.mrb[0].mxu0
        %v3091 = vadd.f32 0.0, %v3090
        %v3092 = vpop.f32.mrb[0].mxu0
        %v3093 = vpop.f32.mrb[0].mxu0
        %v3094 = vpop.f32.mrb[0].mxu0
        %3095 = vdwg.mxu0
        %3097 = vrot.lane.b32.xlu0 %v2824, 120
        %v3098 = vpop.permute.xlu0 %3097
        %v3100 = vsel %vm1441, %v3046, 0
        %v3103 = vsel %vm1565, %v3098, 0
        %3105 = vmatprep.subr.bf16.mxu0 0
        %3106 = vmatpush1.bf16.msra.mxu0 %v3103
        %3107 = vmatprep.subr.bf16.mxu0 0
        %3108 = vmatpush1.bf16.msra.mxu0 0
        %3109 = vmatprep.subr.bf16.mxu0 0
        %3110 = vmatpush1.bf16.msra.mxu0 0
        %3111 = vmatprep.subr.bf16.mxu0 0
        %3112 = vmatpush1.bf16.msra.mxu0 0
        %3113 = vmatprep.subr.bf16.mxu0 0
        %3114 = vmatpush1.bf16.msra.mxu0 0
        %3115 = vmatprep.subr.bf16.mxu0 0
        %3116 = vmatpush1.bf16.msra.mxu0 0
        %3117 = vmatprep.subr.bf16.mxu0 0
        %3118 = vmatpush1.bf16.msra.mxu0 0
        %3119 = vmatprep.subr.bf16.mxu0 0
        %3120 = vmatpush1.bf16.msra.mxu0 0
        %3121 = vmatprep.subr.bf16.mxu0 0
        %3122 = vmatpush1.bf16.msra.mxu0 0
        %3123 = vmatprep.subr.bf16.mxu0 0
        %3124 = vmatpush1.bf16.msra.mxu0 0
        %3125 = vmatprep.subr.bf16.mxu0 0
        %3126 = vmatpush1.bf16.msra.mxu0 0
        %3127 = vmatprep.subr.bf16.mxu0 0
        %3128 = vmatpush1.bf16.msra.mxu0 0
        %3129 = vmatprep.subr.bf16.mxu0 0
        %3130 = vmatpush1.bf16.msra.mxu0 0
        %3131 = vmatprep.subr.bf16.mxu0 0
        %3132 = vmatpush1.bf16.msra.mxu0 0
        %3133 = vmatprep.subr.bf16.mxu0 0
        %3134 = vmatpush1.bf16.msra.mxu0 0
        %3135 = vmatprep.subr.bf16.mxu0 0
        %3136 = vmatpush1.bf16.msra.mxu0 0
        %3137 = vmatprep.mubr.bf16.mxu0 0
        %3138 = vmatmul.mubr.bf16.gmra.mrb[0].mxu0 %v3100
        %v3139 = vpop.f32.mrb[0].mxu0
        %v3140 = vadd.f32 0.0, %v3139
        %v3141 = vpop.f32.mrb[0].mxu0
        %v3142 = vpop.f32.mrb[0].mxu0
        %v3143 = vpop.f32.mrb[0].mxu0
        %3144 = vdwg.mxu0
        %3145 = vrot.lane.b32.xlu0 %v2701, 112
        %v3146 = vpop.permute.xlu0 %3145
        %3147 = vrot.lane.b32.xlu0 %v2703, 112
        %v3148 = vpop.permute.xlu0 %3147
        %v3150 = vsel %vm1441, %v3146, 0
        %v3153 = vsel %vm1441, %v3148, 0
        %3155 = vmatprep.subr.bf16.mxu0 0
        %3156 = vmatpush1.bf16.xpose.msra.mxu0 %v3153
        %3157 = vmatprep.subr.bf16.mxu0 0
        %3158 = vmatpush1.bf16.xpose.msra.mxu0 0
        %3159 = vmatprep.subr.bf16.mxu0 0
        %3160 = vmatpush1.bf16.xpose.msra.mxu0 0
        %3161 = vmatprep.subr.bf16.mxu0 0
        %3162 = vmatpush1.bf16.xpose.msra.mxu0 0
        %3163 = vmatprep.subr.bf16.mxu0 0
        %3164 = vmatpush1.bf16.xpose.msra.mxu0 0
        %3165 = vmatprep.subr.bf16.mxu0 0
        %3166 = vmatpush1.bf16.xpose.msra.mxu0 0
        %3167 = vmatprep.subr.bf16.mxu0 0
        %3168 = vmatpush1.bf16.xpose.msra.mxu0 0
        %3169 = vmatprep.subr.bf16.mxu0 0
        %3170 = vmatpush1.bf16.xpose.msra.mxu0 0
        %3171 = vmatprep.subr.bf16.mxu0 0
        %3172 = vmatpush1.bf16.xpose.msra.mxu0 0
        %3173 = vmatprep.subr.bf16.mxu0 0
        %3174 = vmatpush1.bf16.xpose.msra.mxu0 0
        %3175 = vmatprep.subr.bf16.mxu0 0
        %3176 = vmatpush1.bf16.xpose.msra.mxu0 0
        %3177 = vmatprep.subr.bf16.mxu0 0
        %3178 = vmatpush1.bf16.xpose.msra.mxu0 0
        %3179 = vmatprep.subr.bf16.mxu0 0
        %3180 = vmatpush1.bf16.xpose.msra.mxu0 0
        %3181 = vmatprep.subr.bf16.mxu0 0
        %3182 = vmatpush1.bf16.xpose.msra.mxu0 0
        %3183 = vmatprep.subr.bf16.mxu0 0
        %3184 = vmatpush1.bf16.xpose.msra.mxu0 0
        %3185 = vmatprep.subr.bf16.mxu0 0
        %3186 = vmatpush1.bf16.xpose.msra.mxu0 0
        %3187 = vmatprep.mubr.bf16.mxu0 0
        %3188 = vmatmul.mubr.bf16.gmra.mrb[0].mxu0 %v3150
        %v3189 = vpop.f32.mrb[0].mxu0
        %v3190 = vadd.f32 0.0, %v3189
        %v3191 = vpop.f32.mrb[0].mxu0
        %v3192 = vpop.f32.mrb[0].mxu0
        %v3193 = vpop.f32.mrb[0].mxu0
        %3194 = vdwg.mxu0
        %3195 = vrot.lane.b32.xlu0 %v2702, 112
        %v3196 = vpop.permute.xlu0 %3195
        %3197 = vrot.lane.b32.xlu0 %v2704, 112
        %v3198 = vpop.permute.xlu0 %3197
        %v3200 = vsel %vm1441, %v3196, 0
        %v3203 = vsel %vm1441, %v3198, 0
        %3205 = vmatprep.subr.bf16.mxu0 0
        %3206 = vmatpush1.bf16.xpose.msra.mxu0 %v3203
        %3207 = vmatprep.subr.bf16.mxu0 0
        %3208 = vmatpush1.bf16.xpose.msra.mxu0 0
        %3209 = vmatprep.subr.bf16.mxu0 0
        %3210 = vmatpush1.bf16.xpose.msra.mxu0 0
        %3211 = vmatprep.subr.bf16.mxu0 0
        %3212 = vmatpush1.bf16.xpose.msra.mxu0 0
        %3213 = vmatprep.subr.bf16.mxu0 0
        %3214 = vmatpush1.bf16.xpose.msra.mxu0 0
        %3215 = vmatprep.subr.bf16.mxu0 0
        %3216 = vmatpush1.bf16.xpose.msra.mxu0 0
        %3217 = vmatprep.subr.bf16.mxu0 0
        %3218 = vmatpush1.bf16.xpose.msra.mxu0 0
        %3219 = vmatprep.subr.bf16.mxu0 0
        %3220 = vmatpush1.bf16.xpose.msra.mxu0 0
        %3221 = vmatprep.subr.bf16.mxu0 0
        %3222 = vmatpush1.bf16.xpose.msra.mxu0 0
        %3223 = vmatprep.subr.bf16.mxu0 0
        %3224 = vmatpush1.bf16.xpose.msra.mxu0 0
        %3225 = vmatprep.subr.bf16.mxu0 0
        %3226 = vmatpush1.bf16.xpose.msra.mxu0 0
        %3227 = vmatprep.subr.bf16.mxu0 0
        %3228 = vmatpush1.bf16.xpose.msra.mxu0 0
        %3229 = vmatprep.subr.bf16.mxu0 0
        %3230 = vmatpush1.bf16.xpose.msra.mxu0 0
        %3231 = vmatprep.subr.bf16.mxu0 0
        %3232 = vmatpush1.bf16.xpose.msra.mxu0 0
        %3233 = vmatprep.subr.bf16.mxu0 0
        %3234 = vmatpush1.bf16.xpose.msra.mxu0 0
        %3235 = vmatprep.subr.bf16.mxu0 0
        %3236 = vmatpush1.bf16.xpose.msra.mxu0 0
        %3237 = vmatprep.mubr.bf16.mxu0 0
        %3238 = vmatmul.mubr.bf16.gmra.mrb[0].mxu0 %v3200
        %v3239 = vpop.f32.mrb[0].mxu0
        %v3240 = vadd.f32 0.0, %v3239
        %v3241 = vpop.f32.mrb[0].mxu0
        %v3242 = vpop.f32.mrb[0].mxu0
        %v3243 = vpop.f32.mrb[0].mxu0
        %3244 = vdwg.mxu0
        %v3245 = vmul.f32 %v3190, 0.35355338
        %v3246 = vmul.f32 %v3240, 0.35355338
        %v3247 = vsel %vm1441, %v3245, -inf
        %3248 = vmax.xlane.f32.xlu0 %v3247
        %v3249 = vpop.xlane.xlu0 %3248
        %v3250 = vsel %vm1441, %v3246, -inf
        %3251 = vmax.xlane.f32.xlu0 %v3250
        %v3252 = vpop.xlane.xlu0 %3251
        %v3253 = vsub.f32 %v3245, %v3249
        %v3254 = vsub.f32 %v3246, %v3252
        %v3255 = vmul.f32 %v3253, 1.442695
        %v3256 = vpow.pop %v3255
        %v3257 = vmul.f32 %v3254, 1.442695
        %v3258 = vpow.pop %v3257
        %v3259 = vsel %vm1441, %v3256, 0.0
        %3260 = vadd.xlane.f32.xlu0 %v3259
        %v3261 = vpop.xlane.xlu0 %3260
        %v3262 = vsel %vm1441, %v3258, 0.0
        %3263 = vadd.xlane.f32.xlu0 %v3262
        %v3264 = vpop.xlane.xlu0 %3263
        %v3265 = vrcp.pop %v3261
        %v3266 = vrcp.pop %v3264
        %v3267 = vmul.f32 %v3256, %v3265
        %v3268 = vmul.f32 %v3258, %v3266
        %v3269 = vpack.c.bf16 %v3267, %v3267
        %v3270 = vpack.c.bf16 %v3268, %v3268
        %3271 = vrot.lane.b32.xlu0 %v2823, 112
        %v3272 = vpop.permute.xlu0 %3271
        %v3274 = vsel %vm1441, %v3269, 0
        %v3277 = vsel %vm1565, %v3272, 0
        %3279 = vmatprep.subr.bf16.mxu0 0
        %3280 = vmatpush1.bf16.msra.mxu0 %v3277
        %3281 = vmatprep.subr.bf16.mxu0 0
        %3282 = vmatpush1.bf16.msra.mxu0 0
        %3283 = vmatprep.subr.bf16.mxu0 0
        %3284 = vmatpush1.bf16.msra.mxu0 0
        %3285 = vmatprep.subr.bf16.mxu0 0
        %3286 = vmatpush1.bf16.msra.mxu0 0
        %3287 = vmatprep.subr.bf16.mxu0 0
        %3288 = vmatpush1.bf16.msra.mxu0 0
        %3289 = vmatprep.subr.bf16.mxu0 0
        %3290 = vmatpush1.bf16.msra.mxu0 0
        %3291 = vmatprep.subr.bf16.mxu0 0
        %3292 = vmatpush1.bf16.msra.mxu0 0
        %3293 = vmatprep.subr.bf16.mxu0 0
        %3294 = vmatpush1.bf16.msra.mxu0 0
        %3295 = vmatprep.subr.bf16.mxu0 0
        %3296 = vmatpush1.bf16.msra.mxu0 0
        %3297 = vmatprep.subr.bf16.mxu0 0
        %3298 = vmatpush1.bf16.msra.mxu0 0
        %3299 = vmatprep.subr.bf16.mxu0 0
        %3300 = vmatpush1.bf16.msra.mxu0 0
        %3301 = vmatprep.subr.bf16.mxu0 0
        %3302 = vmatpush1.bf16.msra.mxu0 0
        %3303 = vmatprep.subr.bf16.mxu0 0
        %3304 = vmatpush1.bf16.msra.mxu0 0
        %3305 = vmatprep.subr.bf16.mxu0 0
        %3306 = vmatpush1.bf16.msra.mxu0 0
        %3307 = vmatprep.subr.bf16.mxu0 0
        %3308 = vmatpush1.bf16.msra.mxu0 0
        %3309 = vmatprep.subr.bf16.mxu0 0
        %3310 = vmatpush1.bf16.msra.mxu0 0
        %3311 = vmatprep.mubr.bf16.mxu0 0
        %3312 = vmatmul.mubr.bf16.gmra.mrb[0].mxu0 %v3274
        %v3313 = vpop.f32.mrb[0].mxu0
        %v3314 = vadd.f32 0.0, %v3313
        %v3315 = vpop.f32.mrb[0].mxu0
        %v3316 = vpop.f32.mrb[0].mxu0
        %v3317 = vpop.f32.mrb[0].mxu0
        %3318 = vdwg.mxu0
        %3319 = vrot.lane.b32.xlu0 %v2824, 112
        %v3320 = vpop.permute.xlu0 %3319
        %v3322 = vsel %vm1441, %v3270, 0
        %v3325 = vsel %vm1565, %v3320, 0
        %3327 = vmatprep.subr.bf16.mxu0 0
        %3328 = vmatpush1.bf16.msra.mxu0 %v3325
        %3329 = vmatprep.subr.bf16.mxu0 0
        %3330 = vmatpush1.bf16.msra.mxu0 0
        %3331 = vmatprep.subr.bf16.mxu0 0
        %3332 = vmatpush1.bf16.msra.mxu0 0
        %3333 = vmatprep.subr.bf16.mxu0 0
        %3334 = vmatpush1.bf16.msra.mxu0 0
        %3335 = vmatprep.subr.bf16.mxu0 0
        %3336 = vmatpush1.bf16.msra.mxu0 0
        %3337 = vmatprep.subr.bf16.mxu0 0
        %3338 = vmatpush1.bf16.msra.mxu0 0
        %3339 = vmatprep.subr.bf16.mxu0 0
        %3340 = vmatpush1.bf16.msra.mxu0 0
        %3341 = vmatprep.subr.bf16.mxu0 0
        %3342 = vmatpush1.bf16.msra.mxu0 0
        %3343 = vmatprep.subr.bf16.mxu0 0
        %3344 = vmatpush1.bf16.msra.mxu0 0
        %3345 = vmatprep.subr.bf16.mxu0 0
        %3346 = vmatpush1.bf16.msra.mxu0 0
        %3347 = vmatprep.subr.bf16.mxu0 0
        %3348 = vmatpush1.bf16.msra.mxu0 0
        %3349 = vmatprep.subr.bf16.mxu0 0
        %3350 = vmatpush1.bf16.msra.mxu0 0
        %3351 = vmatprep.subr.bf16.mxu0 0
        %3352 = vmatpush1.bf16.msra.mxu0 0
        %3353 = vmatprep.subr.bf16.mxu0 0
        %3354 = vmatpush1.bf16.msra.mxu0 0
        %3355 = vmatprep.subr.bf16.mxu0 0
        %3356 = vmatpush1.bf16.msra.mxu0 0
        %3357 = vmatprep.subr.bf16.mxu0 0
        %3358 = vmatpush1.bf16.msra.mxu0 0
        %3359 = vmatprep.mubr.bf16.mxu0 0
        %3360 = vmatmul.mubr.bf16.gmra.mrb[0].mxu0 %v3322
        %v3361 = vpop.f32.mrb[0].mxu0
        %v3362 = vadd.f32 0.0, %v3361
        %v3363 = vpop.f32.mrb[0].mxu0
        %v3364 = vpop.f32.mrb[0].mxu0
        %v3365 = vpop.f32.mrb[0].mxu0
        %3366 = vdwg.mxu0
        %3367 = vrot.lane.b32.xlu0 %v2701, 104
        %v3368 = vpop.permute.xlu0 %3367
        %3369 = vrot.lane.b32.xlu0 %v2703, 104
        %v3370 = vpop.permute.xlu0 %3369
        %v3372 = vsel %vm1441, %v3368, 0
        %v3375 = vsel %vm1441, %v3370, 0
        %3377 = vmatprep.subr.bf16.mxu0 0
        %3378 = vmatpush1.bf16.xpose.msra.mxu0 %v3375
        %3379 = vmatprep.subr.bf16.mxu0 0
        %3380 = vmatpush1.bf16.xpose.msra.mxu0 0
        %3381 = vmatprep.subr.bf16.mxu0 0
        %3382 = vmatpush1.bf16.xpose.msra.mxu0 0
        %3383 = vmatprep.subr.bf16.mxu0 0
        %3384 = vmatpush1.bf16.xpose.msra.mxu0 0
        %3385 = vmatprep.subr.bf16.mxu0 0
        %3386 = vmatpush1.bf16.xpose.msra.mxu0 0
        %3387 = vmatprep.subr.bf16.mxu0 0
        %3388 = vmatpush1.bf16.xpose.msra.mxu0 0
        %3389 = vmatprep.subr.bf16.mxu0 0
        %3390 = vmatpush1.bf16.xpose.msra.mxu0 0
        %3391 = vmatprep.subr.bf16.mxu0 0
        %3392 = vmatpush1.bf16.xpose.msra.mxu0 0
        %3393 = vmatprep.subr.bf16.mxu0 0
        %3394 = vmatpush1.bf16.xpose.msra.mxu0 0
        %3395 = vmatprep.subr.bf16.mxu0 0
        %3396 = vmatpush1.bf16.xpose.msra.mxu0 0
        %3397 = vmatprep.subr.bf16.mxu0 0
        %3398 = vmatpush1.bf16.xpose.msra.mxu0 0
        %3399 = vmatprep.subr.bf16.mxu0 0
        %3400 = vmatpush1.bf16.xpose.msra.mxu0 0
        %3401 = vmatprep.subr.bf16.mxu0 0
        %3402 = vmatpush1.bf16.xpose.msra.mxu0 0
        %3403 = vmatprep.subr.bf16.mxu0 0
        %3404 = vmatpush1.bf16.xpose.msra.mxu0 0
        %3405 = vmatprep.subr.bf16.mxu0 0
        %3406 = vmatpush1.bf16.xpose.msra.mxu0 0
        %3407 = vmatprep.subr.bf16.mxu0 0
        %3408 = vmatpush1.bf16.xpose.msra.mxu0 0
        %3409 = vmatprep.mubr.bf16.mxu0 0
        %3410 = vmatmul.mubr.bf16.gmra.mrb[0].mxu0 %v3372
        %v3411 = vpop.f32.mrb[0].mxu0
        %v3412 = vadd.f32 0.0, %v3411
        %v3413 = vpop.f32.mrb[0].mxu0
        %v3414 = vpop.f32.mrb[0].mxu0
        %v3415 = vpop.f32.mrb[0].mxu0
        %3416 = vdwg.mxu0
        %3417 = vrot.lane.b32.xlu0 %v2702, 104
        %v3418 = vpop.permute.xlu0 %3417
        %3419 = vrot.lane.b32.xlu0 %v2704, 104
        %v3420 = vpop.permute.xlu0 %3419
        %v3422 = vsel %vm1441, %v3418, 0
        %v3425 = vsel %vm1441, %v3420, 0
        %3427 = vmatprep.subr.bf16.mxu0 0
        %3428 = vmatpush1.bf16.xpose.msra.mxu0 %v3425
        %3429 = vmatprep.subr.bf16.mxu0 0
        %3430 = vmatpush1.bf16.xpose.msra.mxu0 0
        %3431 = vmatprep.subr.bf16.mxu0 0
        %3432 = vmatpush1.bf16.xpose.msra.mxu0 0
        %3433 = vmatprep.subr.bf16.mxu0 0
        %3434 = vmatpush1.bf16.xpose.msra.mxu0 0
        %3435 = vmatprep.subr.bf16.mxu0 0
        %3436 = vmatpush1.bf16.xpose.msra.mxu0 0
        %3437 = vmatprep.subr.bf16.mxu0 0
        %3438 = vmatpush1.bf16.xpose.msra.mxu0 0
        %3439 = vmatprep.subr.bf16.mxu0 0
        %3440 = vmatpush1.bf16.xpose.msra.mxu0 0
        %3441 = vmatprep.subr.bf16.mxu0 0
        %3442 = vmatpush1.bf16.xpose.msra.mxu0 0
        %3443 = vmatprep.subr.bf16.mxu0 0
        %3444 = vmatpush1.bf16.xpose.msra.mxu0 0
        %3445 = vmatprep.subr.bf16.mxu0 0
        %3446 = vmatpush1.bf16.xpose.msra.mxu0 0
        %3447 = vmatprep.subr.bf16.mxu0 0
        %3448 = vmatpush1.bf16.xpose.msra.mxu0 0
        %3449 = vmatprep.subr.bf16.mxu0 0
        %3450 = vmatpush1.bf16.xpose.msra.mxu0 0
        %3451 = vmatprep.subr.bf16.mxu0 0
        %3452 = vmatpush1.bf16.xpose.msra.mxu0 0
        %3453 = vmatprep.subr.bf16.mxu0 0
        %3454 = vmatpush1.bf16.xpose.msra.mxu0 0
        %3455 = vmatprep.subr.bf16.mxu0 0
        %3456 = vmatpush1.bf16.xpose.msra.mxu0 0
        %3457 = vmatprep.subr.bf16.mxu0 0
        %3458 = vmatpush1.bf16.xpose.msra.mxu0 0
        %3459 = vmatprep.mubr.bf16.mxu0 0
        %3460 = vmatmul.mubr.bf16.gmra.mrb[0].mxu0 %v3422
        %v3461 = vpop.f32.mrb[0].mxu0
        %v3462 = vadd.f32 0.0, %v3461
        %v3463 = vpop.f32.mrb[0].mxu0
        %v3464 = vpop.f32.mrb[0].mxu0
        %v3465 = vpop.f32.mrb[0].mxu0
        %3466 = vdwg.mxu0
        %v3467 = vmul.f32 %v3412, 0.35355338
        %v3468 = vmul.f32 %v3462, 0.35355338
        %v3469 = vsel %vm1441, %v3467, -inf
        %3470 = vmax.xlane.f32.xlu0 %v3469
        %v3471 = vpop.xlane.xlu0 %3470
        %v3472 = vsel %vm1441, %v3468, -inf
        %3473 = vmax.xlane.f32.xlu0 %v3472
        %v3474 = vpop.xlane.xlu0 %3473
        %v3475 = vsub.f32 %v3467, %v3471
        %v3476 = vsub.f32 %v3468, %v3474
        %v3477 = vmul.f32 %v3475, 1.442695
        %v3478 = vpow.pop %v3477
        %v3479 = vmul.f32 %v3476, 1.442695
        %v3480 = vpow.pop %v3479
        %v3481 = vsel %vm1441, %v3478, 0.0
        %3482 = vadd.xlane.f32.xlu0 %v3481
        %v3483 = vpop.xlane.xlu0 %3482
        %v3484 = vsel %vm1441, %v3480, 0.0
        %3485 = vadd.xlane.f32.xlu0 %v3484
        %v3486 = vpop.xlane.xlu0 %3485
        %v3487 = vrcp.pop %v3483
        %v3488 = vrcp.pop %v3486
        %v3489 = vmul.f32 %v3478, %v3487
        %v3490 = vmul.f32 %v3480, %v3488
        %v3491 = vpack.c.bf16 %v3489, %v3489
        %v3492 = vpack.c.bf16 %v3490, %v3490
        %3493 = vrot.lane.b32.xlu0 %v2823, 104
        %v3494 = vpop.permute.xlu0 %3493
        %v3496 = vsel %vm1441, %v3491, 0
        %v3499 = vsel %vm1565, %v3494, 0
        %3501 = vmatprep.subr.bf16.mxu0 0
        %3502 = vmatpush1.bf16.msra.mxu0 %v3499
        %3503 = vmatprep.subr.bf16.mxu0 0
        %3504 = vmatpush1.bf16.msra.mxu0 0
        %3505 = vmatprep.subr.bf16.mxu0 0
        %3506 = vmatpush1.bf16.msra.mxu0 0
        %3507 = vmatprep.subr.bf16.mxu0 0
        %3508 = vmatpush1.bf16.msra.mxu0 0
        %3509 = vmatprep.subr.bf16.mxu0 0
        %3510 = vmatpush1.bf16.msra.mxu0 0
        %3511 = vmatprep.subr.bf16.mxu0 0
        %3512 = vmatpush1.bf16.msra.mxu0 0
        %3513 = vmatprep.subr.bf16.mxu0 0
        %3514 = vmatpush1.bf16.msra.mxu0 0
        %3515 = vmatprep.subr.bf16.mxu0 0
        %3516 = vmatpush1.bf16.msra.mxu0 0
        %3517 = vmatprep.subr.bf16.mxu0 0
        %3518 = vmatpush1.bf16.msra.mxu0 0
        %3519 = vmatprep.subr.bf16.mxu0 0
        %3520 = vmatpush1.bf16.msra.mxu0 0
        %3521 = vmatprep.subr.bf16.mxu0 0
        %3522 = vmatpush1.bf16.msra.mxu0 0
        %3523 = vmatprep.subr.bf16.mxu0 0
        %3524 = vmatpush1.bf16.msra.mxu0 0
        %3525 = vmatprep.subr.bf16.mxu0 0
        %3526 = vmatpush1.bf16.msra.mxu0 0
        %3527 = vmatprep.subr.bf16.mxu0 0
        %3528 = vmatpush1.bf16.msra.mxu0 0
        %3529 = vmatprep.subr.bf16.mxu0 0
        %3530 = vmatpush1.bf16.msra.mxu0 0
        %3531 = vmatprep.subr.bf16.mxu0 0
        %3532 = vmatpush1.bf16.msra.mxu0 0
        %3533 = vmatprep.mubr.bf16.mxu0 0
        %3534 = vmatmul.mubr.bf16.gmra.mrb[0].mxu0 %v3496
        %v3535 = vpop.f32.mrb[0].mxu0
        %v3536 = vadd.f32 0.0, %v3535
        %v3537 = vpop.f32.mrb[0].mxu0
        %v3538 = vpop.f32.mrb[0].mxu0
        %v3539 = vpop.f32.mrb[0].mxu0
        %3540 = vdwg.mxu0
        %3541 = vrot.lane.b32.xlu0 %v2824, 104
        %v3542 = vpop.permute.xlu0 %3541
        %v3544 = vsel %vm1441, %v3492, 0
        %v3547 = vsel %vm1565, %v3542, 0
        %3549 = vmatprep.subr.bf16.mxu0 0
        %3550 = vmatpush1.bf16.msra.mxu0 %v3547
        %3551 = vmatprep.subr.bf16.mxu0 0
        %3552 = vmatpush1.bf16.msra.mxu0 0
        %3553 = vmatprep.subr.bf16.mxu0 0
        %3554 = vmatpush1.bf16.msra.mxu0 0
        %3555 = vmatprep.subr.bf16.mxu0 0
        %3556 = vmatpush1.bf16.msra.mxu0 0
        %3557 = vmatprep.subr.bf16.mxu0 0
        %3558 = vmatpush1.bf16.msra.mxu0 0
        %3559 = vmatprep.subr.bf16.mxu0 0
        %3560 = vmatpush1.bf16.msra.mxu0 0
        %3561 = vmatprep.subr.bf16.mxu0 0
        %3562 = vmatpush1.bf16.msra.mxu0 0
        %3563 = vmatprep.subr.bf16.mxu0 0
        %3564 = vmatpush1.bf16.msra.mxu0 0
        %3565 = vmatprep.subr.bf16.mxu0 0
        %3566 = vmatpush1.bf16.msra.mxu0 0
        %3567 = vmatprep.subr.bf16.mxu0 0
        %3568 = vmatpush1.bf16.msra.mxu0 0
        %3569 = vmatprep.subr.bf16.mxu0 0
        %3570 = vmatpush1.bf16.msra.mxu0 0
        %3571 = vmatprep.subr.bf16.mxu0 0
        %3572 = vmatpush1.bf16.msra.mxu0 0
        %3573 = vmatprep.subr.bf16.mxu0 0
        %3574 = vmatpush1.bf16.msra.mxu0 0
        %3575 = vmatprep.subr.bf16.mxu0 0
        %3576 = vmatpush1.bf16.msra.mxu0 0
        %3577 = vmatprep.subr.bf16.mxu0 0
        %3578 = vmatpush1.bf16.msra.mxu0 0
        %3579 = vmatprep.subr.bf16.mxu0 0
        %3580 = vmatpush1.bf16.msra.mxu0 0
        %3581 = vmatprep.mubr.bf16.mxu0 0
        %3582 = vmatmul.mubr.bf16.gmra.mrb[0].mxu0 %v3544
        %v3583 = vpop.f32.mrb[0].mxu0
        %v3584 = vadd.f32 0.0, %v3583
        %v3585 = vpop.f32.mrb[0].mxu0
        %v3586 = vpop.f32.mrb[0].mxu0
        %v3587 = vpop.f32.mrb[0].mxu0
        %3588 = vdwg.mxu0
        %3591 = vrot.lane.b32.xlu0 %v3091, 8
        %v3592 = vpop.permute.xlu0 %3591
        %3593 = vrot.lane.b32.xlu0 %v3140, 8
        %v3594 = vpop.permute.xlu0 %3593
        %3599 = vrot.lane.b32.xlu0 %v3314, 16
        %v3600 = vpop.permute.xlu0 %3599
        %3601 = vrot.lane.b32.xlu0 %v3362, 16
        %v3602 = vpop.permute.xlu0 %3601
        %3607 = vrot.lane.b32.xlu0 %v3536, 24
        %v3608 = vpop.permute.xlu0 %3607
        %3609 = vrot.lane.b32.xlu0 %v3584, 24
        %v3610 = vpop.permute.xlu0 %3609
        %v3613 = vsel %vm1441, %v2866, %v3592
        %v3614 = vsel %vm1441, %v2912, %v3594
        %v3615 = vsel %vm2353, %v3613, %v3600
        %v3616 = vsel %vm2353, %v3614, %v3602
        %v3617 = vsel %vm2356, %v3615, %v3608
        %v3618 = vsel %vm2356, %v3616, %v3610
        %v3619 = vpack.c.bf16 %v3618, %v3617
        %v3621 = vlaneseq
        %v3622 = vshrl.u32 %v3621, 7
        %v3623 = vsub.s32 0, %v3622
        %v3624 = vrot.slane %v2515, %v3623
        %v3630 = vunpack.c.l.b16 %v2511
        %v3631 = vunpack.c.l.b16 %v2512
        %v3632 = vunpack.c.l.b16 %v2513
        %v3633 = vunpack.c.l.b16 %v2514
        %v3634 = vpack.c.b16 %v3631, %v3630
        %v3635 = vpack.c.b16 %v3633, %v3632
        %v3639 = vsel %vm1192, %v3619, 0
        %3641 = vmatprep.subr.bf16.mxu0 0
        %3642 = vmatpush1.bf16.msra.mxu0 %v3634
        %3643 = vmatprep.subr.bf16.mxu0 0
        %3644 = vmatpush1.bf16.msra.mxu0 %v3635
        %3645 = vmatprep.subr.bf16.mxu0 0
        %3646 = vmatpush1.bf16.msra.mxu0 0
        %3647 = vmatprep.subr.bf16.mxu0 0
        %3648 = vmatpush1.bf16.msra.mxu0 0
        %3649 = vmatprep.subr.bf16.mxu0 0
        %3650 = vmatpush1.bf16.msra.mxu0 0
        %3651 = vmatprep.subr.bf16.mxu0 0
        %3652 = vmatpush1.bf16.msra.mxu0 0
        %3653 = vmatprep.subr.bf16.mxu0 0
        %3654 = vmatpush1.bf16.msra.mxu0 0
        %3655 = vmatprep.subr.bf16.mxu0 0
        %3656 = vmatpush1.bf16.msra.mxu0 0
        %3657 = vmatprep.subr.bf16.mxu0 0
        %3658 = vmatpush1.bf16.msra.mxu0 0
        %3659 = vmatprep.subr.bf16.mxu0 0
        %3660 = vmatpush1.bf16.msra.mxu0 0
        %3661 = vmatprep.subr.bf16.mxu0 0
        %3662 = vmatpush1.bf16.msra.mxu0 0
        %3663 = vmatprep.subr.bf16.mxu0 0
        %3664 = vmatpush1.bf16.msra.mxu0 0
        %3665 = vmatprep.subr.bf16.mxu0 0
        %3666 = vmatpush1.bf16.msra.mxu0 0
        %3667 = vmatprep.subr.bf16.mxu0 0
        %3668 = vmatpush1.bf16.msra.mxu0 0
        %3669 = vmatprep.subr.bf16.mxu0 0
        %3670 = vmatpush1.bf16.msra.mxu0 0
        %3671 = vmatprep.subr.bf16.mxu0 0
        %3672 = vmatpush1.bf16.msra.mxu0 0
        %3673 = vmatprep.mubr.bf16.mxu0 0
        %3674 = vmatmul.mubr.bf16.gmra.mrb[0].mxu0 %v3639
        %v3675 = vpop.f32.mrb[0].mxu0
        %v3676 = vadd.f32 %v3624, %v3675
        %v3677 = vpop.f32.mrb[0].mxu0
        %v3678 = vpop.f32.mrb[0].mxu0
        %v3679 = vadd.f32 %v3624, %v3678
        %v3680 = vpop.f32.mrb[0].mxu0
        %3681 = vdwg.mxu0
        %v3682 = vadd.f32 %v2422, %v3676
        %v3683 = vadd.f32 %v2423, %v3679
        %v3684 = vsel %vm1192, %v3682, 0.0
        %3685 = vadd.xlane.f32.xlu0 %v3684
        %v3686 = vpop.xlane.xlu0 %3685
        %v3687 = vsel %vm1192, %v3683, 0.0
        %3688 = vadd.xlane.f32.xlu0 %v3687
        %v3689 = vpop.xlane.xlu0 %3688
        %v3690 = vmul.f32 %v3686, %v1199
        %v3691 = vmul.f32 %v3689, %v1199
        %v3692 = vsub.f32 %v3682, %v3690
        %v3693 = vsub.f32 %v3683, %v3691
        %v3694 = vmul.f32 %v3692, %v3692
        %v3695 = vmul.f32 %v3693, %v3693
        %v3696 = vsel %vm1192, %v3694, 0.0
        %3697 = vadd.xlane.f32.xlu0 %v3696
        %v3698 = vpop.xlane.xlu0 %3697
        %v3699 = vsel %vm1192, %v3695, 0.0
        %3700 = vadd.xlane.f32.xlu0 %v3699
        %v3701 = vpop.xlane.xlu0 %3700
        %v3702 = vmul.f32 %v3698, %v1199
        %v3703 = vmul.f32 %v3701, %v1199
        %v3704 = vadd.f32 %v3702, 1e-05
        %v3705 = vadd.f32 %v3703, 1e-05
        %v3706 = vrsqrt.pop %v3704
        %v3707 = vrsqrt.pop %v3705
        %v3708 = vmul.f32 %v3692, %v3706
        %v3709 = vmul.f32 %v3693, %v3707
        %v3711 = vlaneseq
        %v3712 = vshrl.u32 %v3711, 7
        %v3713 = vsub.s32 0, %v3712
        %v3714 = vrot.slane %v1188, %v3713
        %v3716 = vmul.f32 %v3708, %v3714
        %v3717 = vmul.f32 %v3709, %v3714
        %v3719 = vlaneseq
        %v3720 = vshrl.u32 %v3719, 7
        %v3721 = vsub.s32 0, %v3720
        %v3722 = vrot.slane %v1191, %v3721
        %v3724 = vadd.f32 %v3716, %v3722
        %v3725 = vadd.f32 %v3717, %v3722
        %v3726 = vld [vmem:[%s1018] sm:$0xf]
        %v3727 = vld [vmem:[%s1018 + $0x4] sm:$0xf]
        %v3728 = vld [vmem:[%s1018 + $0x8] sm:$0xf]
        %v3729 = vld [vmem:[%s1018 + $0xc] sm:$0xf]
        %v3730 = vpack.c.bf16 %v3725, %v3724
        %v3731 = vld [vmem:[%s1026] sm:$0x1]
        %v3733 = vlaneseq
        %v3734 = vshrl.u32 %v3733, 7
        %v3735 = vsub.s32 0, %v3734
        %v3736 = vrot.slane %v3731, %v3735
        %v3742 = vunpack.c.l.b16 %v3726
        %v3743 = vunpack.c.l.b16 %v3727
        %v3744 = vunpack.c.l.b16 %v3728
        %v3745 = vunpack.c.l.b16 %v3729
        %v3746 = vpack.c.b16 %v3743, %v3742
        %v3747 = vpack.c.b16 %v3745, %v3744
        %v3751 = vsel %vm1192, %v3730, 0
        %3753 = vmatprep.subr.bf16.mxu0 0
        %3754 = vmatpush1.bf16.msra.mxu0 %v3746
        %3755 = vmatprep.subr.bf16.mxu0 0
        %3756 = vmatpush1.bf16.msra.mxu0 %v3747
        %3757 = vmatprep.subr.bf16.mxu0 0
        %3758 = vmatpush1.bf16.msra.mxu0 0
        %3759 = vmatprep.subr.bf16.mxu0 0
        %3760 = vmatpush1.bf16.msra.mxu0 0
        %3761 = vmatprep.subr.bf16.mxu0 0
        %3762 = vmatpush1.bf16.msra.mxu0 0
        %3763 = vmatprep.subr.bf16.mxu0 0
        %3764 = vmatpush1.bf16.msra.mxu0 0
        %3765 = vmatprep.subr.bf16.mxu0 0
        %3766 = vmatpush1.bf16.msra.mxu0 0
        %3767 = vmatprep.subr.bf16.mxu0 0
        %3768 = vmatpush1.bf16.msra.mxu0 0
        %3769 = vmatprep.subr.bf16.mxu0 0
        %3770 = vmatpush1.bf16.msra.mxu0 0
        %3771 = vmatprep.subr.bf16.mxu0 0
        %3772 = vmatpush1.bf16.msra.mxu0 0
        %3773 = vmatprep.subr.bf16.mxu0 0
        %3774 = vmatpush1.bf16.msra.mxu0 0
        %3775 = vmatprep.subr.bf16.mxu0 0
        %3776 = vmatpush1.bf16.msra.mxu0 0
        %3777 = vmatprep.subr.bf16.mxu0 0
        %3778 = vmatpush1.bf16.msra.mxu0 0
        %3779 = vmatprep.subr.bf16.mxu0 0
        %3780 = vmatpush1.bf16.msra.mxu0 0
        %3781 = vmatprep.subr.bf16.mxu0 0
        %3782 = vmatpush1.bf16.msra.mxu0 0
        %3783 = vmatprep.subr.bf16.mxu0 0
        %3784 = vmatpush1.bf16.msra.mxu0 0
        %3785 = vmatprep.mubr.bf16.mxu0 0
        %3786 = vmatmul.mubr.bf16.gmra.mrb[0].mxu0 %v3751
        %v3787 = vpop.f32.mrb[0].mxu0
        %v3788 = vadd.f32 %v3736, %v3787
        %v3789 = vpop.f32.mrb[0].mxu0
        %v3790 = vpop.f32.mrb[0].mxu0
        %v3791 = vadd.f32 %v3736, %v3790
        %v3792 = vpop.f32.mrb[0].mxu0
        %3793 = vdwg.mxu0
        %v3794 = vmul.f32 %v3788, 0.5
        %v3795 = vmul.f32 %v3791, 0.5
        %v3796 = vmul.f32 %v3788, 0.70710677
        %v3797 = vmul.f32 %v3791, 0.70710677
        %v3798 = verf.f32.pop %v3796
        %v3799 = verf.f32.pop %v3797
        %v3800 = vadd.f32 %v3798, 1.0
        %v3801 = vadd.f32 %v3799, 1.0
        %v3802 = vmul.f32 %v3794, %v3800
        %v3803 = vmul.f32 %v3795, %v3801
        %v3804 = vld [vmem:[%s1035] sm:$0xf]
        %v3805 = vld [vmem:[%s1035 + $0x4] sm:$0xf]
        %v3806 = vld [vmem:[%s1035 + $0x8] sm:$0xf]
        %v3807 = vld [vmem:[%s1035 + $0xc] sm:$0xf]
        %v3808 = vld [vmem:[%s1035 + $0x10] sm:$0xf]
        %v3809 = vld [vmem:[%s1035 + $0x14] sm:$0xf]
        %v3810 = vld [vmem:[%s1035 + $0x18] sm:$0xf]
        %v3811 = vld [vmem:[%s1035 + $0x1c] sm:$0xf]
        %v3812 = vpack.c.bf16 %v3803, %v3802
        %v3821 = vunpack.c.l.b16 %v3804
        %v3822 = vunpack.c.l.b16 %v3805
        %v3823 = vunpack.c.l.b16 %v3806
        %v3824 = vunpack.c.l.b16 %v3807
        %v3825 = vunpack.c.l.b16 %v3808
        %v3826 = vunpack.c.l.b16 %v3809
        %v3827 = vunpack.c.l.b16 %v3810
        %v3828 = vunpack.c.l.b16 %v3811
        %v3829 = vpack.c.b16 %v3822, %v3821
        %v3830 = vpack.c.b16 %v3824, %v3823
        %v3831 = vpack.c.b16 %v3826, %v3825
        %v3832 = vpack.c.b16 %v3828, %v3827
        %vm3837 = vcmask 523264
        %v3839 = vsel %vm3837, %v3812, 0
        %3841 = vmatprep.subr.bf16.mxu0 0
        %3842 = vmatpush1.bf16.msra.mxu0 %v3829
        %3843 = vmatprep.subr.bf16.mxu0 0
        %3844 = vmatpush1.bf16.msra.mxu0 %v3830
        %3845 = vmatprep.subr.bf16.mxu0 0
        %3846 = vmatpush1.bf16.msra.mxu0 %v3831
        %3847 = vmatprep.subr.bf16.mxu0 0
        %3848 = vmatpush1.bf16.msra.mxu0 %v3832
        %3849 = vmatprep.subr.bf16.mxu0 0
        %3850 = vmatpush1.bf16.msra.mxu0 0
        %3851 = vmatprep.subr.bf16.mxu0 0
        %3852 = vmatpush1.bf16.msra.mxu0 0
        %3853 = vmatprep.subr.bf16.mxu0 0
        %3854 = vmatpush1.bf16.msra.mxu0 0
        %3855 = vmatprep.subr.bf16.mxu0 0
        %3856 = vmatpush1.bf16.msra.mxu0 0
        %3857 = vmatprep.subr.bf16.mxu0 0
        %3858 = vmatpush1.bf16.msra.mxu0 0
        %3859 = vmatprep.subr.bf16.mxu0 0
        %3860 = vmatpush1.bf16.msra.mxu0 0
        %3861 = vmatprep.subr.bf16.mxu0 0
        %3862 = vmatpush1.bf16.msra.mxu0 0
        %3863 = vmatprep.subr.bf16.mxu0 0
        %3864 = vmatpush1.bf16.msra.mxu0 0
        %3865 = vmatprep.subr.bf16.mxu0 0
        %3866 = vmatpush1.bf16.msra.mxu0 0
        %3867 = vmatprep.subr.bf16.mxu0 0
        %3868 = vmatpush1.bf16.msra.mxu0 0
        %3869 = vmatprep.subr.bf16.mxu0 0
        %3870 = vmatpush1.bf16.msra.mxu0 0
        %3871 = vmatprep.subr.bf16.mxu0 0
        %3872 = vmatpush1.bf16.msra.mxu0 0
        %3873 = vmatprep.mubr.bf16.mxu0 0
        %3874 = vmatmul.mubr.bf16.gmra.mrb[0].mxu0 %v3839
        %v3875 = vpop.f32.mrb[0].mxu0
        %v3876 = vadd.f32 0.0, %v3875
        %v3877 = vpop.f32.mrb[0].mxu0
        %v3878 = vpop.f32.mrb[0].mxu0
        %v3879 = vadd.f32 0.0, %v3878
        %v3880 = vpop.f32.mrb[0].mxu0
        %3881 = vdwg.mxu0
        %v3882 = vadd.f32 %v3682, %v3876
        %v3883 = vadd.f32 %v3683, %v3879
        %v3884 = vld [vmem:[%s1043] sm:$0x1]
        %v3886 = vlaneseq
        %v3887 = vshrl.u32 %v3886, 7
        %v3888 = vsub.s32 0, %v3887
        %v3889 = vrot.slane %v3884, %v3888
        %v3891 = vadd.f32 %v3882, %v3889
        %v3892 = vadd.f32 %v3883, %v3889
        %p3893 = scmp.lt.s32.totalorder %s36, 1
        // Predicated region
        $region185: #{tpu_custom_call.1} parent=99 // pred_check
          %p3894 = pneg %p3893
        $region186: #{tpu_custom_call.1} parent=99 // pred_check_branch
          %3896 = sbr.rel (%p3894) target = $region188
        $region187: #{tpu_custom_call.1} parent=99 // pred_region
          %3897 = vst.msk [vmem:[#allocation2] sm:$0xff] %vm1192, %v3891
          %3898 = vst.msk [vmem:[#allocation2 + $0x8] sm:$0xff] %vm1192, %v3892
        $region188: #{tpu_custom_call.1} parent=99 // pred_fallthru
          _
        %p3899 = scmp.eq.s32.totalorder %s36, 1
        // Predicated region
        $region189: #{tpu_custom_call.1} parent=99 // pred_check
          %p3900 = pneg %p3899
        $region190: #{tpu_custom_call.1} parent=99 // pred_check_branch
          %3902 = sbr.rel (%p3900) target = $region192
        $region191: #{tpu_custom_call.1} parent=99 // pred_region
          %v3903 = vld [vmem:[#allocation22] sm:$0x1]
          %v3904 = vld [vmem:[#allocation23] sm:$0x1]
          %v3905 = vsel %vm1192, %v3891, 0.0
          %3906 = vadd.xlane.f32.xlu0 %v3905
          %v3907 = vpop.xlane.xlu0 %3906
          %v3908 = vsel %vm1192, %v3892, 0.0
          %3909 = vadd.xlane.f32.xlu0 %v3908
          %v3910 = vpop.xlane.xlu0 %3909
          %v3911 = vmul.f32 %v3907, %v1199
          %v3912 = vmul.f32 %v3910, %v1199
          %v3913 = vsub.f32 %v3891, %v3911
          %v3914 = vsub.f32 %v3892, %v3912
          %v3915 = vmul.f32 %v3913, %v3913
          %v3916 = vmul.f32 %v3914, %v3914
          %v3917 = vsel %vm1192, %v3915, 0.0
          %3918 = vadd.xlane.f32.xlu0 %v3917
          %v3919 = vpop.xlane.xlu0 %3918
          %v3920 = vsel %vm1192, %v3916, 0.0
          %3921 = vadd.xlane.f32.xlu0 %v3920
          %v3922 = vpop.xlane.xlu0 %3921
          %v3923 = vmul.f32 %v3919, %v1199
          %v3924 = vmul.f32 %v3922, %v1199
          %v3925 = vadd.f32 %v3923, 1e-05
          %v3926 = vadd.f32 %v3924, 1e-05
          %v3927 = vrsqrt.pop %v3925
          %v3928 = vrsqrt.pop %v3926
          %v3929 = vmul.f32 %v3913, %v3927
          %v3930 = vmul.f32 %v3914, %v3928
          %v3932 = vlaneseq
          %v3933 = vshrl.u32 %v3932, 7
          %v3934 = vsub.s32 0, %v3933
          %v3935 = vrot.slane %v3903, %v3934
          %v3937 = vmul.f32 %v3929, %v3935
          %v3938 = vmul.f32 %v3930, %v3935
          %v3940 = vlaneseq
          %v3941 = vshrl.u32 %v3940, 7
          %v3942 = vsub.s32 0, %v3941
          %v3943 = vrot.slane %v3904, %v3942
          %v3945 = vadd.f32 %v3937, %v3943
          %v3946 = vadd.f32 %v3938, %v3943
          %v3947 = vld [vmem:[#allocation25] sm:$0xf]
          %v3948 = vld [vmem:[#allocation25 + $0x4] sm:$0xf]
          %v3949 = vld [vmem:[#allocation25 + $0x8] sm:$0xf]
          %v3950 = vld [vmem:[#allocation25 + $0xc] sm:$0xf]
          %v3951 = vpack.c.bf16 %v3946, %v3945
          %v3952 = vld [vmem:[#allocation26] sm:$0x1]
          %v3954 = vlaneseq
          %v3955 = vshrl.u32 %v3954, 7
          %v3956 = vsub.s32 0, %v3955
          %v3957 = vrot.slane %v3952, %v3956
          %v3963 = vunpack.c.l.b16 %v3947
          %v3964 = vunpack.c.l.b16 %v3948
          %v3965 = vunpack.c.l.b16 %v3949
          %v3966 = vunpack.c.l.b16 %v3950
          %v3967 = vpack.c.b16 %v3964, %v3963
          %v3968 = vpack.c.b16 %v3966, %v3965
          %v3972 = vsel %vm1192, %v3951, 0
          %3974 = vmatprep.subr.bf16.mxu0 0
          %3975 = vmatpush1.bf16.msra.mxu0 %v3967
          %3976 = vmatprep.subr.bf16.mxu0 0
          %3977 = vmatpush1.bf16.msra.mxu0 %v3968
          %3978 = vmatprep.subr.bf16.mxu0 0
          %3979 = vmatpush1.bf16.msra.mxu0 0
          %3980 = vmatprep.subr.bf16.mxu0 0
          %3981 = vmatpush1.bf16.msra.mxu0 0
          %3982 = vmatprep.subr.bf16.mxu0 0
          %3983 = vmatpush1.bf16.msra.mxu0 0
          %3984 = vmatprep.subr.bf16.mxu0 0
          %3985 = vmatpush1.bf16.msra.mxu0 0
          %3986 = vmatprep.subr.bf16.mxu0 0
          %3987 = vmatpush1.bf16.msra.mxu0 0
          %3988 = vmatprep.subr.bf16.mxu0 0
          %3989 = vmatpush1.bf16.msra.mxu0 0
          %3990 = vmatprep.subr.bf16.mxu0 0
          %3991 = vmatpush1.bf16.msra.mxu0 0
          %3992 = vmatprep.subr.bf16.mxu0 0
          %3993 = vmatpush1.bf16.msra.mxu0 0
          %3994 = vmatprep.subr.bf16.mxu0 0
          %3995 = vmatpush1.bf16.msra.mxu0 0
          %3996 = vmatprep.subr.bf16.mxu0 0
          %3997 = vmatpush1.bf16.msra.mxu0 0
          %3998 = vmatprep.subr.bf16.mxu0 0
          %3999 = vmatpush1.bf16.msra.mxu0 0
          %4000 = vmatprep.subr.bf16.mxu0 0
          %4001 = vmatpush1.bf16.msra.mxu0 0
          %4002 = vmatprep.subr.bf16.mxu0 0
          %4003 = vmatpush1.bf16.msra.mxu0 0
          %4004 = vmatprep.subr.bf16.mxu0 0
          %4005 = vmatpush1.bf16.msra.mxu0 0
          %4006 = vmatprep.mubr.bf16.mxu0 0
          %4007 = vmatmul.mubr.bf16.gmra.mrb[0].mxu0 %v3972
          %v4008 = vpop.f32.mrb[0].mxu0
          %v4009 = vadd.f32 %v3957, %v4008
          %v4010 = vpop.f32.mrb[0].mxu0
          %v4011 = vpop.f32.mrb[0].mxu0
          %v4012 = vadd.f32 %v3957, %v4011
          %v4013 = vpop.f32.mrb[0].mxu0
          %4014 = vdwg.mxu0
          %4015 = vst.msk [vmem:[#allocation28] sm:$0xff] %vm1192, %v4009
          %4016 = vst.msk [vmem:[#allocation28 + $0x8] sm:$0xff] %vm1192, %v4012
        $region192: #{tpu_custom_call.1} parent=99 // pred_fallthru
          _
        // Predicated region
        $region193: #{tpu_custom_call.1} parent=99 // pred_check
          %p4017 = pneg %p539
        $region194: #{tpu_custom_call.1} parent=99 // pred_check_branch
          %4019 = sbr.rel (%p4017) target = $region196
        $region195: #{tpu_custom_call.1} parent=99 // pred_region
          %s4021 = ssub.s32 256, 256
          %4022 = vsyncadd [#allocation5], %s4021
          %s4023 = sshll.u32 [#allocation28], 4
          %s4024 = int_to_ptr.vmem [resolvable:$true] %s4023
          %4029 = dma.vmem_to_hbm [thread:$0]  %s4024, 256, %s20, [#allocation5], 128, 128, 8
        $region196: #{tpu_custom_call.1} parent=99 // pred_fallthru
          _
        // Predicated region
        $region197: #{tpu_custom_call.1} parent=99 // pred_check
          %p4030 = pneg %p539
        $region198: #{tpu_custom_call.1} parent=99 // pred_check_branch
          %4032 = sbr.rel (%p4030) target = $region200
        $region199: #{tpu_custom_call.1} parent=99 // pred_region
          %4033 = dma.done [#allocation5], 256
        $region200: #{tpu_custom_call.1} parent=99 // pred_fallthru
          _
      $region100: #{tpu_custom_call.1} parent=5 // pred_fallthru
        _
      %p4034 = scmp.le.s32.totalorder 2, %s31
      // Predicated region
      $region201: #{tpu_custom_call.1} parent=5 // pred_check
        %p4035 = pneg %p4034
      $region202: #{tpu_custom_call.1} parent=5 // pred_check_branch
        %4037 = sbr.rel (%p4035) target = $region204
      $region203: #{tpu_custom_call.1} parent=5 // pred_region
        %s4038 = ssub.s32 %s31, 2
      $region204: #{tpu_custom_call.1} parent=5 // pred_fallthru
        _
    $region6: #{tpu_custom_call.1} parent=1 // loop_footer
      %s35 = sadd.s32 1, %s31
    $region7: #{tpu_custom_call.1} parent=1 // loop_footer_branch
      %30 = sbr.rel target = $region3
    $region8: #{tpu_custom_call.1} parent=1 // loop_exit
      _
    %4039 = vsyncpa [#allocation4], 1
    %s4040 = scalar_lea.sflag [#allocation4], 1
    %4041 = vsyncpa %s4040, 1
    %4042 = vsyncpa [#allocation7], 1
    %4043 = vsyncpa [#allocation24], 1
    %4044 = vsyncpa [#allocation27], 1
    %4045 = vsyncpa [#allocation5], 1
    %s4046 = scalar_lea.sflag [#allocation5], 1
    %4047 = vsyncpa %s4046, 1

</llo_original>
